<compile_context>
chip_gen: v7x
topology: tpu7x:2x2x1
jax: 0.10.0
libtpu: 0.0.40
codegen_flags: <defaults>
</compile_context>

<pallas_src>
import functools

import jax
import jax.numpy as jnp
from jax.experimental import pallas as pl
from jax.experimental.pallas import tpu as pltpu


# ----------------------------------------------------------------------------
# Helpers
# ----------------------------------------------------------------------------
def _round_up(n, m):
    return ((n + m - 1) // m) * m


def _pad_to(a, shape):
    return jnp.pad(a, [(0, s - d) for d, s in zip(a.shape, shape)])


def _full_spec(arr):
    nd = arr.ndim
    return pl.BlockSpec(arr.shape, lambda *_, nd=nd: (0,) * nd)


# ----------------------------------------------------------------------------
# Fused Pallas kernel: stacked GRU layers + MLP head in one call
# ----------------------------------------------------------------------------
def _fused_gru_mlp_kernel(*refs, num_layers, T, H, Hp, G, packed):
    """refs = [x, (wi,wh,bi,bhn)*L, w1,b1,w2,b2,w3,b3,w4,b4, out, scratch...]."""
    x_ref = refs[0]
    layer_refs = refs[1:1 + 4 * num_layers]
    mo = 1 + 4 * num_layers
    (w1_hbm, b1_ref, w2_hbm, b2_ref,
     w3_hbm, b3_ref, w4_hbm, b4_ref) = refs[mo:mo + 8]
    out_ref = refs[mo + 8]
    gi_s, seq_s, w1_s, w2_s, w3_s, w4_s, sem = refs[mo + 9:mo + 16]

    Bp = x_ref.shape[1]
    Dp = x_ref.shape[2]

    # Kick off the MLP-head weight DMAs now; they overlap the serial GRU
    # recurrence and are waited on right before each dense layer uses them.
    mlp_cps = [pltpu.make_async_copy(w1_hbm, w1_s, sem.at[0]),
               pltpu.make_async_copy(w2_hbm, w2_s, sem.at[1]),
               pltpu.make_async_copy(w3_hbm, w3_s, sem.at[2]),
               pltpu.make_async_copy(w4_hbm, w4_s, sem.at[3])]
    for cp in mlp_cps:
        cp.start()

    h = None
    for layer in range(num_layers):
        wi_ref, wh_ref, bi_ref, bhn_ref = layer_refs[4 * layer:4 * layer + 4]
        wh_f = wh_ref[...].astype(jnp.float32)       # (Hp, G)  fused hidden weights
        bhn_v = bhn_ref[...]                         # (1, G) packed / (1, Hp) unpacked

        # Hoisted input projection for ALL timesteps (r/z and n-input biases
        # folded in), spilled to VMEM scratch to keep vreg pressure flat.
        if layer == 0:
            cur2d = x_ref[...].reshape(T * Bp, Dp)
        else:
            cur2d = seq_s[...]
        gi_s[...] = (jnp.dot(cur2d, wi_ref[...].astype(jnp.float32),
                             preferred_element_type=jnp.float32) + bi_ref[...])

        h = jnp.zeros((Bp, Hp), jnp.float32)
        last = layer == num_layers - 1
        for t in range(T):                                           # serial recurrence
            gh = jnp.dot(h, wh_f, preferred_element_type=jnp.float32)   # (Bp, G)
            git = gi_s[pl.ds(t * Bp, Bp), :]                            # (Bp, G)
            if packed:
                # lanes: [0:H]=z  [H:2H]=r  [2H:3H]=n  [3H:4H]=r (duplicate)
                sig = jax.nn.sigmoid(git + gh)             # z + both r copies
                r_n = pltpu.roll(sig, shift=H, axis=1)     # some r copy lands on n lanes
                n = jnp.tanh(git + r_n * (gh + bhn_v))     # valid at [2H:3H]
                n_h = pltpu.roll(n, shift=G // 2, axis=1)  # n lands on [0:H]
                h = (1.0 - sig) * n_h + sig * h            # valid at [0:H]; pad lanes
                #                                          # stay bounded & are masked
                #                                          # by zero weight rows later
            else:
                rz = jax.nn.sigmoid(git[:, :2 * Hp] + gh[:, :2 * Hp])
                r, z = rz[:, :Hp], rz[:, Hp:]
                n = jnp.tanh(git[:, 2 * Hp:] + r * (gh[:, 2 * Hp:] + bhn_v))
                h = (1.0 - z) * n + z * h
            if not last:
                seq_s[pl.ds(t * Bp, Bp), :] = h            # next layer's input sequence

    # MLP head on the last timestep of the last layer (dropout = identity).
    def dense(y, cp, w_s, b_ref, relu):
        cp.wait()                                          # weight DMA finished by now
        o = jnp.dot(y.astype(jnp.bfloat16), w_s[...],
                    preferred_element_type=jnp.float32) + b_ref[...]
        return jnp.maximum(o, 0.0) if relu else o

    y = dense(h, mlp_cps[0], w1_s, b1_ref, True)
    y = dense(y, mlp_cps[1], w2_s, b2_ref, True)
    y = dense(y, mlp_cps[2], w3_s, b3_ref, True)
    out_ref[...] = dense(y, mlp_cps[3], w4_s, b4_ref, False)


# ----------------------------------------------------------------------------
# Wrapper: padding, packed/fused weight layout (bf16), pallas_call plumbing
# ----------------------------------------------------------------------------
def _prepare_kernel_params(gru_params, mlp_params, in_size, hidden, out_size):
    H = hidden
    Hp = _round_up(H, 128)
    packed = (4 * H == Hp)            # e.g. H=32: all gates in one 128-lane tile
    G = Hp if packed else 3 * Hp

    def pack_cols(parts, rows, rows_p):
        out = jnp.zeros((rows_p, G), jnp.float32)
        width = H if packed else Hp
        for mat, slots in parts:
            for s in slots:
                out = out.at[:rows, s * width:s * width + H].set(mat)
        return out

    layer_args = []
    for l, p in enumerate(gru_params):
        d_in = in_size if l == 0 else H
        Dp = _round_up(in_size, 128) if l == 0 else Hp
        if packed:
            # slots: 0=z, 1=r, 2=n, 3=r-duplicate (see kernel)
            wi = pack_cols([(p["wiz"], [0]), (p["wir"], [1, 3]), (p["win"], [2])], d_in, Dp)
            wh = pack_cols([(p["whz"], [0]), (p["whr"], [1, 3]), (p["whn"], [2])], H, Hp)
            bi = pack_cols([(p["bz"], [0]), (p["br"], [1, 3]), (p["bin"], [2])], 1, 1)
            bhn = pack_cols([(p["bhn"], [2])], 1, 1)
        else:
            wi = pack_cols([(p["wir"], [0]), (p["wiz"], [1]), (p["win"], [2])], d_in, Dp)
            wh = pack_cols([(p["whr"], [0]), (p["whz"], [1]), (p["whn"], [2])], H, Hp)
            bi = pack_cols([(p["br"], [0]), (p["bz"], [1]), (p["bin"], [2])], 1, 1)
            bhn = _pad_to(p["bhn"], (1, Hp))
        layer_args.append((wi.astype(jnp.bfloat16), wh.astype(jnp.bfloat16), bi, bhn))

    L1 = mlp_params["w1"].shape[1]
    L2 = mlp_params["w2"].shape[1]
    L3 = mlp_params["w3"].shape[1]
    L1p, L2p, L3p = (_round_up(v, 128) for v in (L1, L2, L3))
    OutP = _round_up(out_size, 128)

    mlp_args = [
        _pad_to(mlp_params["w1"], (Hp, L1p)).astype(jnp.bfloat16),
        _pad_to(mlp_params["b1"], (1, L1p)),
        _pad_to(mlp_params["w2"], (L1p, L2p)).astype(jnp.bfloat16),
        _pad_to(mlp_params["b2"], (1, L2p)),
        _pad_to(mlp_params["w3"], (L2p, L3p)).astype(jnp.bfloat16),
        _pad_to(mlp_params["b3"], (1, L3p)),
        _pad_to(mlp_params["w4"], (L3p, OutP)).astype(jnp.bfloat16),
        _pad_to(mlp_params["b4"], (1, OutP)),
    ]
    dims = dict(Hp=Hp, G=G, packed=packed, L1p=L1p, L2p=L2p, L3p=L3p, OutP=OutP)
    return layer_args, mlp_args, dims


def gru_model_forward(x_btd, gru_params, mlp_params):
    """Full forward pass.  x_btd: (B, T, in_size)  ->  (B, out_size)."""
    B, T, in_size = x_btd.shape
    hidden = gru_params[0]["whr"].shape[0]
    num_layers = len(gru_params)
    out_size = mlp_params["w4"].shape[1]

    Bp = _round_up(B, 8)
    Dp = _round_up(in_size, 128)

    # (B, T, D) -> time-major, zero-padded to full sublane/lane tiles.
    x = jnp.transpose(x_btd, (1, 0, 2)).astype(jnp.float32)
    x = _pad_to(x, (T, Bp, Dp))

    layer_args, mlp_args, d = _prepare_kernel_params(
        gru_params, mlp_params, in_size, hidden, out_size)
    Hp, G, OutP = d["Hp"], d["G"], d["OutP"]
    L1p, L2p, L3p = d["L1p"], d["L2p"], d["L3p"]

    flat_inputs = [x]
    for args in layer_args:
        flat_inputs += list(args)
    flat_inputs += mlp_args

    # MLP weight matrices stay in HBM (pl.ANY) and are DMA'd inside the
    # kernel so the copy overlaps the recurrence; everything else (small)
    # goes through normal VMEM BlockSpecs.
    n_in = len(flat_inputs)
    mlp_w_pos = {n_in - 8, n_in - 6, n_in - 4, n_in - 2}
    in_specs = [pl.BlockSpec(memory_space=pl.ANY) if i in mlp_w_pos
                else _full_spec(a) for i, a in enumerate(flat_inputs)]

    kernel = functools.partial(
        _fused_gru_mlp_kernel, num_layers=num_layers, T=T,
        H=hidden, Hp=Hp, G=G, packed=d["packed"])

    out = pl.pallas_call(
        kernel,
        out_shape=jax.ShapeDtypeStruct((Bp, OutP), jnp.float32),
        grid=(1,),
        in_specs=in_specs,
        out_specs=pl.BlockSpec((Bp, OutP), lambda i: (0, 0)),
        scratch_shapes=[
            pltpu.VMEM((T * Bp, G), jnp.float32),      # hoisted gi
            pltpu.VMEM((T * Bp, Hp), jnp.float32),     # inter-layer h sequence
            pltpu.VMEM((Hp, L1p), jnp.bfloat16),       # MLP weight landing buffers
            pltpu.VMEM((L1p, L2p), jnp.bfloat16),
            pltpu.VMEM((L2p, L3p), jnp.bfloat16),
            pltpu.VMEM((L3p, OutP), jnp.bfloat16),
            pltpu.SemaphoreType.DMA((4,)),
        ],
        compiler_params=pltpu.CompilerParams(
            dimension_semantics=("arbitrary",)),
    )(*flat_inputs)

    # TODO(synk): dropout is identity (inference); nn.MultiheadAttention is
    # unused in forward() and therefore omitted.
    return out[:B, :out_size]


# ----------------------------------------------------------------------------
# Deterministic parameter construction (matches nn.GRU / nn.Linear shapes)
# ----------------------------------------------------------------------------
def make_params(key, in_size, hidden, num_layers, out_size, l1=512, l2=256, l3=128):
    def uni(key, shape, bound):
        return jax.random.uniform(key, shape, jnp.float32, -bound, bound)

    gru_params = []
    kH = 1.0 / jnp.sqrt(hidden)
    for layer in range(num_layers):
        d_in = in_size if layer == 0 else hidden
        key, *ks = jax.random.split(key, 11)
        p = dict(
            wir=uni(ks[0], (d_in, hidden), kH), wiz=uni(ks[1], (d_in, hidden), kH),
            win=uni(ks[2], (d_in, hidden), kH), whr=uni(ks[3], (hidden, hidden), kH),
            whz=uni(ks[4], (hidden, hidden), kH), whn=uni(ks[5], (hidden, hidden), kH),
            # br = b_ir + b_hr, bz = b_iz + b_hz (folded); b_in / b_hn kept apart
            br=uni(ks[6], (1, hidden), kH), bz=uni(ks[7], (1, hidden), kH),
            bin=uni(ks[8], (1, hidden), kH), bhn=uni(ks[9], (1, hidden), kH),
        )
        gru_params.append(p)

    sizes = [(hidden, l1), (l1, l2), (l2, l3), (l3, out_size)]
    mlp_params = {}
    for i, (di, do) in enumerate(sizes, start=1):
        key, kw, kb = jax.random.split(key, 3)
        bound = 1.0 / jnp.sqrt(di)
        mlp_params[f"w{i}"] = uni(kw, (di, do), bound)
        mlp_params[f"b{i}"] = uni(kb, (1, do), bound)
    return gru_params, mlp_params


# ----------------------------------------------------------------------------
# Pure-JAX reference (same math, HIGHEST precision) for a correctness check
# ----------------------------------------------------------------------------
def _ref_forward(x_btd, gru_params, mlp_params):
    dot = functools.partial(jnp.dot, precision=jax.lax.Precision.HIGHEST)
    x = jnp.transpose(x_btd, (1, 0, 2)).astype(jnp.float32)
    for p in gru_params:
        T, B, _ = x.shape
        H = p["whr"].shape[0]
        h = jnp.zeros((B, H), jnp.float32)
        outs = []
        for t in range(T):
            xt = x[t]
            r = jax.nn.sigmoid(dot(xt, p["wir"]) + dot(h, p["whr"]) + p["br"])
            z = jax.nn.sigmoid(dot(xt, p["wiz"]) + dot(h, p["whz"]) + p["bz"])
            n = jnp.tanh(dot(xt, p["win"]) + p["bin"]
                         + r * (dot(h, p["whn"]) + p["bhn"]))
            h = (1.0 - z) * n + z * h
            outs.append(h)
        x = jnp.stack(outs)
    y = x[-1]
    for i in range(1, 4):
        y = jnp.maximum(dot(y, mlp_params[f"w{i}"]) + mlp_params[f"b{i}"], 0.0)
    return dot(y, mlp_params["w4"]) + mlp_params["b4"]


# ----------------------------------------------------------------------------
if __name__ == "__main__":
    # Small shapes consistent with the module's forward:
    batch, seq, in_size = 2, 8, 16
    hidden, num_layers, out_size = 32, 2, 4

    key = jax.random.PRNGKey(0)
    key, kx = jax.random.split(key)
    x = jax.random.normal(kx, (batch, seq, in_size), jnp.float32)

    gru_params, mlp_params = make_params(key, in_size, hidden, num_layers, out_size)

    out = jax.block_until_ready(gru_model_forward(x, gru_params, mlp_params))
    assert out.shape == (batch, out_size), out.shape

    ref = jax.block_until_ready(_ref_forward(x, gru_params, mlp_params))
    max_err = float(jnp.max(jnp.abs(out - ref)))
    # bf16 weight storage + MXU bf16 passes vs HIGHEST-precision f32 reference.
    assert jnp.allclose(out, ref, atol=1e-2, rtol=1e-2), max_err

    print("KERNEL_OK")
</pallas_src>

<mosaic_0001>
module attributes {stable_mosaic.version = 11 : i64} {
  func.func @_fused_gru_mlp_kernel(%arg0: i32, %arg1: memref<8x8x128xf32, #tpu.memory_space<vmem>>, %arg2: memref<128x128xbf16, #tpu.memory_space<vmem>>, %arg3: memref<128x128xbf16, #tpu.memory_space<vmem>>, %arg4: memref<1x128xf32, #tpu.memory_space<vmem>>, %arg5: memref<1x128xf32, #tpu.memory_space<vmem>>, %arg6: memref<128x128xbf16, #tpu.memory_space<vmem>>, %arg7: memref<128x128xbf16, #tpu.memory_space<vmem>>, %arg8: memref<1x128xf32, #tpu.memory_space<vmem>>, %arg9: memref<1x128xf32, #tpu.memory_space<vmem>>, %arg10: memref<128x512xbf16, #tpu.memory_space<any>>, %arg11: memref<1x512xf32, #tpu.memory_space<vmem>>, %arg12: memref<512x256xbf16, #tpu.memory_space<any>>, %arg13: memref<1x256xf32, #tpu.memory_space<vmem>>, %arg14: memref<256x128xbf16, #tpu.memory_space<any>>, %arg15: memref<1x128xf32, #tpu.memory_space<vmem>>, %arg16: memref<128x128xbf16, #tpu.memory_space<any>>, %arg17: memref<1x128xf32, #tpu.memory_space<vmem>>, %arg18: memref<8x128xf32, #tpu.memory_space<vmem>>, %arg19: memref<64x128xf32, #tpu.memory_space<vmem>>, %arg20: memref<64x128xf32, #tpu.memory_space<vmem>>, %arg21: memref<128x512xbf16, #tpu.memory_space<vmem>>, %arg22: memref<512x256xbf16, #tpu.memory_space<vmem>>, %arg23: memref<256x128xbf16, #tpu.memory_space<vmem>>, %arg24: memref<128x128xbf16, #tpu.memory_space<vmem>>, %arg25: memref<4x!tpu.dma_semaphore, #tpu.memory_space<semaphore_mem>>) attributes {dimension_semantics = [#tpu.dimension_semantics<arbitrary>], iteration_bounds = array<i64: 1>, scalar_prefetch = 0 : i64, scratch_operands = 7 : i64, tpu.core_type = #tpu.core_type<tc>, window_params = [{pipeline_mode = #tpu.pipeline_mode<synchronous>, transform_indices = @transform_0, window_bounds = array<i64: 8, 8, 128>}, {pipeline_mode = #tpu.pipeline_mode<synchronous>, transform_indices = @transform_1, window_bounds = array<i64: 128, 128>}, {pipeline_mode = #tpu.pipeline_mode<synchronous>, transform_indices = @transform_2, window_bounds = array<i64: 128, 128>}, {pipeline_mode = #tpu.pipeline_mode<synchronous>, transform_indices = @transform_3, window_bounds = array<i64: 1, 128>}, {pipeline_mode = #tpu.pipeline_mode<synchronous>, transform_indices = @transform_4, window_bounds = array<i64: 1, 128>}, {pipeline_mode = #tpu.pipeline_mode<synchronous>, transform_indices = @transform_5, window_bounds = array<i64: 128, 128>}, {pipeline_mode = #tpu.pipeline_mode<synchronous>, transform_indices = @transform_6, window_bounds = array<i64: 128, 128>}, {pipeline_mode = #tpu.pipeline_mode<synchronous>, transform_indices = @transform_7, window_bounds = array<i64: 1, 128>}, {pipeline_mode = #tpu.pipeline_mode<synchronous>, transform_indices = @transform_8, window_bounds = array<i64: 1, 128>}, {}, {pipeline_mode = #tpu.pipeline_mode<synchronous>, transform_indices = @transform_10, window_bounds = array<i64: 1, 512>}, {}, {pipeline_mode = #tpu.pipeline_mode<synchronous>, transform_indices = @transform_12, window_bounds = array<i64: 1, 256>}, {}, {pipeline_mode = #tpu.pipeline_mode<synchronous>, transform_indices = @transform_14, window_bounds = array<i64: 1, 128>}, {}, {pipeline_mode = #tpu.pipeline_mode<synchronous>, transform_indices = @transform_16, window_bounds = array<i64: 1, 128>}, {pipeline_mode = #tpu.pipeline_mode<synchronous>, transform_indices = @transform_17, window_bounds = array<i64: 8, 128>}]} {
    %c0_i32 = arith.constant 0 : i32
    %0 = tpu.memref_slice %arg25[%c0_i32] : memref<4x!tpu.dma_semaphore, #tpu.memory_space<semaphore_mem>> -> memref<1x!tpu.dma_semaphore, #tpu.memory_space<semaphore_mem>>
    %1 = tpu.memref_squeeze %0 : memref<1x!tpu.dma_semaphore, #tpu.memory_space<semaphore_mem>> -> memref<!tpu.dma_semaphore, #tpu.memory_space<semaphore_mem>>
    tpu.enqueue_dma source(%arg10 : memref<128x512xbf16, #tpu.memory_space<any>>) target(%arg21 : memref<128x512xbf16, #tpu.memory_space<vmem>>) target_semaphore(%1 : memref<!tpu.dma_semaphore, #tpu.memory_space<semaphore_mem>>)
    %c1_i32 = arith.constant 1 : i32
    %2 = tpu.memref_slice %arg25[%c1_i32] : memref<4x!tpu.dma_semaphore, #tpu.memory_space<semaphore_mem>> -> memref<1x!tpu.dma_semaphore, #tpu.memory_space<semaphore_mem>>
    %3 = tpu.memref_squeeze %2 : memref<1x!tpu.dma_semaphore, #tpu.memory_space<semaphore_mem>> -> memref<!tpu.dma_semaphore, #tpu.memory_space<semaphore_mem>>
    tpu.enqueue_dma source(%arg12 : memref<512x256xbf16, #tpu.memory_space<any>>) target(%arg22 : memref<512x256xbf16, #tpu.memory_space<vmem>>) target_semaphore(%3 : memref<!tpu.dma_semaphore, #tpu.memory_space<semaphore_mem>>)
    %c2_i32 = arith.constant 2 : i32
    %4 = tpu.memref_slice %arg25[%c2_i32] : memref<4x!tpu.dma_semaphore, #tpu.memory_space<semaphore_mem>> -> memref<1x!tpu.dma_semaphore, #tpu.memory_space<semaphore_mem>>
    %5 = tpu.memref_squeeze %4 : memref<1x!tpu.dma_semaphore, #tpu.memory_space<semaphore_mem>> -> memref<!tpu.dma_semaphore, #tpu.memory_space<semaphore_mem>>
    tpu.enqueue_dma source(%arg14 : memref<256x128xbf16, #tpu.memory_space<any>>) target(%arg23 : memref<256x128xbf16, #tpu.memory_space<vmem>>) target_semaphore(%5 : memref<!tpu.dma_semaphore, #tpu.memory_space<semaphore_mem>>)
    %c3_i32 = arith.constant 3 : i32
    %6 = tpu.memref_slice %arg25[%c3_i32] : memref<4x!tpu.dma_semaphore, #tpu.memory_space<semaphore_mem>> -> memref<1x!tpu.dma_semaphore, #tpu.memory_space<semaphore_mem>>
    %7 = tpu.memref_squeeze %6 : memref<1x!tpu.dma_semaphore, #tpu.memory_space<semaphore_mem>> -> memref<!tpu.dma_semaphore, #tpu.memory_space<semaphore_mem>>
    tpu.enqueue_dma source(%arg16 : memref<128x128xbf16, #tpu.memory_space<any>>) target(%arg24 : memref<128x128xbf16, #tpu.memory_space<vmem>>) target_semaphore(%7 : memref<!tpu.dma_semaphore, #tpu.memory_space<semaphore_mem>>)
    %c0 = arith.constant 0 : index
    %c0_0 = arith.constant 0 : index
    %8 = vector.load %arg3[%c0, %c0_0] : memref<128x128xbf16, #tpu.memory_space<vmem>>, vector<128x128xbf16>
    %9 = arith.extf %8 : vector<128x128xbf16> to vector<128x128xf32>
    %c0_1 = arith.constant 0 : index
    %c0_2 = arith.constant 0 : index
    %10 = vector.load %arg5[%c0_1, %c0_2] : memref<1x128xf32, #tpu.memory_space<vmem>>, vector<1x128xf32>
    %c0_3 = arith.constant 0 : index
    %c0_4 = arith.constant 0 : index
    %c0_5 = arith.constant 0 : index
    %11 = vector.load %arg1[%c0_3, %c0_4, %c0_5] : memref<8x8x128xf32, #tpu.memory_space<vmem>>, vector<8x8x128xf32>
    %12 = vector.shape_cast %11 : vector<8x8x128xf32> to vector<64x128xf32>
    %c0_6 = arith.constant 0 : index
    %c0_7 = arith.constant 0 : index
    %13 = vector.load %arg2[%c0_6, %c0_7] : memref<128x128xbf16, #tpu.memory_space<vmem>>, vector<128x128xbf16>
    %14 = arith.extf %13 : vector<128x128xbf16> to vector<128x128xf32>
    %cst = arith.constant dense<0.000000e+00> : vector<64x128xf32>
    %15 = tpu.matmul %12, %14, %cst {dimension_numbers = #tpu.dot_dimension_numbers<[1], [0], [0], [1], [0, 0, 1, 1], [], []>} : vector<64x128xf32>, vector<128x128xf32>, vector<64x128xf32> -> vector<64x128xf32>
    %c0_8 = arith.constant 0 : index
    %c0_9 = arith.constant 0 : index
    %16 = vector.load %arg4[%c0_8, %c0_9] : memref<1x128xf32, #tpu.memory_space<vmem>>, vector<1x128xf32>
    %17 = vector.broadcast %16 : vector<1x128xf32> to vector<64x128xf32>
    %18 = arith.addf %15, %17 : vector<64x128xf32>
    %c0_10 = arith.constant 0 : index
    %c0_11 = arith.constant 0 : index
    %19 = vector.load %arg19[%c0_10, %c0_11] : memref<64x128xf32, #tpu.memory_space<vmem>>, vector<64x128xf32>
    tpu.vector_store %arg19[%c0_10, %c0_11], %18 {strides = array<i32>} : memref<64x128xf32, #tpu.memory_space<vmem>>, vector<64x128xf32>,
    %cst_12 = arith.constant 0.000000e+00 : f32
    %20 = vector.broadcast %cst_12 : f32 to vector<8x128xf32>
    %cst_13 = arith.constant dense<0.000000e+00> : vector<8x128xf32>
    %21 = tpu.matmul %20, %9, %cst_13 {dimension_numbers = #tpu.dot_dimension_numbers<[1], [0], [0], [1], [0, 0, 1, 1], [], []>} : vector<8x128xf32>, vector<128x128xf32>, vector<8x128xf32> -> vector<8x128xf32>
    %c0_14 = arith.constant 0 : index
    %c0_15 = arith.constant 0 : index
    %22 = vector.load %arg19[%c0_14, %c0_15] : memref<64x128xf32, #tpu.memory_space<vmem>>, vector<8x128xf32>
    %23 = arith.addf %22, %21 : vector<8x128xf32>
    %24 = arith.negf %23 : vector<8x128xf32>
    %25 = math.exp %24 : vector<8x128xf32>
    %cst_16 = arith.constant 1.000000e+00 : f32
    %26 = vector.broadcast %cst_16 : f32 to vector<8x128xf32>
    %27 = arith.addf %26, %25 : vector<8x128xf32>
    %28 = arith.divf %26, %27 : vector<8x128xf32>
    %c32_i32 = arith.constant 32 : i32
    %29 = tpu.dynamic_rotate %28 by %c32_i32 dim 1 : vector<8x128xf32>, i32 -> vector<8x128xf32>
    %30 = vector.broadcast %10 : vector<1x128xf32> to vector<8x128xf32>
    %31 = arith.addf %21, %30 : vector<8x128xf32>
    %32 = arith.mulf %29, %31 : vector<8x128xf32>
    %33 = arith.addf %22, %32 : vector<8x128xf32>
    %34 = math.tanh %33 : vector<8x128xf32>
    %c64_i32 = arith.constant 64 : i32
    %35 = tpu.dynamic_rotate %34 by %c64_i32 dim 1 : vector<8x128xf32>, i32 -> vector<8x128xf32>
    %cst_17 = arith.constant 1.000000e+00 : f32
    %36 = vector.broadcast %cst_17 : f32 to vector<8x128xf32>
    %37 = arith.subf %36, %28 : vector<8x128xf32>
    %38 = arith.mulf %37, %35 : vector<8x128xf32>
    %39 = arith.mulf %28, %20 : vector<8x128xf32>
    %40 = arith.addf %38, %39 : vector<8x128xf32>
    %c0_18 = arith.constant 0 : index
    %c0_19 = arith.constant 0 : index
    %41 = vector.load %arg20[%c0_18, %c0_19] : memref<64x128xf32, #tpu.memory_space<vmem>>, vector<8x128xf32>
    tpu.vector_store %arg20[%c0_18, %c0_19], %40 {strides = array<i32>} : memref<64x128xf32, #tpu.memory_space<vmem>>, vector<8x128xf32>,
    %cst_20 = arith.constant dense<0.000000e+00> : vector<8x128xf32>
    %42 = tpu.matmul %40, %9, %cst_20 {dimension_numbers = #tpu.dot_dimension_numbers<[1], [0], [0], [1], [0, 0, 1, 1], [], []>} : vector<8x128xf32>, vector<128x128xf32>, vector<8x128xf32> -> vector<8x128xf32>
    %c8 = arith.constant 8 : index
    %c0_21 = arith.constant 0 : index
    %43 = vector.load %arg19[%c8, %c0_21] : memref<64x128xf32, #tpu.memory_space<vmem>>, vector<8x128xf32>
    %44 = arith.addf %43, %42 : vector<8x128xf32>
    %45 = arith.negf %44 : vector<8x128xf32>
    %46 = math.exp %45 : vector<8x128xf32>
    %cst_22 = arith.constant 1.000000e+00 : f32
    %47 = vector.broadcast %cst_22 : f32 to vector<8x128xf32>
    %48 = arith.addf %47, %46 : vector<8x128xf32>
    %49 = arith.divf %47, %48 : vector<8x128xf32>
    %c32_i32_23 = arith.constant 32 : i32
    %50 = tpu.dynamic_rotate %49 by %c32_i32_23 dim 1 : vector<8x128xf32>, i32 -> vector<8x128xf32>
    %51 = vector.broadcast %10 : vector<1x128xf32> to vector<8x128xf32>
    %52 = arith.addf %42, %51 : vector<8x128xf32>
    %53 = arith.mulf %50, %52 : vector<8x128xf32>
    %54 = arith.addf %43, %53 : vector<8x128xf32>
    %55 = math.tanh %54 : vector<8x128xf32>
    %c64_i32_24 = arith.constant 64 : i32
    %56 = tpu.dynamic_rotate %55 by %c64_i32_24 dim 1 : vector<8x128xf32>, i32 -> vector<8x128xf32>
    %cst_25 = arith.constant 1.000000e+00 : f32
    %57 = vector.broadcast %cst_25 : f32 to vector<8x128xf32>
    %58 = arith.subf %57, %49 : vector<8x128xf32>
    %59 = arith.mulf %58, %56 : vector<8x128xf32>
    %60 = arith.mulf %49, %40 : vector<8x128xf32>
    %61 = arith.addf %59, %60 : vector<8x128xf32>
    %c8_26 = arith.constant 8 : index
    %c0_27 = arith.constant 0 : index
    %62 = vector.load %arg20[%c8_26, %c0_27] : memref<64x128xf32, #tpu.memory_space<vmem>>, vector<8x128xf32>
    tpu.vector_store %arg20[%c8_26, %c0_27], %61 {strides = array<i32>} : memref<64x128xf32, #tpu.memory_space<vmem>>, vector<8x128xf32>,
    %cst_28 = arith.constant dense<0.000000e+00> : vector<8x128xf32>
    %63 = tpu.matmul %61, %9, %cst_28 {dimension_numbers = #tpu.dot_dimension_numbers<[1], [0], [0], [1], [0, 0, 1, 1], [], []>} : vector<8x128xf32>, vector<128x128xf32>, vector<8x128xf32> -> vector<8x128xf32>
    %c16 = arith.constant 16 : index
    %c0_29 = arith.constant 0 : index
    %64 = vector.load %arg19[%c16, %c0_29] : memref<64x128xf32, #tpu.memory_space<vmem>>, vector<8x128xf32>
    %65 = arith.addf %64, %63 : vector<8x128xf32>
    %66 = arith.negf %65 : vector<8x128xf32>
    %67 = math.exp %66 : vector<8x128xf32>
    %cst_30 = arith.constant 1.000000e+00 : f32
    %68 = vector.broadcast %cst_30 : f32 to vector<8x128xf32>
    %69 = arith.addf %68, %67 : vector<8x128xf32>
    %70 = arith.divf %68, %69 : vector<8x128xf32>
    %c32_i32_31 = arith.constant 32 : i32
    %71 = tpu.dynamic_rotate %70 by %c32_i32_31 dim 1 : vector<8x128xf32>, i32 -> vector<8x128xf32>
    %72 = vector.broadcast %10 : vector<1x128xf32> to vector<8x128xf32>
    %73 = arith.addf %63, %72 : vector<8x128xf32>
    %74 = arith.mulf %71, %73 : vector<8x128xf32>
    %75 = arith.addf %64, %74 : vector<8x128xf32>
    %76 = math.tanh %75 : vector<8x128xf32>
    %c64_i32_32 = arith.constant 64 : i32
    %77 = tpu.dynamic_rotate %76 by %c64_i32_32 dim 1 : vector<8x128xf32>, i32 -> vector<8x128xf32>
    %cst_33 = arith.constant 1.000000e+00 : f32
    %78 = vector.broadcast %cst_33 : f32 to vector<8x128xf32>
    %79 = arith.subf %78, %70 : vector<8x128xf32>
    %80 = arith.mulf %79, %77 : vector<8x128xf32>
    %81 = arith.mulf %70, %61 : vector<8x128xf32>
    %82 = arith.addf %80, %81 : vector<8x128xf32>
    %c16_34 = arith.constant 16 : index
    %c0_35 = arith.constant 0 : index
    %83 = vector.load %arg20[%c16_34, %c0_35] : memref<64x128xf32, #tpu.memory_space<vmem>>, vector<8x128xf32>
    tpu.vector_store %arg20[%c16_34, %c0_35], %82 {strides = array<i32>} : memref<64x128xf32, #tpu.memory_space<vmem>>, vector<8x128xf32>,
    %cst_36 = arith.constant dense<0.000000e+00> : vector<8x128xf32>
    %84 = tpu.matmul %82, %9, %cst_36 {dimension_numbers = #tpu.dot_dimension_numbers<[1], [0], [0], [1], [0, 0, 1, 1], [], []>} : vector<8x128xf32>, vector<128x128xf32>, vector<8x128xf32> -> vector<8x128xf32>
    %c24 = arith.constant 24 : index
    %c0_37 = arith.constant 0 : index
    %85 = vector.load %arg19[%c24, %c0_37] : memref<64x128xf32, #tpu.memory_space<vmem>>, vector<8x128xf32>
    %86 = arith.addf %85, %84 : vector<8x128xf32>
    %87 = arith.negf %86 : vector<8x128xf32>
    %88 = math.exp %87 : vector<8x128xf32>
    %cst_38 = arith.constant 1.000000e+00 : f32
    %89 = vector.broadcast %cst_38 : f32 to vector<8x128xf32>
    %90 = arith.addf %89, %88 : vector<8x128xf32>
    %91 = arith.divf %89, %90 : vector<8x128xf32>
    %c32_i32_39 = arith.constant 32 : i32
    %92 = tpu.dynamic_rotate %91 by %c32_i32_39 dim 1 : vector<8x128xf32>, i32 -> vector<8x128xf32>
    %93 = vector.broadcast %10 : vector<1x128xf32> to vector<8x128xf32>
    %94 = arith.addf %84, %93 : vector<8x128xf32>
    %95 = arith.mulf %92, %94 : vector<8x128xf32>
    %96 = arith.addf %85, %95 : vector<8x128xf32>
    %97 = math.tanh %96 : vector<8x128xf32>
    %c64_i32_40 = arith.constant 64 : i32
    %98 = tpu.dynamic_rotate %97 by %c64_i32_40 dim 1 : vector<8x128xf32>, i32 -> vector<8x128xf32>
    %cst_41 = arith.constant 1.000000e+00 : f32
    %99 = vector.broadcast %cst_41 : f32 to vector<8x128xf32>
    %100 = arith.subf %99, %91 : vector<8x128xf32>
    %101 = arith.mulf %100, %98 : vector<8x128xf32>
    %102 = arith.mulf %91, %82 : vector<8x128xf32>
    %103 = arith.addf %101, %102 : vector<8x128xf32>
    %c24_42 = arith.constant 24 : index
    %c0_43 = arith.constant 0 : index
    %104 = vector.load %arg20[%c24_42, %c0_43] : memref<64x128xf32, #tpu.memory_space<vmem>>, vector<8x128xf32>
    tpu.vector_store %arg20[%c24_42, %c0_43], %103 {strides = array<i32>} : memref<64x128xf32, #tpu.memory_space<vmem>>, vector<8x128xf32>,
    %cst_44 = arith.constant dense<0.000000e+00> : vector<8x128xf32>
    %105 = tpu.matmul %103, %9, %cst_44 {dimension_numbers = #tpu.dot_dimension_numbers<[1], [0], [0], [1], [0, 0, 1, 1], [], []>} : vector<8x128xf32>, vector<128x128xf32>, vector<8x128xf32> -> vector<8x128xf32>
    %c32 = arith.constant 32 : index
    %c0_45 = arith.constant 0 : index
    %106 = vector.load %arg19[%c32, %c0_45] : memref<64x128xf32, #tpu.memory_space<vmem>>, vector<8x128xf32>
    %107 = arith.addf %106, %105 : vector<8x128xf32>
    %108 = arith.negf %107 : vector<8x128xf32>
    %109 = math.exp %108 : vector<8x128xf32>
    %cst_46 = arith.constant 1.000000e+00 : f32
    %110 = vector.broadcast %cst_46 : f32 to vector<8x128xf32>
    %111 = arith.addf %110, %109 : vector<8x128xf32>
    %112 = arith.divf %110, %111 : vector<8x128xf32>
    %c32_i32_47 = arith.constant 32 : i32
    %113 = tpu.dynamic_rotate %112 by %c32_i32_47 dim 1 : vector<8x128xf32>, i32 -> vector<8x128xf32>
    %114 = vector.broadcast %10 : vector<1x128xf32> to vector<8x128xf32>
    %115 = arith.addf %105, %114 : vector<8x128xf32>
    %116 = arith.mulf %113, %115 : vector<8x128xf32>
    %117 = arith.addf %106, %116 : vector<8x128xf32>
    %118 = math.tanh %117 : vector<8x128xf32>
    %c64_i32_48 = arith.constant 64 : i32
    %119 = tpu.dynamic_rotate %118 by %c64_i32_48 dim 1 : vector<8x128xf32>, i32 -> vector<8x128xf32>
    %cst_49 = arith.constant 1.000000e+00 : f32
    %120 = vector.broadcast %cst_49 : f32 to vector<8x128xf32>
    %121 = arith.subf %120, %112 : vector<8x128xf32>
    %122 = arith.mulf %121, %119 : vector<8x128xf32>
    %123 = arith.mulf %112, %103 : vector<8x128xf32>
    %124 = arith.addf %122, %123 : vector<8x128xf32>
    %c32_50 = arith.constant 32 : index
    %c0_51 = arith.constant 0 : index
    %125 = vector.load %arg20[%c32_50, %c0_51] : memref<64x128xf32, #tpu.memory_space<vmem>>, vector<8x128xf32>
    tpu.vector_store %arg20[%c32_50, %c0_51], %124 {strides = array<i32>} : memref<64x128xf32, #tpu.memory_space<vmem>>, vector<8x128xf32>,
    %cst_52 = arith.constant dense<0.000000e+00> : vector<8x128xf32>
    %126 = tpu.matmul %124, %9, %cst_52 {dimension_numbers = #tpu.dot_dimension_numbers<[1], [0], [0], [1], [0, 0, 1, 1], [], []>} : vector<8x128xf32>, vector<128x128xf32>, vector<8x128xf32> -> vector<8x128xf32>
    %c40 = arith.constant 40 : index
    %c0_53 = arith.constant 0 : index
    %127 = vector.load %arg19[%c40, %c0_53] : memref<64x128xf32, #tpu.memory_space<vmem>>, vector<8x128xf32>
    %128 = arith.addf %127, %126 : vector<8x128xf32>
    %129 = arith.negf %128 : vector<8x128xf32>
    %130 = math.exp %129 : vector<8x128xf32>
    %cst_54 = arith.constant 1.000000e+00 : f32
    %131 = vector.broadcast %cst_54 : f32 to vector<8x128xf32>
    %132 = arith.addf %131, %130 : vector<8x128xf32>
    %133 = arith.divf %131, %132 : vector<8x128xf32>
    %c32_i32_55 = arith.constant 32 : i32
    %134 = tpu.dynamic_rotate %133 by %c32_i32_55 dim 1 : vector<8x128xf32>, i32 -> vector<8x128xf32>
    %135 = vector.broadcast %10 : vector<1x128xf32> to vector<8x128xf32>
    %136 = arith.addf %126, %135 : vector<8x128xf32>
    %137 = arith.mulf %134, %136 : vector<8x128xf32>
    %138 = arith.addf %127, %137 : vector<8x128xf32>
    %139 = math.tanh %138 : vector<8x128xf32>
    %c64_i32_56 = arith.constant 64 : i32
    %140 = tpu.dynamic_rotate %139 by %c64_i32_56 dim 1 : vector<8x128xf32>, i32 -> vector<8x128xf32>
    %cst_57 = arith.constant 1.000000e+00 : f32
    %141 = vector.broadcast %cst_57 : f32 to vector<8x128xf32>
    %142 = arith.subf %141, %133 : vector<8x128xf32>
    %143 = arith.mulf %142, %140 : vector<8x128xf32>
    %144 = arith.mulf %133, %124 : vector<8x128xf32>
    %145 = arith.addf %143, %144 : vector<8x128xf32>
    %c40_58 = arith.constant 40 : index
    %c0_59 = arith.constant 0 : index
    %146 = vector.load %arg20[%c40_58, %c0_59] : memref<64x128xf32, #tpu.memory_space<vmem>>, vector<8x128xf32>
    tpu.vector_store %arg20[%c40_58, %c0_59], %145 {strides = array<i32>} : memref<64x128xf32, #tpu.memory_space<vmem>>, vector<8x128xf32>,
    %cst_60 = arith.constant dense<0.000000e+00> : vector<8x128xf32>
    %147 = tpu.matmul %145, %9, %cst_60 {dimension_numbers = #tpu.dot_dimension_numbers<[1], [0], [0], [1], [0, 0, 1, 1], [], []>} : vector<8x128xf32>, vector<128x128xf32>, vector<8x128xf32> -> vector<8x128xf32>
    %c48 = arith.constant 48 : index
    %c0_61 = arith.constant 0 : index
    %148 = vector.load %arg19[%c48, %c0_61] : memref<64x128xf32, #tpu.memory_space<vmem>>, vector<8x128xf32>
    %149 = arith.addf %148, %147 : vector<8x128xf32>
    %150 = arith.negf %149 : vector<8x128xf32>
    %151 = math.exp %150 : vector<8x128xf32>
    %cst_62 = arith.constant 1.000000e+00 : f32
    %152 = vector.broadcast %cst_62 : f32 to vector<8x128xf32>
    %153 = arith.addf %152, %151 : vector<8x128xf32>
    %154 = arith.divf %152, %153 : vector<8x128xf32>
    %c32_i32_63 = arith.constant 32 : i32
    %155 = tpu.dynamic_rotate %154 by %c32_i32_63 dim 1 : vector<8x128xf32>, i32 -> vector<8x128xf32>
    %156 = vector.broadcast %10 : vector<1x128xf32> to vector<8x128xf32>
    %157 = arith.addf %147, %156 : vector<8x128xf32>
    %158 = arith.mulf %155, %157 : vector<8x128xf32>
    %159 = arith.addf %148, %158 : vector<8x128xf32>
    %160 = math.tanh %159 : vector<8x128xf32>
    %c64_i32_64 = arith.constant 64 : i32
    %161 = tpu.dynamic_rotate %160 by %c64_i32_64 dim 1 : vector<8x128xf32>, i32 -> vector<8x128xf32>
    %cst_65 = arith.constant 1.000000e+00 : f32
    %162 = vector.broadcast %cst_65 : f32 to vector<8x128xf32>
    %163 = arith.subf %162, %154 : vector<8x128xf32>
    %164 = arith.mulf %163, %161 : vector<8x128xf32>
    %165 = arith.mulf %154, %145 : vector<8x128xf32>
    %166 = arith.addf %164, %165 : vector<8x128xf32>
    %c48_66 = arith.constant 48 : index
    %c0_67 = arith.constant 0 : index
    %167 = vector.load %arg20[%c48_66, %c0_67] : memref<64x128xf32, #tpu.memory_space<vmem>>, vector<8x128xf32>
    tpu.vector_store %arg20[%c48_66, %c0_67], %166 {strides = array<i32>} : memref<64x128xf32, #tpu.memory_space<vmem>>, vector<8x128xf32>,
    %cst_68 = arith.constant dense<0.000000e+00> : vector<8x128xf32>
    %168 = tpu.matmul %166, %9, %cst_68 {dimension_numbers = #tpu.dot_dimension_numbers<[1], [0], [0], [1], [0, 0, 1, 1], [], []>} : vector<8x128xf32>, vector<128x128xf32>, vector<8x128xf32> -> vector<8x128xf32>
    %c56 = arith.constant 56 : index
    %c0_69 = arith.constant 0 : index
    %169 = vector.load %arg19[%c56, %c0_69] : memref<64x128xf32, #tpu.memory_space<vmem>>, vector<8x128xf32>
    %170 = arith.addf %169, %168 : vector<8x128xf32>
    %171 = arith.negf %170 : vector<8x128xf32>
    %172 = math.exp %171 : vector<8x128xf32>
    %cst_70 = arith.constant 1.000000e+00 : f32
    %173 = vector.broadcast %cst_70 : f32 to vector<8x128xf32>
    %174 = arith.addf %173, %172 : vector<8x128xf32>
    %175 = arith.divf %173, %174 : vector<8x128xf32>
    %c32_i32_71 = arith.constant 32 : i32
    %176 = tpu.dynamic_rotate %175 by %c32_i32_71 dim 1 : vector<8x128xf32>, i32 -> vector<8x128xf32>
    %177 = vector.broadcast %10 : vector<1x128xf32> to vector<8x128xf32>
    %178 = arith.addf %168, %177 : vector<8x128xf32>
    %179 = arith.mulf %176, %178 : vector<8x128xf32>
    %180 = arith.addf %169, %179 : vector<8x128xf32>
    %181 = math.tanh %180 : vector<8x128xf32>
    %c64_i32_72 = arith.constant 64 : i32
    %182 = tpu.dynamic_rotate %181 by %c64_i32_72 dim 1 : vector<8x128xf32>, i32 -> vector<8x128xf32>
    %cst_73 = arith.constant 1.000000e+00 : f32
    %183 = vector.broadcast %cst_73 : f32 to vector<8x128xf32>
    %184 = arith.subf %183, %175 : vector<8x128xf32>
    %185 = arith.mulf %184, %182 : vector<8x128xf32>
    %186 = arith.mulf %175, %166 : vector<8x128xf32>
    %187 = arith.addf %185, %186 : vector<8x128xf32>
    %c56_74 = arith.constant 56 : index
    %c0_75 = arith.constant 0 : index
    %188 = vector.load %arg20[%c56_74, %c0_75] : memref<64x128xf32, #tpu.memory_space<vmem>>, vector<8x128xf32>
    tpu.vector_store %arg20[%c56_74, %c0_75], %187 {strides = array<i32>} : memref<64x128xf32, #tpu.memory_space<vmem>>, vector<8x128xf32>,
    %c0_76 = arith.constant 0 : index
    %c0_77 = arith.constant 0 : index
    %189 = vector.load %arg7[%c0_76, %c0_77] : memref<128x128xbf16, #tpu.memory_space<vmem>>, vector<128x128xbf16>
    %190 = arith.extf %189 : vector<128x128xbf16> to vector<128x128xf32>
    %c0_78 = arith.constant 0 : index
    %c0_79 = arith.constant 0 : index
    %191 = vector.load %arg9[%c0_78, %c0_79] : memref<1x128xf32, #tpu.memory_space<vmem>>, vector<1x128xf32>
    %c0_80 = arith.constant 0 : index
    %c0_81 = arith.constant 0 : index
    %192 = vector.load %arg20[%c0_80, %c0_81] : memref<64x128xf32, #tpu.memory_space<vmem>>, vector<64x128xf32>
    %c0_82 = arith.constant 0 : index
    %c0_83 = arith.constant 0 : index
    %193 = vector.load %arg6[%c0_82, %c0_83] : memref<128x128xbf16, #tpu.memory_space<vmem>>, vector<128x128xbf16>
    %194 = arith.extf %193 : vector<128x128xbf16> to vector<128x128xf32>
    %cst_84 = arith.constant dense<0.000000e+00> : vector<64x128xf32>
    %195 = tpu.matmul %192, %194, %cst_84 {dimension_numbers = #tpu.dot_dimension_numbers<[1], [0], [0], [1], [0, 0, 1, 1], [], []>} : vector<64x128xf32>, vector<128x128xf32>, vector<64x128xf32> -> vector<64x128xf32>
    %c0_85 = arith.constant 0 : index
    %c0_86 = arith.constant 0 : index
    %196 = vector.load %arg8[%c0_85, %c0_86] : memref<1x128xf32, #tpu.memory_space<vmem>>, vector<1x128xf32>
    %197 = vector.broadcast %196 : vector<1x128xf32> to vector<64x128xf32>
    %198 = arith.addf %195, %197 : vector<64x128xf32>
    %c0_87 = arith.constant 0 : index
    %c0_88 = arith.constant 0 : index
    %199 = vector.load %arg19[%c0_87, %c0_88] : memref<64x128xf32, #tpu.memory_space<vmem>>, vector<64x128xf32>
    tpu.vector_store %arg19[%c0_87, %c0_88], %198 {strides = array<i32>} : memref<64x128xf32, #tpu.memory_space<vmem>>, vector<64x128xf32>,
    %cst_89 = arith.constant 0.000000e+00 : f32
    %200 = vector.broadcast %cst_89 : f32 to vector<8x128xf32>
    %cst_90 = arith.constant dense<0.000000e+00> : vector<8x128xf32>
    %201 = tpu.matmul %200, %190, %cst_90 {dimension_numbers = #tpu.dot_dimension_numbers<[1], [0], [0], [1], [0, 0, 1, 1], [], []>} : vector<8x128xf32>, vector<128x128xf32>, vector<8x128xf32> -> vector<8x128xf32>
    %c0_91 = arith.constant 0 : index
    %c0_92 = arith.constant 0 : index
    %202 = vector.load %arg19[%c0_91, %c0_92] : memref<64x128xf32, #tpu.memory_space<vmem>>, vector<8x128xf32>
    %203 = arith.addf %202, %201 : vector<8x128xf32>
    %204 = arith.negf %203 : vector<8x128xf32>
    %205 = math.exp %204 : vector<8x128xf32>
    %cst_93 = arith.constant 1.000000e+00 : f32
    %206 = vector.broadcast %cst_93 : f32 to vector<8x128xf32>
    %207 = arith.addf %206, %205 : vector<8x128xf32>
    %208 = arith.divf %206, %207 : vector<8x128xf32>
    %c32_i32_94 = arith.constant 32 : i32
    %209 = tpu.dynamic_rotate %208 by %c32_i32_94 dim 1 : vector<8x128xf32>, i32 -> vector<8x128xf32>
    %210 = vector.broadcast %191 : vector<1x128xf32> to vector<8x128xf32>
    %211 = arith.addf %201, %210 : vector<8x128xf32>
    %212 = arith.mulf %209, %211 : vector<8x128xf32>
    %213 = arith.addf %202, %212 : vector<8x128xf32>
    %214 = math.tanh %213 : vector<8x128xf32>
    %c64_i32_95 = arith.constant 64 : i32
    %215 = tpu.dynamic_rotate %214 by %c64_i32_95 dim 1 : vector<8x128xf32>, i32 -> vector<8x128xf32>
    %cst_96 = arith.constant 1.000000e+00 : f32
    %216 = vector.broadcast %cst_96 : f32 to vector<8x128xf32>
    %217 = arith.subf %216, %208 : vector<8x128xf32>
    %218 = arith.mulf %217, %215 : vector<8x128xf32>
    %219 = arith.mulf %208, %200 : vector<8x128xf32>
    %220 = arith.addf %218, %219 : vector<8x128xf32>
    %cst_97 = arith.constant dense<0.000000e+00> : vector<8x128xf32>
    %221 = tpu.matmul %220, %190, %cst_97 {dimension_numbers = #tpu.dot_dimension_numbers<[1], [0], [0], [1], [0, 0, 1, 1], [], []>} : vector<8x128xf32>, vector<128x128xf32>, vector<8x128xf32> -> vector<8x128xf32>
    %c8_98 = arith.constant 8 : index
    %c0_99 = arith.constant 0 : index
    %222 = vector.load %arg19[%c8_98, %c0_99] : memref<64x128xf32, #tpu.memory_space<vmem>>, vector<8x128xf32>
    %223 = arith.addf %222, %221 : vector<8x128xf32>
    %224 = arith.negf %223 : vector<8x128xf32>
    %225 = math.exp %224 : vector<8x128xf32>
    %cst_100 = arith.constant 1.000000e+00 : f32
    %226 = vector.broadcast %cst_100 : f32 to vector<8x128xf32>
    %227 = arith.addf %226, %225 : vector<8x128xf32>
    %228 = arith.divf %226, %227 : vector<8x128xf32>
    %c32_i32_101 = arith.constant 32 : i32
    %229 = tpu.dynamic_rotate %228 by %c32_i32_101 dim 1 : vector<8x128xf32>, i32 -> vector<8x128xf32>
    %230 = vector.broadcast %191 : vector<1x128xf32> to vector<8x128xf32>
    %231 = arith.addf %221, %230 : vector<8x128xf32>
    %232 = arith.mulf %229, %231 : vector<8x128xf32>
    %233 = arith.addf %222, %232 : vector<8x128xf32>
    %234 = math.tanh %233 : vector<8x128xf32>
    %c64_i32_102 = arith.constant 64 : i32
    %235 = tpu.dynamic_rotate %234 by %c64_i32_102 dim 1 : vector<8x128xf32>, i32 -> vector<8x128xf32>
    %cst_103 = arith.constant 1.000000e+00 : f32
    %236 = vector.broadcast %cst_103 : f32 to vector<8x128xf32>
    %237 = arith.subf %236, %228 : vector<8x128xf32>
    %238 = arith.mulf %237, %235 : vector<8x128xf32>
    %239 = arith.mulf %228, %220 : vector<8x128xf32>
    %240 = arith.addf %238, %239 : vector<8x128xf32>
    %cst_104 = arith.constant dense<0.000000e+00> : vector<8x128xf32>
    %241 = tpu.matmul %240, %190, %cst_104 {dimension_numbers = #tpu.dot_dimension_numbers<[1], [0], [0], [1], [0, 0, 1, 1], [], []>} : vector<8x128xf32>, vector<128x128xf32>, vector<8x128xf32> -> vector<8x128xf32>
    %c16_105 = arith.constant 16 : index
    %c0_106 = arith.constant 0 : index
    %242 = vector.load %arg19[%c16_105, %c0_106] : memref<64x128xf32, #tpu.memory_space<vmem>>, vector<8x128xf32>
    %243 = arith.addf %242, %241 : vector<8x128xf32>
    %244 = arith.negf %243 : vector<8x128xf32>
    %245 = math.exp %244 : vector<8x128xf32>
    %cst_107 = arith.constant 1.000000e+00 : f32
    %246 = vector.broadcast %cst_107 : f32 to vector<8x128xf32>
    %247 = arith.addf %246, %245 : vector<8x128xf32>
    %248 = arith.divf %246, %247 : vector<8x128xf32>
    %c32_i32_108 = arith.constant 32 : i32
    %249 = tpu.dynamic_rotate %248 by %c32_i32_108 dim 1 : vector<8x128xf32>, i32 -> vector<8x128xf32>
    %250 = vector.broadcast %191 : vector<1x128xf32> to vector<8x128xf32>
    %251 = arith.addf %241, %250 : vector<8x128xf32>
    %252 = arith.mulf %249, %251 : vector<8x128xf32>
    %253 = arith.addf %242, %252 : vector<8x128xf32>
    %254 = math.tanh %253 : vector<8x128xf32>
    %c64_i32_109 = arith.constant 64 : i32
    %255 = tpu.dynamic_rotate %254 by %c64_i32_109 dim 1 : vector<8x128xf32>, i32 -> vector<8x128xf32>
    %cst_110 = arith.constant 1.000000e+00 : f32
    %256 = vector.broadcast %cst_110 : f32 to vector<8x128xf32>
    %257 = arith.subf %256, %248 : vector<8x128xf32>
    %258 = arith.mulf %257, %255 : vector<8x128xf32>
    %259 = arith.mulf %248, %240 : vector<8x128xf32>
    %260 = arith.addf %258, %259 : vector<8x128xf32>
    %cst_111 = arith.constant dense<0.000000e+00> : vector<8x128xf32>
    %261 = tpu.matmul %260, %190, %cst_111 {dimension_numbers = #tpu.dot_dimension_numbers<[1], [0], [0], [1], [0, 0, 1, 1], [], []>} : vector<8x128xf32>, vector<128x128xf32>, vector<8x128xf32> -> vector<8x128xf32>
    %c24_112 = arith.constant 24 : index
    %c0_113 = arith.constant 0 : index
    %262 = vector.load %arg19[%c24_112, %c0_113] : memref<64x128xf32, #tpu.memory_space<vmem>>, vector<8x128xf32>
    %263 = arith.addf %262, %261 : vector<8x128xf32>
    %264 = arith.negf %263 : vector<8x128xf32>
    %265 = math.exp %264 : vector<8x128xf32>
    %cst_114 = arith.constant 1.000000e+00 : f32
    %266 = vector.broadcast %cst_114 : f32 to vector<8x128xf32>
    %267 = arith.addf %266, %265 : vector<8x128xf32>
    %268 = arith.divf %266, %267 : vector<8x128xf32>
    %c32_i32_115 = arith.constant 32 : i32
    %269 = tpu.dynamic_rotate %268 by %c32_i32_115 dim 1 : vector<8x128xf32>, i32 -> vector<8x128xf32>
    %270 = vector.broadcast %191 : vector<1x128xf32> to vector<8x128xf32>
    %271 = arith.addf %261, %270 : vector<8x128xf32>
    %272 = arith.mulf %269, %271 : vector<8x128xf32>
    %273 = arith.addf %262, %272 : vector<8x128xf32>
    %274 = math.tanh %273 : vector<8x128xf32>
    %c64_i32_116 = arith.constant 64 : i32
    %275 = tpu.dynamic_rotate %274 by %c64_i32_116 dim 1 : vector<8x128xf32>, i32 -> vector<8x128xf32>
    %cst_117 = arith.constant 1.000000e+00 : f32
    %276 = vector.broadcast %cst_117 : f32 to vector<8x128xf32>
    %277 = arith.subf %276, %268 : vector<8x128xf32>
    %278 = arith.mulf %277, %275 : vector<8x128xf32>
    %279 = arith.mulf %268, %260 : vector<8x128xf32>
    %280 = arith.addf %278, %279 : vector<8x128xf32>
    %cst_118 = arith.constant dense<0.000000e+00> : vector<8x128xf32>
    %281 = tpu.matmul %280, %190, %cst_118 {dimension_numbers = #tpu.dot_dimension_numbers<[1], [0], [0], [1], [0, 0, 1, 1], [], []>} : vector<8x128xf32>, vector<128x128xf32>, vector<8x128xf32> -> vector<8x128xf32>
    %c32_119 = arith.constant 32 : index
    %c0_120 = arith.constant 0 : index
    %282 = vector.load %arg19[%c32_119, %c0_120] : memref<64x128xf32, #tpu.memory_space<vmem>>, vector<8x128xf32>
    %283 = arith.addf %282, %281 : vector<8x128xf32>
    %284 = arith.negf %283 : vector<8x128xf32>
    %285 = math.exp %284 : vector<8x128xf32>
    %cst_121 = arith.constant 1.000000e+00 : f32
    %286 = vector.broadcast %cst_121 : f32 to vector<8x128xf32>
    %287 = arith.addf %286, %285 : vector<8x128xf32>
    %288 = arith.divf %286, %287 : vector<8x128xf32>
    %c32_i32_122 = arith.constant 32 : i32
    %289 = tpu.dynamic_rotate %288 by %c32_i32_122 dim 1 : vector<8x128xf32>, i32 -> vector<8x128xf32>
    %290 = vector.broadcast %191 : vector<1x128xf32> to vector<8x128xf32>
    %291 = arith.addf %281, %290 : vector<8x128xf32>
    %292 = arith.mulf %289, %291 : vector<8x128xf32>
    %293 = arith.addf %282, %292 : vector<8x128xf32>
    %294 = math.tanh %293 : vector<8x128xf32>
    %c64_i32_123 = arith.constant 64 : i32
    %295 = tpu.dynamic_rotate %294 by %c64_i32_123 dim 1 : vector<8x128xf32>, i32 -> vector<8x128xf32>
    %cst_124 = arith.constant 1.000000e+00 : f32
    %296 = vector.broadcast %cst_124 : f32 to vector<8x128xf32>
    %297 = arith.subf %296, %288 : vector<8x128xf32>
    %298 = arith.mulf %297, %295 : vector<8x128xf32>
    %299 = arith.mulf %288, %280 : vector<8x128xf32>
    %300 = arith.addf %298, %299 : vector<8x128xf32>
    %cst_125 = arith.constant dense<0.000000e+00> : vector<8x128xf32>
    %301 = tpu.matmul %300, %190, %cst_125 {dimension_numbers = #tpu.dot_dimension_numbers<[1], [0], [0], [1], [0, 0, 1, 1], [], []>} : vector<8x128xf32>, vector<128x128xf32>, vector<8x128xf32> -> vector<8x128xf32>
    %c40_126 = arith.constant 40 : index
    %c0_127 = arith.constant 0 : index
    %302 = vector.load %arg19[%c40_126, %c0_127] : memref<64x128xf32, #tpu.memory_space<vmem>>, vector<8x128xf32>
    %303 = arith.addf %302, %301 : vector<8x128xf32>
    %304 = arith.negf %303 : vector<8x128xf32>
    %305 = math.exp %304 : vector<8x128xf32>
    %cst_128 = arith.constant 1.000000e+00 : f32
    %306 = vector.broadcast %cst_128 : f32 to vector<8x128xf32>
    %307 = arith.addf %306, %305 : vector<8x128xf32>
    %308 = arith.divf %306, %307 : vector<8x128xf32>
    %c32_i32_129 = arith.constant 32 : i32
    %309 = tpu.dynamic_rotate %308 by %c32_i32_129 dim 1 : vector<8x128xf32>, i32 -> vector<8x128xf32>
    %310 = vector.broadcast %191 : vector<1x128xf32> to vector<8x128xf32>
    %311 = arith.addf %301, %310 : vector<8x128xf32>
    %312 = arith.mulf %309, %311 : vector<8x128xf32>
    %313 = arith.addf %302, %312 : vector<8x128xf32>
    %314 = math.tanh %313 : vector<8x128xf32>
    %c64_i32_130 = arith.constant 64 : i32
    %315 = tpu.dynamic_rotate %314 by %c64_i32_130 dim 1 : vector<8x128xf32>, i32 -> vector<8x128xf32>
    %cst_131 = arith.constant 1.000000e+00 : f32
    %316 = vector.broadcast %cst_131 : f32 to vector<8x128xf32>
    %317 = arith.subf %316, %308 : vector<8x128xf32>
    %318 = arith.mulf %317, %315 : vector<8x128xf32>
    %319 = arith.mulf %308, %300 : vector<8x128xf32>
    %320 = arith.addf %318, %319 : vector<8x128xf32>
    %cst_132 = arith.constant dense<0.000000e+00> : vector<8x128xf32>
    %321 = tpu.matmul %320, %190, %cst_132 {dimension_numbers = #tpu.dot_dimension_numbers<[1], [0], [0], [1], [0, 0, 1, 1], [], []>} : vector<8x128xf32>, vector<128x128xf32>, vector<8x128xf32> -> vector<8x128xf32>
    %c48_133 = arith.constant 48 : index
    %c0_134 = arith.constant 0 : index
    %322 = vector.load %arg19[%c48_133, %c0_134] : memref<64x128xf32, #tpu.memory_space<vmem>>, vector<8x128xf32>
    %323 = arith.addf %322, %321 : vector<8x128xf32>
    %324 = arith.negf %323 : vector<8x128xf32>
    %325 = math.exp %324 : vector<8x128xf32>
    %cst_135 = arith.constant 1.000000e+00 : f32
    %326 = vector.broadcast %cst_135 : f32 to vector<8x128xf32>
    %327 = arith.addf %326, %325 : vector<8x128xf32>
    %328 = arith.divf %326, %327 : vector<8x128xf32>
    %c32_i32_136 = arith.constant 32 : i32
    %329 = tpu.dynamic_rotate %328 by %c32_i32_136 dim 1 : vector<8x128xf32>, i32 -> vector<8x128xf32>
    %330 = vector.broadcast %191 : vector<1x128xf32> to vector<8x128xf32>
    %331 = arith.addf %321, %330 : vector<8x128xf32>
    %332 = arith.mulf %329, %331 : vector<8x128xf32>
    %333 = arith.addf %322, %332 : vector<8x128xf32>
    %334 = math.tanh %333 : vector<8x128xf32>
    %c64_i32_137 = arith.constant 64 : i32
    %335 = tpu.dynamic_rotate %334 by %c64_i32_137 dim 1 : vector<8x128xf32>, i32 -> vector<8x128xf32>
    %cst_138 = arith.constant 1.000000e+00 : f32
    %336 = vector.broadcast %cst_138 : f32 to vector<8x128xf32>
    %337 = arith.subf %336, %328 : vector<8x128xf32>
    %338 = arith.mulf %337, %335 : vector<8x128xf32>
    %339 = arith.mulf %328, %320 : vector<8x128xf32>
    %340 = arith.addf %338, %339 : vector<8x128xf32>
    %cst_139 = arith.constant dense<0.000000e+00> : vector<8x128xf32>
    %341 = tpu.matmul %340, %190, %cst_139 {dimension_numbers = #tpu.dot_dimension_numbers<[1], [0], [0], [1], [0, 0, 1, 1], [], []>} : vector<8x128xf32>, vector<128x128xf32>, vector<8x128xf32> -> vector<8x128xf32>
    %c56_140 = arith.constant 56 : index
    %c0_141 = arith.constant 0 : index
    %342 = vector.load %arg19[%c56_140, %c0_141] : memref<64x128xf32, #tpu.memory_space<vmem>>, vector<8x128xf32>
    %343 = arith.addf %342, %341 : vector<8x128xf32>
    %344 = arith.negf %343 : vector<8x128xf32>
    %345 = math.exp %344 : vector<8x128xf32>
    %cst_142 = arith.constant 1.000000e+00 : f32
    %346 = vector.broadcast %cst_142 : f32 to vector<8x128xf32>
    %347 = arith.addf %346, %345 : vector<8x128xf32>
    %348 = arith.divf %346, %347 : vector<8x128xf32>
    %c32_i32_143 = arith.constant 32 : i32
    %349 = tpu.dynamic_rotate %348 by %c32_i32_143 dim 1 : vector<8x128xf32>, i32 -> vector<8x128xf32>
    %350 = vector.broadcast %191 : vector<1x128xf32> to vector<8x128xf32>
    %351 = arith.addf %341, %350 : vector<8x128xf32>
    %352 = arith.mulf %349, %351 : vector<8x128xf32>
    %353 = arith.addf %342, %352 : vector<8x128xf32>
    %354 = math.tanh %353 : vector<8x128xf32>
    %c64_i32_144 = arith.constant 64 : i32
    %355 = tpu.dynamic_rotate %354 by %c64_i32_144 dim 1 : vector<8x128xf32>, i32 -> vector<8x128xf32>
    %cst_145 = arith.constant 1.000000e+00 : f32
    %356 = vector.broadcast %cst_145 : f32 to vector<8x128xf32>
    %357 = arith.subf %356, %348 : vector<8x128xf32>
    %358 = arith.mulf %357, %355 : vector<8x128xf32>
    %359 = arith.mulf %348, %340 : vector<8x128xf32>
    %360 = arith.addf %358, %359 : vector<8x128xf32>
    %c0_i32_146 = arith.constant 0 : i32
    %361 = tpu.memref_slice %arg25[%c0_i32_146] : memref<4x!tpu.dma_semaphore, #tpu.memory_space<semaphore_mem>> -> memref<1x!tpu.dma_semaphore, #tpu.memory_space<semaphore_mem>>
    %362 = tpu.memref_squeeze %361 : memref<1x!tpu.dma_semaphore, #tpu.memory_space<semaphore_mem>> -> memref<!tpu.dma_semaphore, #tpu.memory_space<semaphore_mem>>
    tpu.wait_dma2 semaphore(%362 : memref<!tpu.dma_semaphore, #tpu.memory_space<semaphore_mem>>) src(%arg10 : memref<128x512xbf16, #tpu.memory_space<any>>) dst(%arg21 : memref<128x512xbf16, #tpu.memory_space<vmem>>)
    %363 = arith.truncf %360 : vector<8x128xf32> to vector<8x128xbf16>
    %c0_147 = arith.constant 0 : index
    %c0_148 = arith.constant 0 : index
    %364 = vector.load %arg21[%c0_147, %c0_148] : memref<128x512xbf16, #tpu.memory_space<vmem>>, vector<128x512xbf16>
    %cst_149 = arith.constant dense<0.000000e+00> : vector<8x512xf32>
    %365 = tpu.matmul %363, %364, %cst_149 {dimension_numbers = #tpu.dot_dimension_numbers<[1], [0], [0], [1], [0, 0, 1, 1], [], []>} : vector<8x128xbf16>, vector<128x512xbf16>, vector<8x512xf32> -> vector<8x512xf32>
    %c0_150 = arith.constant 0 : index
    %c0_151 = arith.constant 0 : index
    %366 = vector.load %arg11[%c0_150, %c0_151] : memref<1x512xf32, #tpu.memory_space<vmem>>, vector<1x512xf32>
    %367 = vector.broadcast %366 : vector<1x512xf32> to vector<8x512xf32>
    %368 = arith.addf %365, %367 : vector<8x512xf32>
    %cst_152 = arith.constant 0.000000e+00 : f32
    %369 = vector.broadcast %cst_152 : f32 to vector<8x512xf32>
    %370 = arith.maximumf %368, %369 : vector<8x512xf32>
    %c1_i32_153 = arith.constant 1 : i32
    %371 = tpu.memref_slice %arg25[%c1_i32_153] : memref<4x!tpu.dma_semaphore, #tpu.memory_space<semaphore_mem>> -> memref<1x!tpu.dma_semaphore, #tpu.memory_space<semaphore_mem>>
    %372 = tpu.memref_squeeze %371 : memref<1x!tpu.dma_semaphore, #tpu.memory_space<semaphore_mem>> -> memref<!tpu.dma_semaphore, #tpu.memory_space<semaphore_mem>>
    tpu.wait_dma2 semaphore(%372 : memref<!tpu.dma_semaphore, #tpu.memory_space<semaphore_mem>>) src(%arg12 : memref<512x256xbf16, #tpu.memory_space<any>>) dst(%arg22 : memref<512x256xbf16, #tpu.memory_space<vmem>>)
    %373 = arith.truncf %370 : vector<8x512xf32> to vector<8x512xbf16>
    %c0_154 = arith.constant 0 : index
    %c0_155 = arith.constant 0 : index
    %374 = vector.load %arg22[%c0_154, %c0_155] : memref<512x256xbf16, #tpu.memory_space<vmem>>, vector<512x256xbf16>
    %cst_156 = arith.constant dense<0.000000e+00> : vector<8x256xf32>
    %375 = tpu.matmul %373, %374, %cst_156 {dimension_numbers = #tpu.dot_dimension_numbers<[1], [0], [0], [1], [0, 0, 1, 1], [], []>} : vector<8x512xbf16>, vector<512x256xbf16>, vector<8x256xf32> -> vector<8x256xf32>
    %c0_157 = arith.constant 0 : index
    %c0_158 = arith.constant 0 : index
    %376 = vector.load %arg13[%c0_157, %c0_158] : memref<1x256xf32, #tpu.memory_space<vmem>>, vector<1x256xf32>
    %377 = vector.broadcast %376 : vector<1x256xf32> to vector<8x256xf32>
    %378 = arith.addf %375, %377 : vector<8x256xf32>
    %cst_159 = arith.constant 0.000000e+00 : f32
    %379 = vector.broadcast %cst_159 : f32 to vector<8x256xf32>
    %380 = arith.maximumf %378, %379 : vector<8x256xf32>
    %c2_i32_160 = arith.constant 2 : i32
    %381 = tpu.memref_slice %arg25[%c2_i32_160] : memref<4x!tpu.dma_semaphore, #tpu.memory_space<semaphore_mem>> -> memref<1x!tpu.dma_semaphore, #tpu.memory_space<semaphore_mem>>
    %382 = tpu.memref_squeeze %381 : memref<1x!tpu.dma_semaphore, #tpu.memory_space<semaphore_mem>> -> memref<!tpu.dma_semaphore, #tpu.memory_space<semaphore_mem>>
    tpu.wait_dma2 semaphore(%382 : memref<!tpu.dma_semaphore, #tpu.memory_space<semaphore_mem>>) src(%arg14 : memref<256x128xbf16, #tpu.memory_space<any>>) dst(%arg23 : memref<256x128xbf16, #tpu.memory_space<vmem>>)
    %383 = arith.truncf %380 : vector<8x256xf32> to vector<8x256xbf16>
    %c0_161 = arith.constant 0 : index
    %c0_162 = arith.constant 0 : index
    %384 = vector.load %arg23[%c0_161, %c0_162] : memref<256x128xbf16, #tpu.memory_space<vmem>>, vector<256x128xbf16>
    %cst_163 = arith.constant dense<0.000000e+00> : vector<8x128xf32>
    %385 = tpu.matmul %383, %384, %cst_163 {dimension_numbers = #tpu.dot_dimension_numbers<[1], [0], [0], [1], [0, 0, 1, 1], [], []>} : vector<8x256xbf16>, vector<256x128xbf16>, vector<8x128xf32> -> vector<8x128xf32>
    %c0_164 = arith.constant 0 : index
    %c0_165 = arith.constant 0 : index
    %386 = vector.load %arg15[%c0_164, %c0_165] : memref<1x128xf32, #tpu.memory_space<vmem>>, vector<1x128xf32>
    %387 = vector.broadcast %386 : vector<1x128xf32> to vector<8x128xf32>
    %388 = arith.addf %385, %387 : vector<8x128xf32>
    %cst_166 = arith.constant 0.000000e+00 : f32
    %389 = vector.broadcast %cst_166 : f32 to vector<8x128xf32>
    %390 = arith.maximumf %388, %389 : vector<8x128xf32>
    %c3_i32_167 = arith.constant 3 : i32
    %391 = tpu.memref_slice %arg25[%c3_i32_167] : memref<4x!tpu.dma_semaphore, #tpu.memory_space<semaphore_mem>> -> memref<1x!tpu.dma_semaphore, #tpu.memory_space<semaphore_mem>>
    %392 = tpu.memref_squeeze %391 : memref<1x!tpu.dma_semaphore, #tpu.memory_space<semaphore_mem>> -> memref<!tpu.dma_semaphore, #tpu.memory_space<semaphore_mem>>
    tpu.wait_dma2 semaphore(%392 : memref<!tpu.dma_semaphore, #tpu.memory_space<semaphore_mem>>) src(%arg16 : memref<128x128xbf16, #tpu.memory_space<any>>) dst(%arg24 : memref<128x128xbf16, #tpu.memory_space<vmem>>)
    %393 = arith.truncf %390 : vector<8x128xf32> to vector<8x128xbf16>
    %c0_168 = arith.constant 0 : index
    %c0_169 = arith.constant 0 : index
    %394 = vector.load %arg24[%c0_168, %c0_169] : memref<128x128xbf16, #tpu.memory_space<vmem>>, vector<128x128xbf16>
    %cst_170 = arith.constant dense<0.000000e+00> : vector<8x128xf32>
    %395 = tpu.matmul %393, %394, %cst_170 {dimension_numbers = #tpu.dot_dimension_numbers<[1], [0], [0], [1], [0, 0, 1, 1], [], []>} : vector<8x128xbf16>, vector<128x128xbf16>, vector<8x128xf32> -> vector<8x128xf32>
    %c0_171 = arith.constant 0 : index
    %c0_172 = arith.constant 0 : index
    %396 = vector.load %arg17[%c0_171, %c0_172] : memref<1x128xf32, #tpu.memory_space<vmem>>, vector<1x128xf32>
    %397 = vector.broadcast %396 : vector<1x128xf32> to vector<8x128xf32>
    %398 = arith.addf %395, %397 : vector<8x128xf32>
    %c0_173 = arith.constant 0 : index
    %c0_174 = arith.constant 0 : index
    %399 = vector.load %arg18[%c0_173, %c0_174] : memref<8x128xf32, #tpu.memory_space<vmem>>, vector<8x128xf32>
    tpu.vector_store %arg18[%c0_173, %c0_174], %398 {strides = array<i32>} : memref<8x128xf32, #tpu.memory_space<vmem>>, vector<8x128xf32>,
    return
  }
  func.func @transform_0(%arg0: i32) -> (i32, i32, i32) {
    %c0_i32 = arith.constant 0 : i32
    %c0_i32_0 = arith.constant 0 : i32
    %c0_i32_1 = arith.constant 0 : i32
    %c0_i32_2 = arith.constant 0 : i32
    return %c0_i32, %c0_i32_0, %c0_i32_1 : i32, i32, i32
  }
  func.func @transform_1(%arg0: i32) -> (i32, i32) {
    %c0_i32 = arith.constant 0 : i32
    %c0_i32_0 = arith.constant 0 : i32
    %c0_i32_1 = arith.constant 0 : i32
    return %c0_i32, %c0_i32_0 : i32, i32
  }
  func.func @transform_2(%arg0: i32) -> (i32, i32) {
    %c0_i32 = arith.constant 0 : i32
    %c0_i32_0 = arith.constant 0 : i32
    %c0_i32_1 = arith.constant 0 : i32
    return %c0_i32, %c0_i32_0 : i32, i32
  }
  func.func @transform_3(%arg0: i32) -> (i32, i32) {
    %c0_i32 = arith.constant 0 : i32
    %c0_i32_0 = arith.constant 0 : i32
    %c0_i32_1 = arith.constant 0 : i32
    return %c0_i32, %c0_i32_0 : i32, i32
  }
  func.func @transform_4(%arg0: i32) -> (i32, i32) {
    %c0_i32 = arith.constant 0 : i32
    %c0_i32_0 = arith.constant 0 : i32
    %c0_i32_1 = arith.constant 0 : i32
    return %c0_i32, %c0_i32_0 : i32, i32
  }
  func.func @transform_5(%arg0: i32) -> (i32, i32) {
    %c0_i32 = arith.constant 0 : i32
    %c0_i32_0 = arith.constant 0 : i32
    %c0_i32_1 = arith.constant 0 : i32
    return %c0_i32, %c0_i32_0 : i32, i32
  }
  func.func @transform_6(%arg0: i32) -> (i32, i32) {
    %c0_i32 = arith.constant 0 : i32
    %c0_i32_0 = arith.constant 0 : i32
    %c0_i32_1 = arith.constant 0 : i32
    return %c0_i32, %c0_i32_0 : i32, i32
  }
  func.func @transform_7(%arg0: i32) -> (i32, i32) {
    %c0_i32 = arith.constant 0 : i32
    %c0_i32_0 = arith.constant 0 : i32
    %c0_i32_1 = arith.constant 0 : i32
    return %c0_i32, %c0_i32_0 : i32, i32
  }
  func.func @transform_8(%arg0: i32) -> (i32, i32) {
    %c0_i32 = arith.constant 0 : i32
    %c0_i32_0 = arith.constant 0 : i32
    %c0_i32_1 = arith.constant 0 : i32
    return %c0_i32, %c0_i32_0 : i32, i32
  }
  func.func @transform_10(%arg0: i32) -> (i32, i32) {
    %c0_i32 = arith.constant 0 : i32
    %c0_i32_0 = arith.constant 0 : i32
    %c0_i32_1 = arith.constant 0 : i32
    return %c0_i32, %c0_i32_0 : i32, i32
  }
  func.func @transform_12(%arg0: i32) -> (i32, i32) {
    %c0_i32 = arith.constant 0 : i32
    %c0_i32_0 = arith.constant 0 : i32
    %c0_i32_1 = arith.constant 0 : i32
    return %c0_i32, %c0_i32_0 : i32, i32
  }
  func.func @transform_14(%arg0: i32) -> (i32, i32) {
    %c0_i32 = arith.constant 0 : i32
    %c0_i32_0 = arith.constant 0 : i32
    %c0_i32_1 = arith.constant 0 : i32
    return %c0_i32, %c0_i32_0 : i32, i32
  }
  func.func @transform_16(%arg0: i32) -> (i32, i32) {
    %c0_i32 = arith.constant 0 : i32
    %c0_i32_0 = arith.constant 0 : i32
    %c0_i32_1 = arith.constant 0 : i32
    return %c0_i32, %c0_i32_0 : i32, i32
  }
  func.func @transform_17(%arg0: i32) -> (i32, i32) {
    %c0_i32 = arith.constant 0 : i32
    %c0_i32_0 = arith.constant 0 : i32
    %c0_i32_1 = arith.constant 0 : i32
    return %c0_i32, %c0_i32_0 : i32, i32
  }
}

</mosaic_0001>

<llo_original>
// kernel: tpu_custom_call.1
$region0: #{tpu_custom_call.1}
  #allocation0 [shape = 'u32[]', space=smem, size = 0x4, offset = 0x4, fixed_abs, tag = 'smem constant byte address 0x4 - core index']
  #allocation1 [shape = 'u32[144,128]{1,0:T(1,128)}', space=vmem, size = 0x12000, scoped, tag = 'internal scratch']
  #allocation2 [shape = 'f32[64,128]{1,0:T(8,128)}', space=vmem, size = 0x8000, scoped, tag = 'scratch operand']
  #allocation3 [shape = 'f32[64,128]{1,0:T(8,128)}', space=vmem, size = 0x8000, scoped, tag = 'scratch operand']
  #allocation4 [shape = 'bf16[128,512]{1,0:T(16,128)(2,1)}', space=vmem, size = 0x20000, scoped, tag = 'scratch operand']
  #allocation5 [shape = 'bf16[512,256]{1,0:T(16,128)(2,1)}', space=vmem, size = 0x40000, scoped, tag = 'scratch operand']
  #allocation6 [shape = 'bf16[256,128]{1,0:T(16,128)(2,1)}', space=vmem, size = 0x10000, scoped, tag = 'scratch operand']
  #allocation7 [shape = 'bf16[128,128]{1,0:T(16,128)(2,1)}', space=vmem, size = 0x8000, scoped, tag = 'scratch operand']
  #allocation8 [shape = 's32[4]{0}', space=sflag, size = 0x10, scoped, tag = 'scratch operand']
  #allocation19 [shape = 's32[]', space=sflag, size = 0x4, offset = 0, fixed_abs, tag = 'sflag constant byte address 0x0 - dummy sync flag']
  #allocation21 [shape = 's32[]', space=sflag, size = 0x4, offset = 0, fixed_abs, tag = 'sflag constant byte address 0x0 - dummy sync flag']
  #allocation23 [shape = 's32[]', space=sflag, size = 0x4, offset = 0, fixed_abs, tag = 'sflag constant byte address 0x0 - dummy sync flag']
  #allocation24 [shape = 's32[]', space=sflag, size = 0x4, offset = 0, fixed_abs, tag = 'sflag constant byte address 0x0 - dummy sync flag']
  #allocation25 [shape = 'u32[]', space=smem, size = 0x4, offset = 0x44, fixed_abs, tag = 'smem constant byte address 0x44 - assertion arg 0']
  #allocation26 [shape = 'u32[]', space=smem, size = 0x4, offset = 0x48, fixed_abs, tag = 'smem constant byte address 0x48 - assertion arg 1']
  #allocation27 [shape = 's32[]', space=sflag, size = 0x4, offset = 0, fixed_abs, tag = 'sflag constant byte address 0x0 - dummy sync flag']
  #allocation28 [shape = 's32[]', space=sflag, size = 0x4, offset = 0, fixed_abs, tag = 'sflag constant byte address 0x0 - dummy sync flag']
  %s0 = inlined_call_operand.hbm [shape: f32[8,8,128], index: 0, kind: input, shape index: {}]
  %s1 = inlined_call_operand.hbm [shape: bf16[128,128], index: 1, kind: input, shape index: {}]
  %s2 = inlined_call_operand.hbm [shape: bf16[128,128], index: 2, kind: input, shape index: {}]
  %s3 = inlined_call_operand.vmem [shape: f32[1,128], index: 3, kind: input, shape index: {}]
  %s4 = inlined_call_operand.vmem [shape: f32[1,128], index: 4, kind: input, shape index: {}]
  %s5 = inlined_call_operand.hbm [shape: bf16[128,128], index: 5, kind: input, shape index: {}]
  %s6 = inlined_call_operand.hbm [shape: bf16[128,128], index: 6, kind: input, shape index: {}]
  %s7 = inlined_call_operand.vmem [shape: f32[1,128], index: 7, kind: input, shape index: {}]
  %s8 = inlined_call_operand.vmem [shape: f32[1,128], index: 8, kind: input, shape index: {}]
  %s9 = inlined_call_operand.hbm [shape: bf16[128,512], index: 9, kind: input, shape index: {}]
  %s10 = inlined_call_operand.vmem [shape: f32[1,512], index: 10, kind: input, shape index: {}]
  %s11 = inlined_call_operand.hbm [shape: bf16[512,256], index: 11, kind: input, shape index: {}]
  %s12 = inlined_call_operand.vmem [shape: f32[1,256], index: 12, kind: input, shape index: {}]
  %s13 = inlined_call_operand.hbm [shape: bf16[256,128], index: 13, kind: input, shape index: {}]
  %s14 = inlined_call_operand.vmem [shape: f32[1,128], index: 14, kind: input, shape index: {}]
  %s15 = inlined_call_operand.hbm [shape: bf16[128,128], index: 15, kind: input, shape index: {}]
  %s16 = inlined_call_operand.vmem [shape: f32[1,128], index: 16, kind: input, shape index: {}]
  %s17 = inlined_call_operand.hbm [shape: f32[8,128], index: 17, kind: output, shape index: {}]
  %s18 = sld [smem:[#allocation0]]
  $region90: #{tpu_custom_call.1} parent=0
    _
  %s20 = ssub.s32 1, %s18
  %s21 = scalar_select 0, %s20, %s18
  $region1: #{tpu_custom_call.1} parent=0
    #allocation9 [shape = 'u8[32768]{0}', space=vmem, size = 0x8000, scoped, tag = 'input window, operand 0, single buffered']
    #allocation10 [shape = 's32[1]{0}', space=sflag, size = 0x4, scoped, tag = 'scoped memory for tpu_custom_call.1']
    #allocation11 [shape = 's32[1]{0}', space=sflag, size = 0x4, scoped, tag = 'scoped memory for tpu_custom_call.1']
    #allocation12 [shape = 'u8[32768]{0}', space=vmem, size = 0x8000, scoped, tag = 'input window, operand 1, single buffered']
    #allocation13 [shape = 's32[1]{0}', space=sflag, size = 0x4, scoped, tag = 'scoped memory for tpu_custom_call.1']
    #allocation14 [shape = 'u8[32768]{0}', space=vmem, size = 0x8000, scoped, tag = 'input window, operand 2, single buffered']
    #allocation15 [shape = 'u8[32768]{0}', space=vmem, size = 0x8000, scoped, tag = 'input window, operand 5, single buffered']
    #allocation16 [shape = 's32[1]{0}', space=sflag, size = 0x4, scoped, tag = 'scoped memory for tpu_custom_call.1']
    #allocation17 [shape = 'u8[32768]{0}', space=vmem, size = 0x8000, scoped, tag = 'input window, operand 6, single buffered']
    #allocation18 [shape = 'u8[4096]{0}', space=vmem, size = 0x1000, scoped, tag = 'output window, operand 0, single buffered']
    #allocation20 [shape = 'u32[9]{0}', space=smem, size = 0x24, scoped, tag = 'DMA stride descriptor']
    #allocation22 [shape = 'u32[9]{0}', space=smem, size = 0x24, scoped, tag = 'DMA stride descriptor']
    %22 = vsyncpa [#allocation10], 0
    %23 = vsyncpa [#allocation13], 0
    %24 = vsyncpa [#allocation16], 0
    %25 = vsyncpa [#allocation11], 0
    // Predicated region
    $region2: #{tpu_custom_call.1} parent=1 // pred_check
      _
    $region3: #{tpu_custom_call.1} parent=1 // pred_check_branch
      %27 = sbr.rel (0) target = $region5
    $region4: #{tpu_custom_call.1} parent=1 // pred_region
      %s29 = ssub.s32 1024, 1024
      %30 = vsyncadd [#allocation10], %s29
      %s31 = sshll.u32 [#allocation9], 4
      %s32 = int_to_ptr.vmem [resolvable:$true] %s31
      %37 = dma.hbm_to_vmem [thread:$0]  %s0, 1024, %s32, [#allocation10], 128, 128, 8
    $region5: #{tpu_custom_call.1} parent=1 // pred_fallthru
      _
    // Predicated region
    $region6: #{tpu_custom_call.1} parent=1 // pred_check
      _
    $region7: #{tpu_custom_call.1} parent=1 // pred_check_branch
      %39 = sbr.rel (0) target = $region9
    $region8: #{tpu_custom_call.1} parent=1 // pred_region
      %s41 = ssub.s32 1024, 1024
      %42 = vsyncadd [#allocation13], %s41
      %s43 = sshll.u32 [#allocation12], 4
      %s44 = int_to_ptr.vmem [resolvable:$true] %s43
      %49 = dma.hbm_to_vmem [thread:$0]  %s1, 1024, %s44, [#allocation13], 64, 64, 4
    $region9: #{tpu_custom_call.1} parent=1 // pred_fallthru
      _
    // Predicated region
    $region10: #{tpu_custom_call.1} parent=1 // pred_check
      _
    $region11: #{tpu_custom_call.1} parent=1 // pred_check_branch
      %51 = sbr.rel (0) target = $region13
    $region12: #{tpu_custom_call.1} parent=1 // pred_region
      %s53 = ssub.s32 1024, 1024
      %54 = vsyncadd [#allocation13], %s53
      %s55 = sshll.u32 [#allocation14], 4
      %s56 = int_to_ptr.vmem [resolvable:$true] %s55
      %61 = dma.hbm_to_vmem [thread:$0]  %s2, 1024, %s56, [#allocation13], 64, 64, 4
    $region13: #{tpu_custom_call.1} parent=1 // pred_fallthru
      _
    // Predicated region
    $region14: #{tpu_custom_call.1} parent=1 // pred_check
      _
    $region15: #{tpu_custom_call.1} parent=1 // pred_check_branch
      %63 = sbr.rel (0) target = $region17
    $region16: #{tpu_custom_call.1} parent=1 // pred_region
      _
    $region17: #{tpu_custom_call.1} parent=1 // pred_fallthru
      _
    // Predicated region
    $region18: #{tpu_custom_call.1} parent=1 // pred_check
      _
    $region19: #{tpu_custom_call.1} parent=1 // pred_check_branch
      %65 = sbr.rel (0) target = $region21
    $region20: #{tpu_custom_call.1} parent=1 // pred_region
      _
    $region21: #{tpu_custom_call.1} parent=1 // pred_fallthru
      _
    // Predicated region
    $region22: #{tpu_custom_call.1} parent=1 // pred_check
      _
    $region23: #{tpu_custom_call.1} parent=1 // pred_check_branch
      %67 = sbr.rel (0) target = $region25
    $region24: #{tpu_custom_call.1} parent=1 // pred_region
      %s69 = ssub.s32 1024, 1024
      %70 = vsyncadd [#allocation16], %s69
      %s71 = sshll.u32 [#allocation15], 4
      %s72 = int_to_ptr.vmem [resolvable:$true] %s71
      %77 = dma.hbm_to_vmem [thread:$0]  %s5, 1024, %s72, [#allocation16], 64, 64, 4
    $region25: #{tpu_custom_call.1} parent=1 // pred_fallthru
      _
    // Predicated region
    $region26: #{tpu_custom_call.1} parent=1 // pred_check
      _
    $region27: #{tpu_custom_call.1} parent=1 // pred_check_branch
      %79 = sbr.rel (0) target = $region29
    $region28: #{tpu_custom_call.1} parent=1 // pred_region
      %s81 = ssub.s32 1024, 1024
      %82 = vsyncadd [#allocation16], %s81
      %s83 = sshll.u32 [#allocation17], 4
      %s84 = int_to_ptr.vmem [resolvable:$true] %s83
      %89 = dma.hbm_to_vmem [thread:$0]  %s6, 1024, %s84, [#allocation16], 64, 64, 4
    $region29: #{tpu_custom_call.1} parent=1 // pred_fallthru
      _
    // Predicated region
    $region30: #{tpu_custom_call.1} parent=1 // pred_check
      _
    $region31: #{tpu_custom_call.1} parent=1 // pred_check_branch
      %91 = sbr.rel (0) target = $region33
    $region32: #{tpu_custom_call.1} parent=1 // pred_region
      _
    $region33: #{tpu_custom_call.1} parent=1 // pred_fallthru
      _
    // Predicated region
    $region34: #{tpu_custom_call.1} parent=1 // pred_check
      _
    $region35: #{tpu_custom_call.1} parent=1 // pred_check_branch
      %93 = sbr.rel (0) target = $region37
    $region36: #{tpu_custom_call.1} parent=1 // pred_region
      _
    $region37: #{tpu_custom_call.1} parent=1 // pred_fallthru
      _
    // Predicated region
    $region38: #{tpu_custom_call.1} parent=1 // pred_check
      _
    $region39: #{tpu_custom_call.1} parent=1 // pred_check_branch
      %95 = sbr.rel (0) target = $region41
    $region40: #{tpu_custom_call.1} parent=1 // pred_region
      _
    $region41: #{tpu_custom_call.1} parent=1 // pred_fallthru
      _
    // Predicated region
    $region42: #{tpu_custom_call.1} parent=1 // pred_check
      _
    $region43: #{tpu_custom_call.1} parent=1 // pred_check_branch
      %97 = sbr.rel (0) target = $region45
    $region44: #{tpu_custom_call.1} parent=1 // pred_region
      _
    $region45: #{tpu_custom_call.1} parent=1 // pred_fallthru
      _
    // Predicated region
    $region46: #{tpu_custom_call.1} parent=1 // pred_check
      _
    $region47: #{tpu_custom_call.1} parent=1 // pred_check_branch
      %99 = sbr.rel (0) target = $region49
    $region48: #{tpu_custom_call.1} parent=1 // pred_region
      _
    $region49: #{tpu_custom_call.1} parent=1 // pred_fallthru
      _
    // Predicated region
    $region50: #{tpu_custom_call.1} parent=1 // pred_check
      _
    $region51: #{tpu_custom_call.1} parent=1 // pred_check_branch
      %101 = sbr.rel (0) target = $region53
    $region52: #{tpu_custom_call.1} parent=1 // pred_region
      _
    $region53: #{tpu_custom_call.1} parent=1 // pred_fallthru
      _
    // Predicated region
    $region54: #{tpu_custom_call.1} parent=1 // pred_check
      _
    $region55: #{tpu_custom_call.1} parent=1 // pred_check_branch
      %103 = sbr.rel (0) target = $region57
    $region56: #{tpu_custom_call.1} parent=1 // pred_region
      %104 = dma.done [#allocation10], 1024
    $region57: #{tpu_custom_call.1} parent=1 // pred_fallthru
      _
    // Predicated region
    $region58: #{tpu_custom_call.1} parent=1 // pred_check
      _
    $region59: #{tpu_custom_call.1} parent=1 // pred_check_branch
      %106 = sbr.rel (0) target = $region61
    $region60: #{tpu_custom_call.1} parent=1 // pred_region
      %107 = dma.done [#allocation13], 1024
    $region61: #{tpu_custom_call.1} parent=1 // pred_fallthru
      _
    // Predicated region
    $region62: #{tpu_custom_call.1} parent=1 // pred_check
      _
    $region63: #{tpu_custom_call.1} parent=1 // pred_check_branch
      %109 = sbr.rel (0) target = $region65
    $region64: #{tpu_custom_call.1} parent=1 // pred_region
      %110 = dma.done [#allocation13], 1024
    $region65: #{tpu_custom_call.1} parent=1 // pred_fallthru
      _
    // Predicated region
    $region66: #{tpu_custom_call.1} parent=1 // pred_check
      _
    $region67: #{tpu_custom_call.1} parent=1 // pred_check_branch
      %112 = sbr.rel (0) target = $region69
    $region68: #{tpu_custom_call.1} parent=1 // pred_region
      %113 = dma.done [#allocation16], 1024
    $region69: #{tpu_custom_call.1} parent=1 // pred_fallthru
      _
    // Predicated region
    $region70: #{tpu_custom_call.1} parent=1 // pred_check
      _
    $region71: #{tpu_custom_call.1} parent=1 // pred_check_branch
      %115 = sbr.rel (0) target = $region73
    $region72: #{tpu_custom_call.1} parent=1 // pred_region
      %116 = dma.done [#allocation16], 1024
    $region73: #{tpu_custom_call.1} parent=1 // pred_fallthru
      _
    %s119 = sshll.u32 1, 14
    %s120 = sxor.u32 4294967295, %s119
    %s122 = sld [smem:[#allocation0]]
    %s123 = sadd.s32 2, %s122
    %s125 = sshll.u32 7, 26
    %s126 = sxor.u32 4294967295, %s125
    %s127 = sand.u32 0, %s126
    %s128 = sshll.u32 %s123, 26
    %s129 = sor.u32 %s127, %s128
    %s130 = sshll.u32 [#allocation4], 4
    %s131 = int_to_ptr.vmem [resolvable:$true] %s130
    %134 = sst [smem:[#allocation20]] 512
    %s135 = scalar_lea.smem [#allocation20], 1
    %136 = sst [smem:[%s135]] 512
    %s137 = scalar_lea.smem [#allocation20], 2
    %138 = sst [smem:[%s137]] 4
    %s139 = scalar_lea.smem [#allocation20], 3
    %140 = sst [smem:[%s139]] 64
    %s141 = scalar_lea.smem [#allocation20], 4
    %142 = sst [smem:[%s141]] 128
    %s143 = scalar_lea.smem [#allocation20], 5
    %144 = sst [smem:[%s143]] 2
    %s145 = scalar_lea.smem [#allocation20], 6
    %146 = sst [smem:[%s145]] 256
    %s147 = scalar_lea.smem [#allocation20], 7
    %148 = sst [smem:[%s147]] 64
    %s149 = scalar_lea.smem [#allocation20], 8
    %150 = sst [smem:[%s149]] 4
    %152 = dma.general %s9, 4096, %s131, [#allocation8], [#allocation19], [#allocation20], %s129, 0
    %s153 = scalar_lea.sflag [#allocation8], 1
    %s155 = sshll.u32 1, 14
    %s156 = sxor.u32 4294967295, %s155
    %s158 = sadd.s32 2, %s122
    %s160 = sshll.u32 7, 26
    %s161 = sxor.u32 4294967295, %s160
    %s162 = sand.u32 0, %s161
    %s163 = sshll.u32 %s158, 26
    %s164 = sor.u32 %s162, %s163
    %s165 = sshll.u32 [#allocation5], 4
    %s166 = int_to_ptr.vmem [resolvable:$true] %s165
    %169 = sst [smem:[#allocation22]] 256
    %s170 = scalar_lea.smem [#allocation22], 1
    %171 = sst [smem:[%s170]] 256
    %s172 = scalar_lea.smem [#allocation22], 2
    %173 = sst [smem:[%s172]] 2
    %s174 = scalar_lea.smem [#allocation22], 3
    %175 = sst [smem:[%s174]] 64
    %s176 = scalar_lea.smem [#allocation22], 4
    %177 = sst [smem:[%s176]] 128
    %s178 = scalar_lea.smem [#allocation22], 5
    %179 = sst [smem:[%s178]] 2
    %s180 = scalar_lea.smem [#allocation22], 6
    %181 = sst [smem:[%s180]] 128
    %s182 = scalar_lea.smem [#allocation22], 7
    %183 = sst [smem:[%s182]] 64
    %s184 = scalar_lea.smem [#allocation22], 8
    %185 = sst [smem:[%s184]] 4
    %187 = dma.general %s11, 8192, %s166, %s153, [#allocation21], [#allocation22], %s164, 0
    %s188 = scalar_lea.sflag [#allocation8], 2
    // Predicated region
    $region74: #{tpu_custom_call.1} parent=1 // pred_check
      _
    $region75: #{tpu_custom_call.1} parent=1 // pred_check_branch
      %190 = sbr.rel target = $region77
    $region76: #{tpu_custom_call.1} parent=1 // pred_region
      %191 = sst [smem:[#allocation25]] [#allocation24]
      %192 = sst [smem:[#allocation26]] [#allocation23]
    $region77: #{tpu_custom_call.1} parent=1 // pred_fallthru
      _
    %194 = shalt.err (0)
    %s196 = sshll.u32 [#allocation6], 4
    %s197 = int_to_ptr.vmem [resolvable:$true] %s196
    %199 = dma.hbm_to_vmem [thread:$0]  %s13, 2048, %s197, %s188
    %s200 = scalar_lea.sflag [#allocation8], 3
    // Predicated region
    $region78: #{tpu_custom_call.1} parent=1 // pred_check
      _
    $region79: #{tpu_custom_call.1} parent=1 // pred_check_branch
      %202 = sbr.rel target = $region81
    $region80: #{tpu_custom_call.1} parent=1 // pred_region
      %203 = sst [smem:[#allocation25]] [#allocation28]
      %204 = sst [smem:[#allocation26]] [#allocation27]
    $region81: #{tpu_custom_call.1} parent=1 // pred_fallthru
      _
    %206 = shalt.err (0)
    %s208 = sshll.u32 [#allocation7], 4
    %s209 = int_to_ptr.vmem [resolvable:$true] %s208
    %211 = dma.hbm_to_vmem [thread:$0]  %s15, 1024, %s209, %s200
    %v212 = vld [vmem:[#allocation14] sm:$0xf]
    %v213 = vld [vmem:[#allocation14 + $0x4] sm:$0xf]
    %v214 = vld [vmem:[#allocation14 + $0x8] sm:$0xf]
    %v215 = vld [vmem:[#allocation14 + $0xc] sm:$0xf]
    %v216 = vld [vmem:[#allocation14 + $0x10] sm:$0xf]
    %v217 = vld [vmem:[#allocation14 + $0x14] sm:$0xf]
    %v218 = vld [vmem:[#allocation14 + $0x18] sm:$0xf]
    %v219 = vld [vmem:[#allocation14 + $0x1c] sm:$0xf]
    %v220 = vld [vmem:[#allocation14 + $0x20] sm:$0xf]
    %v221 = vld [vmem:[#allocation14 + $0x24] sm:$0xf]
    %v222 = vld [vmem:[#allocation14 + $0x28] sm:$0xf]
    %v223 = vld [vmem:[#allocation14 + $0x2c] sm:$0xf]
    %v224 = vld [vmem:[#allocation14 + $0x30] sm:$0xf]
    %v225 = vld [vmem:[#allocation14 + $0x34] sm:$0xf]
    %v226 = vld [vmem:[#allocation14 + $0x38] sm:$0xf]
    %v227 = vld [vmem:[#allocation14 + $0x3c] sm:$0xf]
    %v228 = vunpack.c.l.bf16 %v212
    %v229 = vunpack.c.l.bf16 %v213
    %v230 = vunpack.c.l.bf16 %v214
    %v231 = vunpack.c.l.bf16 %v215
    %v232 = vunpack.c.l.bf16 %v216
    %v233 = vunpack.c.l.bf16 %v217
    %v234 = vunpack.c.l.bf16 %v218
    %v235 = vunpack.c.l.bf16 %v219
    %v236 = vunpack.c.l.bf16 %v220
    %v237 = vunpack.c.l.bf16 %v221
    %v238 = vunpack.c.l.bf16 %v222
    %v239 = vunpack.c.l.bf16 %v223
    %v240 = vunpack.c.l.bf16 %v224
    %v241 = vunpack.c.l.bf16 %v225
    %v242 = vunpack.c.l.bf16 %v226
    %v243 = vunpack.c.l.bf16 %v227
    %v244 = vld [vmem:[%s4] sm:$0x1]
    %v245 = vld [vmem:[#allocation9] sm:$0xff]
    %v246 = vld [vmem:[#allocation9 + $0x8] sm:$0xff]
    %v247 = vld [vmem:[#allocation9 + $0x10] sm:$0xff]
    %v248 = vld [vmem:[#allocation9 + $0x18] sm:$0xff]
    %v249 = vld [vmem:[#allocation9 + $0x20] sm:$0xff]
    %v250 = vld [vmem:[#allocation9 + $0x28] sm:$0xff]
    %v251 = vld [vmem:[#allocation9 + $0x30] sm:$0xff]
    %v252 = vld [vmem:[#allocation9 + $0x38] sm:$0xff]
    %v253 = vld [vmem:[#allocation12] sm:$0xf]
    %v254 = vld [vmem:[#allocation12 + $0x4] sm:$0xf]
    %v255 = vld [vmem:[#allocation12 + $0x8] sm:$0xf]
    %v256 = vld [vmem:[#allocation12 + $0xc] sm:$0xf]
    %v257 = vld [vmem:[#allocation12 + $0x10] sm:$0xf]
    %v258 = vld [vmem:[#allocation12 + $0x14] sm:$0xf]
    %v259 = vld [vmem:[#allocation12 + $0x18] sm:$0xf]
    %v260 = vld [vmem:[#allocation12 + $0x1c] sm:$0xf]
    %v261 = vld [vmem:[#allocation12 + $0x20] sm:$0xf]
    %v262 = vld [vmem:[#allocation12 + $0x24] sm:$0xf]
    %v263 = vld [vmem:[#allocation12 + $0x28] sm:$0xf]
    %v264 = vld [vmem:[#allocation12 + $0x2c] sm:$0xf]
    %v265 = vld [vmem:[#allocation12 + $0x30] sm:$0xf]
    %v266 = vld [vmem:[#allocation12 + $0x34] sm:$0xf]
    %v267 = vld [vmem:[#allocation12 + $0x38] sm:$0xf]
    %v268 = vld [vmem:[#allocation12 + $0x3c] sm:$0xf]
    %v269 = vunpack.c.l.bf16 %v253
    %v270 = vunpack.c.l.bf16 %v254
    %v271 = vunpack.c.l.bf16 %v255
    %v272 = vunpack.c.l.bf16 %v256
    %v273 = vunpack.c.l.bf16 %v257
    %v274 = vunpack.c.l.bf16 %v258
    %v275 = vunpack.c.l.bf16 %v259
    %v276 = vunpack.c.l.bf16 %v260
    %v277 = vunpack.c.l.bf16 %v261
    %v278 = vunpack.c.l.bf16 %v262
    %v279 = vunpack.c.l.bf16 %v263
    %v280 = vunpack.c.l.bf16 %v264
    %v281 = vunpack.c.l.bf16 %v265
    %v282 = vunpack.c.l.bf16 %v266
    %v283 = vunpack.c.l.bf16 %v267
    %v284 = vunpack.c.l.bf16 %v268
    %v285 = vld [vmem:[%s3] sm:$0x1]
    %v287 = vlaneseq
    %v288 = vshrl.u32 %v287, 7
    %v289 = vsub.s32 0, %v288
    %v290 = vrot.slane %v285, %v289
    %292 = vmatprep.subr.mxu0 0.0
    %293 = vmatpush1.msra.mxu0 %v269
    %294 = vmatprep.subr.mxu0 0.0
    %295 = vmatpush1.msra.mxu0 %v270
    %296 = vmatprep.subr.mxu0 0.0
    %297 = vmatpush1.msra.mxu0 %v271
    %298 = vmatprep.subr.mxu0 0.0
    %299 = vmatpush1.msra.mxu0 %v272
    %300 = vmatprep.subr.mxu0 0.0
    %301 = vmatpush1.msra.mxu0 %v273
    %302 = vmatprep.subr.mxu0 0.0
    %303 = vmatpush1.msra.mxu0 %v274
    %304 = vmatprep.subr.mxu0 0.0
    %305 = vmatpush1.msra.mxu0 %v275
    %306 = vmatprep.subr.mxu0 0.0
    %307 = vmatpush1.msra.mxu0 %v276
    %308 = vmatprep.subr.mxu0 0.0
    %309 = vmatpush1.msra.mxu0 %v277
    %310 = vmatprep.subr.mxu0 0.0
    %311 = vmatpush1.msra.mxu0 %v278
    %312 = vmatprep.subr.mxu0 0.0
    %313 = vmatpush1.msra.mxu0 %v279
    %314 = vmatprep.subr.mxu0 0.0
    %315 = vmatpush1.msra.mxu0 %v280
    %316 = vmatprep.subr.mxu0 0.0
    %317 = vmatpush1.msra.mxu0 %v281
    %318 = vmatprep.subr.mxu0 0.0
    %319 = vmatpush1.msra.mxu0 %v282
    %320 = vmatprep.subr.mxu0 0.0
    %321 = vmatpush1.msra.mxu0 %v283
    %322 = vmatprep.subr.mxu0 0.0
    %323 = vmatpush1.msra.mxu0 %v284
    %324 = vmatprep.subr.mxu0 0.0
    %325 = vmatpush1.msra.mxu0 0.0
    %326 = vmatprep.subr.mxu0 0.0
    %327 = vmatpush1.msra.mxu0 0.0
    %328 = vmatprep.subr.mxu0 0.0
    %329 = vmatpush1.msra.mxu0 0.0
    %330 = vmatprep.subr.mxu0 0.0
    %331 = vmatpush1.msra.mxu0 0.0
    %332 = vmatprep.subr.mxu0 0.0
    %333 = vmatpush1.msra.mxu0 0.0
    %334 = vmatprep.subr.mxu0 0.0
    %335 = vmatpush1.msra.mxu0 0.0
    %336 = vmatprep.subr.mxu0 0.0
    %337 = vmatpush1.msra.mxu0 0.0
    %338 = vmatprep.subr.mxu0 0.0
    %339 = vmatpush1.msra.mxu0 0.0
    %340 = vmatprep.subr.mxu0 0.0
    %341 = vmatpush1.msra.mxu0 0.0
    %342 = vmatprep.subr.mxu0 0.0
    %343 = vmatpush1.msra.mxu0 0.0
    %344 = vmatprep.subr.mxu0 0.0
    %345 = vmatpush1.msra.mxu0 0.0
    %346 = vmatprep.subr.mxu0 0.0
    %347 = vmatpush1.msra.mxu0 0.0
    %348 = vmatprep.subr.mxu0 0.0
    %349 = vmatpush1.msra.mxu0 0.0
    %350 = vmatprep.subr.mxu0 0.0
    %351 = vmatpush1.msra.mxu0 0.0
    %352 = vmatprep.subr.mxu0 0.0
    %353 = vmatpush1.msra.mxu0 0.0
    %354 = vmatprep.subr.mxu0 0.0
    %355 = vmatpush1.msra.mxu0 0.0
    %356 = vmatprep.mubr.f32.mxu0 0.0
    %357 = vmatmul.mubr.f32.gmra.mrb[0].mxu0 %v245
    %v358 = vpop.f32.mrb[0].mxu0
    %v359 = vadd.f32 %v290, %v358
    %v360 = vpop.f32.mrb[0].mxu0
    %361 = vmatprep.mubr.f32.mxu0 0.0
    %362 = vmatmul.mubr.f32.gmra.mrb[0].mxu0 %v246
    %v363 = vpop.f32.mrb[0].mxu0
    %v364 = vadd.f32 %v290, %v363
    %v365 = vpop.f32.mrb[0].mxu0
    %366 = vmatprep.mubr.f32.mxu0 0.0
    %367 = vmatmul.mubr.f32.gmra.mrb[0].mxu0 %v247
    %v368 = vpop.f32.mrb[0].mxu0
    %v369 = vadd.f32 %v290, %v368
    %v370 = vpop.f32.mrb[0].mxu0
    %371 = vmatprep.mubr.f32.mxu0 0.0
    %372 = vmatmul.mubr.f32.gmra.mrb[0].mxu0 %v248
    %v373 = vpop.f32.mrb[0].mxu0
    %v374 = vadd.f32 %v290, %v373
    %v375 = vpop.f32.mrb[0].mxu0
    %376 = vmatprep.mubr.f32.mxu0 0.0
    %377 = vmatmul.mubr.f32.gmra.mrb[0].mxu0 %v249
    %v378 = vpop.f32.mrb[0].mxu0
    %v379 = vadd.f32 %v290, %v378
    %v380 = vpop.f32.mrb[0].mxu0
    %381 = vmatprep.mubr.f32.mxu0 0.0
    %382 = vmatmul.mubr.f32.gmra.mrb[0].mxu0 %v250
    %v383 = vpop.f32.mrb[0].mxu0
    %v384 = vadd.f32 %v290, %v383
    %v385 = vpop.f32.mrb[0].mxu0
    %386 = vmatprep.mubr.f32.mxu0 0.0
    %387 = vmatmul.mubr.f32.gmra.mrb[0].mxu0 %v251
    %v388 = vpop.f32.mrb[0].mxu0
    %v389 = vadd.f32 %v290, %v388
    %v390 = vpop.f32.mrb[0].mxu0
    %391 = vmatprep.mubr.f32.mxu0 0.0
    %392 = vmatmul.mubr.f32.gmra.mrb[0].mxu0 %v252
    %v393 = vpop.f32.mrb[0].mxu0
    %v394 = vadd.f32 %v290, %v393
    %v395 = vpop.f32.mrb[0].mxu0
    %396 = vdwg.mxu0
    %397 = vst [vmem:[#allocation2] sm:$0xff] %v359
    %398 = vst [vmem:[#allocation2 + $0x8] sm:$0xff] %v364
    %399 = vst [vmem:[#allocation2 + $0x10] sm:$0xff] %v369
    %400 = vst [vmem:[#allocation2 + $0x18] sm:$0xff] %v374
    %401 = vst [vmem:[#allocation2 + $0x20] sm:$0xff] %v379
    %402 = vst [vmem:[#allocation2 + $0x28] sm:$0xff] %v384
    %403 = vst [vmem:[#allocation2 + $0x30] sm:$0xff] %v389
    %404 = vst [vmem:[#allocation2 + $0x38] sm:$0xff] %v394
    %405 = vmatprep.subr.mxu0 0.0
    %406 = vmatpush1.msra.mxu0 %v228
    %407 = vmatprep.subr.mxu0 0.0
    %408 = vmatpush1.msra.mxu0 %v229
    %409 = vmatprep.subr.mxu0 0.0
    %410 = vmatpush1.msra.mxu0 %v230
    %411 = vmatprep.subr.mxu0 0.0
    %412 = vmatpush1.msra.mxu0 %v231
    %413 = vmatprep.subr.mxu0 0.0
    %414 = vmatpush1.msra.mxu0 %v232
    %415 = vmatprep.subr.mxu0 0.0
    %416 = vmatpush1.msra.mxu0 %v233
    %417 = vmatprep.subr.mxu0 0.0
    %418 = vmatpush1.msra.mxu0 %v234
    %419 = vmatprep.subr.mxu0 0.0
    %420 = vmatpush1.msra.mxu0 %v235
    %421 = vmatprep.subr.mxu0 0.0
    %422 = vmatpush1.msra.mxu0 %v236
    %423 = vmatprep.subr.mxu0 0.0
    %424 = vmatpush1.msra.mxu0 %v237
    %425 = vmatprep.subr.mxu0 0.0
    %426 = vmatpush1.msra.mxu0 %v238
    %427 = vmatprep.subr.mxu0 0.0
    %428 = vmatpush1.msra.mxu0 %v239
    %429 = vmatprep.subr.mxu0 0.0
    %430 = vmatpush1.msra.mxu0 %v240
    %431 = vmatprep.subr.mxu0 0.0
    %432 = vmatpush1.msra.mxu0 %v241
    %433 = vmatprep.subr.mxu0 0.0
    %434 = vmatpush1.msra.mxu0 %v242
    %435 = vmatprep.subr.mxu0 0.0
    %436 = vmatpush1.msra.mxu0 %v243
    %437 = vmatprep.subr.mxu0 0.0
    %438 = vmatpush1.msra.mxu0 0.0
    %439 = vmatprep.subr.mxu0 0.0
    %440 = vmatpush1.msra.mxu0 0.0
    %441 = vmatprep.subr.mxu0 0.0
    %442 = vmatpush1.msra.mxu0 0.0
    %443 = vmatprep.subr.mxu0 0.0
    %444 = vmatpush1.msra.mxu0 0.0
    %445 = vmatprep.subr.mxu0 0.0
    %446 = vmatpush1.msra.mxu0 0.0
    %447 = vmatprep.subr.mxu0 0.0
    %448 = vmatpush1.msra.mxu0 0.0
    %449 = vmatprep.subr.mxu0 0.0
    %450 = vmatpush1.msra.mxu0 0.0
    %451 = vmatprep.subr.mxu0 0.0
    %452 = vmatpush1.msra.mxu0 0.0
    %453 = vmatprep.subr.mxu0 0.0
    %454 = vmatpush1.msra.mxu0 0.0
    %455 = vmatprep.subr.mxu0 0.0
    %456 = vmatpush1.msra.mxu0 0.0
    %457 = vmatprep.subr.mxu0 0.0
    %458 = vmatpush1.msra.mxu0 0.0
    %459 = vmatprep.subr.mxu0 0.0
    %460 = vmatpush1.msra.mxu0 0.0
    %461 = vmatprep.subr.mxu0 0.0
    %462 = vmatpush1.msra.mxu0 0.0
    %463 = vmatprep.subr.mxu0 0.0
    %464 = vmatpush1.msra.mxu0 0.0
    %465 = vmatprep.subr.mxu0 0.0
    %466 = vmatpush1.msra.mxu0 0.0
    %467 = vmatprep.subr.mxu0 0.0
    %468 = vmatpush1.msra.mxu0 0.0
    %469 = vmatprep.mubr.f32.mxu0 0.0
    %470 = vmatmul.mubr.f32.gmra.mrb[0].mxu0 0.0
    %v471 = vpop.f32.mrb[0].mxu0
    %v472 = vadd.f32 0.0, %v471
    %v473 = vpop.f32.mrb[0].mxu0
    %474 = vdwg.mxu0
    %v475 = vld [vmem:[#allocation2] sm:$0xff]
    %v476 = vadd.f32 %v475, %v472
    %v477 = vxor.u32 %v476, 2147483648
    %v478 = vmul.f32 %v477, 1.442695
    %v479 = vpow.pop %v478
    %v480 = vadd.f32 %v479, 1.0
    %v481 = vrcp.pop %v480
    %v482 = vmul.f32 1.0, %v481
    %483 = vrot.lane.b32.xlu0 %v482, 32
    %v484 = vpop.permute.xlu0 %483
    %v486 = vlaneseq
    %v487 = vshrl.u32 %v486, 7
    %v488 = vsub.s32 0, %v487
    %v489 = vrot.slane %v244, %v488
    %v491 = vadd.f32 %v472, %v489
    %v492 = vmul.f32 %v484, %v491
    %v493 = vadd.f32 %v475, %v492
    %v494 = vtanh.pop %v493
    %495 = vrot.lane.b32.xlu0 %v494, 64
    %v496 = vpop.permute.xlu0 %495
    %v497 = vsub.f32 1.0, %v482
    %v498 = vmul.f32 %v497, %v496
    %v499 = vmul.f32 %v482, 0.0
    %v500 = vadd.f32 %v498, %v499
    %501 = vst [vmem:[#allocation3] sm:$0xff] %v500
    %502 = vmatprep.subr.mxu0 0.0
    %503 = vmatpush1.msra.mxu0 %v228
    %504 = vmatprep.subr.mxu0 0.0
    %505 = vmatpush1.msra.mxu0 %v229
    %506 = vmatprep.subr.mxu0 0.0
    %507 = vmatpush1.msra.mxu0 %v230
    %508 = vmatprep.subr.mxu0 0.0
    %509 = vmatpush1.msra.mxu0 %v231
    %510 = vmatprep.subr.mxu0 0.0
    %511 = vmatpush1.msra.mxu0 %v232
    %512 = vmatprep.subr.mxu0 0.0
    %513 = vmatpush1.msra.mxu0 %v233
    %514 = vmatprep.subr.mxu0 0.0
    %515 = vmatpush1.msra.mxu0 %v234
    %516 = vmatprep.subr.mxu0 0.0
    %517 = vmatpush1.msra.mxu0 %v235
    %518 = vmatprep.subr.mxu0 0.0
    %519 = vmatpush1.msra.mxu0 %v236
    %520 = vmatprep.subr.mxu0 0.0
    %521 = vmatpush1.msra.mxu0 %v237
    %522 = vmatprep.subr.mxu0 0.0
    %523 = vmatpush1.msra.mxu0 %v238
    %524 = vmatprep.subr.mxu0 0.0
    %525 = vmatpush1.msra.mxu0 %v239
    %526 = vmatprep.subr.mxu0 0.0
    %527 = vmatpush1.msra.mxu0 %v240
    %528 = vmatprep.subr.mxu0 0.0
    %529 = vmatpush1.msra.mxu0 %v241
    %530 = vmatprep.subr.mxu0 0.0
    %531 = vmatpush1.msra.mxu0 %v242
    %532 = vmatprep.subr.mxu0 0.0
    %533 = vmatpush1.msra.mxu0 %v243
    %534 = vmatprep.subr.mxu0 0.0
    %535 = vmatpush1.msra.mxu0 0.0
    %536 = vmatprep.subr.mxu0 0.0
    %537 = vmatpush1.msra.mxu0 0.0
    %538 = vmatprep.subr.mxu0 0.0
    %539 = vmatpush1.msra.mxu0 0.0
    %540 = vmatprep.subr.mxu0 0.0
    %541 = vmatpush1.msra.mxu0 0.0
    %542 = vmatprep.subr.mxu0 0.0
    %543 = vmatpush1.msra.mxu0 0.0
    %544 = vmatprep.subr.mxu0 0.0
    %545 = vmatpush1.msra.mxu0 0.0
    %546 = vmatprep.subr.mxu0 0.0
    %547 = vmatpush1.msra.mxu0 0.0
    %548 = vmatprep.subr.mxu0 0.0
    %549 = vmatpush1.msra.mxu0 0.0
    %550 = vmatprep.subr.mxu0 0.0
    %551 = vmatpush1.msra.mxu0 0.0
    %552 = vmatprep.subr.mxu0 0.0
    %553 = vmatpush1.msra.mxu0 0.0
    %554 = vmatprep.subr.mxu0 0.0
    %555 = vmatpush1.msra.mxu0 0.0
    %556 = vmatprep.subr.mxu0 0.0
    %557 = vmatpush1.msra.mxu0 0.0
    %558 = vmatprep.subr.mxu0 0.0
    %559 = vmatpush1.msra.mxu0 0.0
    %560 = vmatprep.subr.mxu0 0.0
    %561 = vmatpush1.msra.mxu0 0.0
    %562 = vmatprep.subr.mxu0 0.0
    %563 = vmatpush1.msra.mxu0 0.0
    %564 = vmatprep.subr.mxu0 0.0
    %565 = vmatpush1.msra.mxu0 0.0
    %566 = vmatprep.mubr.f32.mxu0 0.0
    %567 = vmatmul.mubr.f32.gmra.mrb[0].mxu0 %v500
    %v568 = vpop.f32.mrb[0].mxu0
    %v569 = vadd.f32 0.0, %v568
    %v570 = vpop.f32.mrb[0].mxu0
    %571 = vdwg.mxu0
    %v572 = vld [vmem:[#allocation2 + $0x8] sm:$0xff]
    %v573 = vadd.f32 %v572, %v569
    %v574 = vxor.u32 %v573, 2147483648
    %v575 = vmul.f32 %v574, 1.442695
    %v576 = vpow.pop %v575
    %v577 = vadd.f32 %v576, 1.0
    %v578 = vrcp.pop %v577
    %v579 = vmul.f32 1.0, %v578
    %580 = vrot.lane.b32.xlu0 %v579, 32
    %v581 = vpop.permute.xlu0 %580
    %v582 = vadd.f32 %v569, %v489
    %v583 = vmul.f32 %v581, %v582
    %v584 = vadd.f32 %v572, %v583
    %v585 = vtanh.pop %v584
    %586 = vrot.lane.b32.xlu0 %v585, 64
    %v587 = vpop.permute.xlu0 %586
    %v588 = vsub.f32 1.0, %v579
    %v589 = vmul.f32 %v588, %v587
    %v590 = vmul.f32 %v579, %v500
    %v591 = vadd.f32 %v589, %v590
    %592 = vst [vmem:[#allocation3 + $0x8] sm:$0xff] %v591
    %593 = vmatprep.subr.mxu0 0.0
    %594 = vmatpush1.msra.mxu0 %v228
    %595 = vmatprep.subr.mxu0 0.0
    %596 = vmatpush1.msra.mxu0 %v229
    %597 = vmatprep.subr.mxu0 0.0
    %598 = vmatpush1.msra.mxu0 %v230
    %599 = vmatprep.subr.mxu0 0.0
    %600 = vmatpush1.msra.mxu0 %v231
    %601 = vmatprep.subr.mxu0 0.0
    %602 = vmatpush1.msra.mxu0 %v232
    %603 = vmatprep.subr.mxu0 0.0
    %604 = vmatpush1.msra.mxu0 %v233
    %605 = vmatprep.subr.mxu0 0.0
    %606 = vmatpush1.msra.mxu0 %v234
    %607 = vmatprep.subr.mxu0 0.0
    %608 = vmatpush1.msra.mxu0 %v235
    %609 = vmatprep.subr.mxu0 0.0
    %610 = vmatpush1.msra.mxu0 %v236
    %611 = vmatprep.subr.mxu0 0.0
    %612 = vmatpush1.msra.mxu0 %v237
    %613 = vmatprep.subr.mxu0 0.0
    %614 = vmatpush1.msra.mxu0 %v238
    %615 = vmatprep.subr.mxu0 0.0
    %616 = vmatpush1.msra.mxu0 %v239
    %617 = vmatprep.subr.mxu0 0.0
    %618 = vmatpush1.msra.mxu0 %v240
    %619 = vmatprep.subr.mxu0 0.0
    %620 = vmatpush1.msra.mxu0 %v241
    %621 = vmatprep.subr.mxu0 0.0
    %622 = vmatpush1.msra.mxu0 %v242
    %623 = vmatprep.subr.mxu0 0.0
    %624 = vmatpush1.msra.mxu0 %v243
    %625 = vmatprep.subr.mxu0 0.0
    %626 = vmatpush1.msra.mxu0 0.0
    %627 = vmatprep.subr.mxu0 0.0
    %628 = vmatpush1.msra.mxu0 0.0
    %629 = vmatprep.subr.mxu0 0.0
    %630 = vmatpush1.msra.mxu0 0.0
    %631 = vmatprep.subr.mxu0 0.0
    %632 = vmatpush1.msra.mxu0 0.0
    %633 = vmatprep.subr.mxu0 0.0
    %634 = vmatpush1.msra.mxu0 0.0
    %635 = vmatprep.subr.mxu0 0.0
    %636 = vmatpush1.msra.mxu0 0.0
    %637 = vmatprep.subr.mxu0 0.0
    %638 = vmatpush1.msra.mxu0 0.0
    %639 = vmatprep.subr.mxu0 0.0
    %640 = vmatpush1.msra.mxu0 0.0
    %641 = vmatprep.subr.mxu0 0.0
    %642 = vmatpush1.msra.mxu0 0.0
    %643 = vmatprep.subr.mxu0 0.0
    %644 = vmatpush1.msra.mxu0 0.0
    %645 = vmatprep.subr.mxu0 0.0
    %646 = vmatpush1.msra.mxu0 0.0
    %647 = vmatprep.subr.mxu0 0.0
    %648 = vmatpush1.msra.mxu0 0.0
    %649 = vmatprep.subr.mxu0 0.0
    %650 = vmatpush1.msra.mxu0 0.0
    %651 = vmatprep.subr.mxu0 0.0
    %652 = vmatpush1.msra.mxu0 0.0
    %653 = vmatprep.subr.mxu0 0.0
    %654 = vmatpush1.msra.mxu0 0.0
    %655 = vmatprep.subr.mxu0 0.0
    %656 = vmatpush1.msra.mxu0 0.0
    %657 = vmatprep.mubr.f32.mxu0 0.0
    %658 = vmatmul.mubr.f32.gmra.mrb[0].mxu0 %v591
    %v659 = vpop.f32.mrb[0].mxu0
    %v660 = vadd.f32 0.0, %v659
    %v661 = vpop.f32.mrb[0].mxu0
    %662 = vdwg.mxu0
    %v663 = vld [vmem:[#allocation2 + $0x10] sm:$0xff]
    %v664 = vadd.f32 %v663, %v660
    %v665 = vxor.u32 %v664, 2147483648
    %v666 = vmul.f32 %v665, 1.442695
    %v667 = vpow.pop %v666
    %v668 = vadd.f32 %v667, 1.0
    %v669 = vrcp.pop %v668
    %v670 = vmul.f32 1.0, %v669
    %671 = vrot.lane.b32.xlu0 %v670, 32
    %v672 = vpop.permute.xlu0 %671
    %v673 = vadd.f32 %v660, %v489
    %v674 = vmul.f32 %v672, %v673
    %v675 = vadd.f32 %v663, %v674
    %v676 = vtanh.pop %v675
    %677 = vrot.lane.b32.xlu0 %v676, 64
    %v678 = vpop.permute.xlu0 %677
    %v679 = vsub.f32 1.0, %v670
    %v680 = vmul.f32 %v679, %v678
    %v681 = vmul.f32 %v670, %v591
    %v682 = vadd.f32 %v680, %v681
    %683 = vst [vmem:[#allocation3 + $0x10] sm:$0xff] %v682
    %684 = vmatprep.subr.mxu0 0.0
    %685 = vmatpush1.msra.mxu0 %v228
    %686 = vmatprep.subr.mxu0 0.0
    %687 = vmatpush1.msra.mxu0 %v229
    %688 = vmatprep.subr.mxu0 0.0
    %689 = vmatpush1.msra.mxu0 %v230
    %690 = vmatprep.subr.mxu0 0.0
    %691 = vmatpush1.msra.mxu0 %v231
    %692 = vmatprep.subr.mxu0 0.0
    %693 = vmatpush1.msra.mxu0 %v232
    %694 = vmatprep.subr.mxu0 0.0
    %695 = vmatpush1.msra.mxu0 %v233
    %696 = vmatprep.subr.mxu0 0.0
    %697 = vmatpush1.msra.mxu0 %v234
    %698 = vmatprep.subr.mxu0 0.0
    %699 = vmatpush1.msra.mxu0 %v235
    %700 = vmatprep.subr.mxu0 0.0
    %701 = vmatpush1.msra.mxu0 %v236
    %702 = vmatprep.subr.mxu0 0.0
    %703 = vmatpush1.msra.mxu0 %v237
    %704 = vmatprep.subr.mxu0 0.0
    %705 = vmatpush1.msra.mxu0 %v238
    %706 = vmatprep.subr.mxu0 0.0
    %707 = vmatpush1.msra.mxu0 %v239
    %708 = vmatprep.subr.mxu0 0.0
    %709 = vmatpush1.msra.mxu0 %v240
    %710 = vmatprep.subr.mxu0 0.0
    %711 = vmatpush1.msra.mxu0 %v241
    %712 = vmatprep.subr.mxu0 0.0
    %713 = vmatpush1.msra.mxu0 %v242
    %714 = vmatprep.subr.mxu0 0.0
    %715 = vmatpush1.msra.mxu0 %v243
    %716 = vmatprep.subr.mxu0 0.0
    %717 = vmatpush1.msra.mxu0 0.0
    %718 = vmatprep.subr.mxu0 0.0
    %719 = vmatpush1.msra.mxu0 0.0
    %720 = vmatprep.subr.mxu0 0.0
    %721 = vmatpush1.msra.mxu0 0.0
    %722 = vmatprep.subr.mxu0 0.0
    %723 = vmatpush1.msra.mxu0 0.0
    %724 = vmatprep.subr.mxu0 0.0
    %725 = vmatpush1.msra.mxu0 0.0
    %726 = vmatprep.subr.mxu0 0.0
    %727 = vmatpush1.msra.mxu0 0.0
    %728 = vmatprep.subr.mxu0 0.0
    %729 = vmatpush1.msra.mxu0 0.0
    %730 = vmatprep.subr.mxu0 0.0
    %731 = vmatpush1.msra.mxu0 0.0
    %732 = vmatprep.subr.mxu0 0.0
    %733 = vmatpush1.msra.mxu0 0.0
    %734 = vmatprep.subr.mxu0 0.0
    %735 = vmatpush1.msra.mxu0 0.0
    %736 = vmatprep.subr.mxu0 0.0
    %737 = vmatpush1.msra.mxu0 0.0
    %738 = vmatprep.subr.mxu0 0.0
    %739 = vmatpush1.msra.mxu0 0.0
    %740 = vmatprep.subr.mxu0 0.0
    %741 = vmatpush1.msra.mxu0 0.0
    %742 = vmatprep.subr.mxu0 0.0
    %743 = vmatpush1.msra.mxu0 0.0
    %744 = vmatprep.subr.mxu0 0.0
    %745 = vmatpush1.msra.mxu0 0.0
    %746 = vmatprep.subr.mxu0 0.0
    %747 = vmatpush1.msra.mxu0 0.0
    %748 = vmatprep.mubr.f32.mxu0 0.0
    %749 = vmatmul.mubr.f32.gmra.mrb[0].mxu0 %v682
    %v750 = vpop.f32.mrb[0].mxu0
    %v751 = vadd.f32 0.0, %v750
    %v752 = vpop.f32.mrb[0].mxu0
    %753 = vdwg.mxu0
    %v754 = vld [vmem:[#allocation2 + $0x18] sm:$0xff]
    %v755 = vadd.f32 %v754, %v751
    %v756 = vxor.u32 %v755, 2147483648
    %v757 = vmul.f32 %v756, 1.442695
    %v758 = vpow.pop %v757
    %v759 = vadd.f32 %v758, 1.0
    %v760 = vrcp.pop %v759
    %v761 = vmul.f32 1.0, %v760
    %762 = vrot.lane.b32.xlu0 %v761, 32
    %v763 = vpop.permute.xlu0 %762
    %v764 = vadd.f32 %v751, %v489
    %v765 = vmul.f32 %v763, %v764
    %v766 = vadd.f32 %v754, %v765
    %v767 = vtanh.pop %v766
    %768 = vrot.lane.b32.xlu0 %v767, 64
    %v769 = vpop.permute.xlu0 %768
    %v770 = vsub.f32 1.0, %v761
    %v771 = vmul.f32 %v770, %v769
    %v772 = vmul.f32 %v761, %v682
    %v773 = vadd.f32 %v771, %v772
    %774 = vst [vmem:[#allocation3 + $0x18] sm:$0xff] %v773
    %775 = vmatprep.subr.mxu0 0.0
    %776 = vmatpush1.msra.mxu0 %v228
    %777 = vmatprep.subr.mxu0 0.0
    %778 = vmatpush1.msra.mxu0 %v229
    %779 = vmatprep.subr.mxu0 0.0
    %780 = vmatpush1.msra.mxu0 %v230
    %781 = vmatprep.subr.mxu0 0.0
    %782 = vmatpush1.msra.mxu0 %v231
    %783 = vmatprep.subr.mxu0 0.0
    %784 = vmatpush1.msra.mxu0 %v232
    %785 = vmatprep.subr.mxu0 0.0
    %786 = vmatpush1.msra.mxu0 %v233
    %787 = vmatprep.subr.mxu0 0.0
    %788 = vmatpush1.msra.mxu0 %v234
    %789 = vmatprep.subr.mxu0 0.0
    %790 = vmatpush1.msra.mxu0 %v235
    %791 = vmatprep.subr.mxu0 0.0
    %792 = vmatpush1.msra.mxu0 %v236
    %793 = vmatprep.subr.mxu0 0.0
    %794 = vmatpush1.msra.mxu0 %v237
    %795 = vmatprep.subr.mxu0 0.0
    %796 = vmatpush1.msra.mxu0 %v238
    %797 = vmatprep.subr.mxu0 0.0
    %798 = vmatpush1.msra.mxu0 %v239
    %799 = vmatprep.subr.mxu0 0.0
    %800 = vmatpush1.msra.mxu0 %v240
    %801 = vmatprep.subr.mxu0 0.0
    %802 = vmatpush1.msra.mxu0 %v241
    %803 = vmatprep.subr.mxu0 0.0
    %804 = vmatpush1.msra.mxu0 %v242
    %805 = vmatprep.subr.mxu0 0.0
    %806 = vmatpush1.msra.mxu0 %v243
    %807 = vmatprep.subr.mxu0 0.0
    %808 = vmatpush1.msra.mxu0 0.0
    %809 = vmatprep.subr.mxu0 0.0
    %810 = vmatpush1.msra.mxu0 0.0
    %811 = vmatprep.subr.mxu0 0.0
    %812 = vmatpush1.msra.mxu0 0.0
    %813 = vmatprep.subr.mxu0 0.0
    %814 = vmatpush1.msra.mxu0 0.0
    %815 = vmatprep.subr.mxu0 0.0
    %816 = vmatpush1.msra.mxu0 0.0
    %817 = vmatprep.subr.mxu0 0.0
    %818 = vmatpush1.msra.mxu0 0.0
    %819 = vmatprep.subr.mxu0 0.0
    %820 = vmatpush1.msra.mxu0 0.0
    %821 = vmatprep.subr.mxu0 0.0
    %822 = vmatpush1.msra.mxu0 0.0
    %823 = vmatprep.subr.mxu0 0.0
    %824 = vmatpush1.msra.mxu0 0.0
    %825 = vmatprep.subr.mxu0 0.0
    %826 = vmatpush1.msra.mxu0 0.0
    %827 = vmatprep.subr.mxu0 0.0
    %828 = vmatpush1.msra.mxu0 0.0
    %829 = vmatprep.subr.mxu0 0.0
    %830 = vmatpush1.msra.mxu0 0.0
    %831 = vmatprep.subr.mxu0 0.0
    %832 = vmatpush1.msra.mxu0 0.0
    %833 = vmatprep.subr.mxu0 0.0
    %834 = vmatpush1.msra.mxu0 0.0
    %835 = vmatprep.subr.mxu0 0.0
    %836 = vmatpush1.msra.mxu0 0.0
    %837 = vmatprep.subr.mxu0 0.0
    %838 = vmatpush1.msra.mxu0 0.0
    %839 = vmatprep.mubr.f32.mxu0 0.0
    %840 = vmatmul.mubr.f32.gmra.mrb[0].mxu0 %v773
    %v841 = vpop.f32.mrb[0].mxu0
    %v842 = vadd.f32 0.0, %v841
    %v843 = vpop.f32.mrb[0].mxu0
    %844 = vdwg.mxu0
    %v845 = vld [vmem:[#allocation2 + $0x20] sm:$0xff]
    %v846 = vadd.f32 %v845, %v842
    %v847 = vxor.u32 %v846, 2147483648
    %v848 = vmul.f32 %v847, 1.442695
    %v849 = vpow.pop %v848
    %v850 = vadd.f32 %v849, 1.0
    %v851 = vrcp.pop %v850
    %v852 = vmul.f32 1.0, %v851
    %853 = vrot.lane.b32.xlu0 %v852, 32
    %v854 = vpop.permute.xlu0 %853
    %v855 = vadd.f32 %v842, %v489
    %v856 = vmul.f32 %v854, %v855
    %v857 = vadd.f32 %v845, %v856
    %v858 = vtanh.pop %v857
    %859 = vrot.lane.b32.xlu0 %v858, 64
    %v860 = vpop.permute.xlu0 %859
    %v861 = vsub.f32 1.0, %v852
    %v862 = vmul.f32 %v861, %v860
    %v863 = vmul.f32 %v852, %v773
    %v864 = vadd.f32 %v862, %v863
    %865 = vst [vmem:[#allocation3 + $0x20] sm:$0xff] %v864
    %866 = vmatprep.subr.mxu0 0.0
    %867 = vmatpush1.msra.mxu0 %v228
    %868 = vmatprep.subr.mxu0 0.0
    %869 = vmatpush1.msra.mxu0 %v229
    %870 = vmatprep.subr.mxu0 0.0
    %871 = vmatpush1.msra.mxu0 %v230
    %872 = vmatprep.subr.mxu0 0.0
    %873 = vmatpush1.msra.mxu0 %v231
    %874 = vmatprep.subr.mxu0 0.0
    %875 = vmatpush1.msra.mxu0 %v232
    %876 = vmatprep.subr.mxu0 0.0
    %877 = vmatpush1.msra.mxu0 %v233
    %878 = vmatprep.subr.mxu0 0.0
    %879 = vmatpush1.msra.mxu0 %v234
    %880 = vmatprep.subr.mxu0 0.0
    %881 = vmatpush1.msra.mxu0 %v235
    %882 = vmatprep.subr.mxu0 0.0
    %883 = vmatpush1.msra.mxu0 %v236
    %884 = vmatprep.subr.mxu0 0.0
    %885 = vmatpush1.msra.mxu0 %v237
    %886 = vmatprep.subr.mxu0 0.0
    %887 = vmatpush1.msra.mxu0 %v238
    %888 = vmatprep.subr.mxu0 0.0
    %889 = vmatpush1.msra.mxu0 %v239
    %890 = vmatprep.subr.mxu0 0.0
    %891 = vmatpush1.msra.mxu0 %v240
    %892 = vmatprep.subr.mxu0 0.0
    %893 = vmatpush1.msra.mxu0 %v241
    %894 = vmatprep.subr.mxu0 0.0
    %895 = vmatpush1.msra.mxu0 %v242
    %896 = vmatprep.subr.mxu0 0.0
    %897 = vmatpush1.msra.mxu0 %v243
    %898 = vmatprep.subr.mxu0 0.0
    %899 = vmatpush1.msra.mxu0 0.0
    %900 = vmatprep.subr.mxu0 0.0
    %901 = vmatpush1.msra.mxu0 0.0
    %902 = vmatprep.subr.mxu0 0.0
    %903 = vmatpush1.msra.mxu0 0.0
    %904 = vmatprep.subr.mxu0 0.0
    %905 = vmatpush1.msra.mxu0 0.0
    %906 = vmatprep.subr.mxu0 0.0
    %907 = vmatpush1.msra.mxu0 0.0
    %908 = vmatprep.subr.mxu0 0.0
    %909 = vmatpush1.msra.mxu0 0.0
    %910 = vmatprep.subr.mxu0 0.0
    %911 = vmatpush1.msra.mxu0 0.0
    %912 = vmatprep.subr.mxu0 0.0
    %913 = vmatpush1.msra.mxu0 0.0
    %914 = vmatprep.subr.mxu0 0.0
    %915 = vmatpush1.msra.mxu0 0.0
    %916 = vmatprep.subr.mxu0 0.0
    %917 = vmatpush1.msra.mxu0 0.0
    %918 = vmatprep.subr.mxu0 0.0
    %919 = vmatpush1.msra.mxu0 0.0
    %920 = vmatprep.subr.mxu0 0.0
    %921 = vmatpush1.msra.mxu0 0.0
    %922 = vmatprep.subr.mxu0 0.0
    %923 = vmatpush1.msra.mxu0 0.0
    %924 = vmatprep.subr.mxu0 0.0
    %925 = vmatpush1.msra.mxu0 0.0
    %926 = vmatprep.subr.mxu0 0.0
    %927 = vmatpush1.msra.mxu0 0.0
    %928 = vmatprep.subr.mxu0 0.0
    %929 = vmatpush1.msra.mxu0 0.0
    %930 = vmatprep.mubr.f32.mxu0 0.0
    %931 = vmatmul.mubr.f32.gmra.mrb[0].mxu0 %v864
    %v932 = vpop.f32.mrb[0].mxu0
    %v933 = vadd.f32 0.0, %v932
    %v934 = vpop.f32.mrb[0].mxu0
    %935 = vdwg.mxu0
    %v936 = vld [vmem:[#allocation2 + $0x28] sm:$0xff]
    %v937 = vadd.f32 %v936, %v933
    %v938 = vxor.u32 %v937, 2147483648
    %v939 = vmul.f32 %v938, 1.442695
    %v940 = vpow.pop %v939
    %v941 = vadd.f32 %v940, 1.0
    %v942 = vrcp.pop %v941
    %v943 = vmul.f32 1.0, %v942
    %944 = vrot.lane.b32.xlu0 %v943, 32
    %v945 = vpop.permute.xlu0 %944
    %v946 = vadd.f32 %v933, %v489
    %v947 = vmul.f32 %v945, %v946
    %v948 = vadd.f32 %v936, %v947
    %v949 = vtanh.pop %v948
    %950 = vrot.lane.b32.xlu0 %v949, 64
    %v951 = vpop.permute.xlu0 %950
    %v952 = vsub.f32 1.0, %v943
    %v953 = vmul.f32 %v952, %v951
    %v954 = vmul.f32 %v943, %v864
    %v955 = vadd.f32 %v953, %v954
    %956 = vst [vmem:[#allocation3 + $0x28] sm:$0xff] %v955
    %957 = vmatprep.subr.mxu0 0.0
    %958 = vmatpush1.msra.mxu0 %v228
    %959 = vmatprep.subr.mxu0 0.0
    %960 = vmatpush1.msra.mxu0 %v229
    %961 = vmatprep.subr.mxu0 0.0
    %962 = vmatpush1.msra.mxu0 %v230
    %963 = vmatprep.subr.mxu0 0.0
    %964 = vmatpush1.msra.mxu0 %v231
    %965 = vmatprep.subr.mxu0 0.0
    %966 = vmatpush1.msra.mxu0 %v232
    %967 = vmatprep.subr.mxu0 0.0
    %968 = vmatpush1.msra.mxu0 %v233
    %969 = vmatprep.subr.mxu0 0.0
    %970 = vmatpush1.msra.mxu0 %v234
    %971 = vmatprep.subr.mxu0 0.0
    %972 = vmatpush1.msra.mxu0 %v235
    %973 = vmatprep.subr.mxu0 0.0
    %974 = vmatpush1.msra.mxu0 %v236
    %975 = vmatprep.subr.mxu0 0.0
    %976 = vmatpush1.msra.mxu0 %v237
    %977 = vmatprep.subr.mxu0 0.0
    %978 = vmatpush1.msra.mxu0 %v238
    %979 = vmatprep.subr.mxu0 0.0
    %980 = vmatpush1.msra.mxu0 %v239
    %981 = vmatprep.subr.mxu0 0.0
    %982 = vmatpush1.msra.mxu0 %v240
    %983 = vmatprep.subr.mxu0 0.0
    %984 = vmatpush1.msra.mxu0 %v241
    %985 = vmatprep.subr.mxu0 0.0
    %986 = vmatpush1.msra.mxu0 %v242
    %987 = vmatprep.subr.mxu0 0.0
    %988 = vmatpush1.msra.mxu0 %v243
    %989 = vmatprep.subr.mxu0 0.0
    %990 = vmatpush1.msra.mxu0 0.0
    %991 = vmatprep.subr.mxu0 0.0
    %992 = vmatpush1.msra.mxu0 0.0
    %993 = vmatprep.subr.mxu0 0.0
    %994 = vmatpush1.msra.mxu0 0.0
    %995 = vmatprep.subr.mxu0 0.0
    %996 = vmatpush1.msra.mxu0 0.0
    %997 = vmatprep.subr.mxu0 0.0
    %998 = vmatpush1.msra.mxu0 0.0
    %999 = vmatprep.subr.mxu0 0.0
    %1000 = vmatpush1.msra.mxu0 0.0
    %1001 = vmatprep.subr.mxu0 0.0
    %1002 = vmatpush1.msra.mxu0 0.0
    %1003 = vmatprep.subr.mxu0 0.0
    %1004 = vmatpush1.msra.mxu0 0.0
    %1005 = vmatprep.subr.mxu0 0.0
    %1006 = vmatpush1.msra.mxu0 0.0
    %1007 = vmatprep.subr.mxu0 0.0
    %1008 = vmatpush1.msra.mxu0 0.0
    %1009 = vmatprep.subr.mxu0 0.0
    %1010 = vmatpush1.msra.mxu0 0.0
    %1011 = vmatprep.subr.mxu0 0.0
    %1012 = vmatpush1.msra.mxu0 0.0
    %1013 = vmatprep.subr.mxu0 0.0
    %1014 = vmatpush1.msra.mxu0 0.0
    %1015 = vmatprep.subr.mxu0 0.0
    %1016 = vmatpush1.msra.mxu0 0.0
    %1017 = vmatprep.subr.mxu0 0.0
    %1018 = vmatpush1.msra.mxu0 0.0
    %1019 = vmatprep.subr.mxu0 0.0
    %1020 = vmatpush1.msra.mxu0 0.0
    %1021 = vmatprep.mubr.f32.mxu0 0.0
    %1022 = vmatmul.mubr.f32.gmra.mrb[0].mxu0 %v955
    %v1023 = vpop.f32.mrb[0].mxu0
    %v1024 = vadd.f32 0.0, %v1023
    %v1025 = vpop.f32.mrb[0].mxu0
    %1026 = vdwg.mxu0
    %v1027 = vld [vmem:[#allocation2 + $0x30] sm:$0xff]
    %v1028 = vadd.f32 %v1027, %v1024
    %v1029 = vxor.u32 %v1028, 2147483648
    %v1030 = vmul.f32 %v1029, 1.442695
    %v1031 = vpow.pop %v1030
    %v1032 = vadd.f32 %v1031, 1.0
    %v1033 = vrcp.pop %v1032
    %v1034 = vmul.f32 1.0, %v1033
    %1035 = vrot.lane.b32.xlu0 %v1034, 32
    %v1036 = vpop.permute.xlu0 %1035
    %v1037 = vadd.f32 %v1024, %v489
    %v1038 = vmul.f32 %v1036, %v1037
    %v1039 = vadd.f32 %v1027, %v1038
    %v1040 = vtanh.pop %v1039
    %1041 = vrot.lane.b32.xlu0 %v1040, 64
    %v1042 = vpop.permute.xlu0 %1041
    %v1043 = vsub.f32 1.0, %v1034
    %v1044 = vmul.f32 %v1043, %v1042
    %v1045 = vmul.f32 %v1034, %v955
    %v1046 = vadd.f32 %v1044, %v1045
    %1047 = vst [vmem:[#allocation3 + $0x30] sm:$0xff] %v1046
    %1048 = vmatprep.subr.mxu0 0.0
    %1049 = vmatpush1.msra.mxu0 %v228
    %1050 = vmatprep.subr.mxu0 0.0
    %1051 = vmatpush1.msra.mxu0 %v229
    %1052 = vmatprep.subr.mxu0 0.0
    %1053 = vmatpush1.msra.mxu0 %v230
    %1054 = vmatprep.subr.mxu0 0.0
    %1055 = vmatpush1.msra.mxu0 %v231
    %1056 = vmatprep.subr.mxu0 0.0
    %1057 = vmatpush1.msra.mxu0 %v232
    %1058 = vmatprep.subr.mxu0 0.0
    %1059 = vmatpush1.msra.mxu0 %v233
    %1060 = vmatprep.subr.mxu0 0.0
    %1061 = vmatpush1.msra.mxu0 %v234
    %1062 = vmatprep.subr.mxu0 0.0
    %1063 = vmatpush1.msra.mxu0 %v235
    %1064 = vmatprep.subr.mxu0 0.0
    %1065 = vmatpush1.msra.mxu0 %v236
    %1066 = vmatprep.subr.mxu0 0.0
    %1067 = vmatpush1.msra.mxu0 %v237
    %1068 = vmatprep.subr.mxu0 0.0
    %1069 = vmatpush1.msra.mxu0 %v238
    %1070 = vmatprep.subr.mxu0 0.0
    %1071 = vmatpush1.msra.mxu0 %v239
    %1072 = vmatprep.subr.mxu0 0.0
    %1073 = vmatpush1.msra.mxu0 %v240
    %1074 = vmatprep.subr.mxu0 0.0
    %1075 = vmatpush1.msra.mxu0 %v241
    %1076 = vmatprep.subr.mxu0 0.0
    %1077 = vmatpush1.msra.mxu0 %v242
    %1078 = vmatprep.subr.mxu0 0.0
    %1079 = vmatpush1.msra.mxu0 %v243
    %1080 = vmatprep.subr.mxu0 0.0
    %1081 = vmatpush1.msra.mxu0 0.0
    %1082 = vmatprep.subr.mxu0 0.0
    %1083 = vmatpush1.msra.mxu0 0.0
    %1084 = vmatprep.subr.mxu0 0.0
    %1085 = vmatpush1.msra.mxu0 0.0
    %1086 = vmatprep.subr.mxu0 0.0
    %1087 = vmatpush1.msra.mxu0 0.0
    %1088 = vmatprep.subr.mxu0 0.0
    %1089 = vmatpush1.msra.mxu0 0.0
    %1090 = vmatprep.subr.mxu0 0.0
    %1091 = vmatpush1.msra.mxu0 0.0
    %1092 = vmatprep.subr.mxu0 0.0
    %1093 = vmatpush1.msra.mxu0 0.0
    %1094 = vmatprep.subr.mxu0 0.0
    %1095 = vmatpush1.msra.mxu0 0.0
    %1096 = vmatprep.subr.mxu0 0.0
    %1097 = vmatpush1.msra.mxu0 0.0
    %1098 = vmatprep.subr.mxu0 0.0
    %1099 = vmatpush1.msra.mxu0 0.0
    %1100 = vmatprep.subr.mxu0 0.0
    %1101 = vmatpush1.msra.mxu0 0.0
    %1102 = vmatprep.subr.mxu0 0.0
    %1103 = vmatpush1.msra.mxu0 0.0
    %1104 = vmatprep.subr.mxu0 0.0
    %1105 = vmatpush1.msra.mxu0 0.0
    %1106 = vmatprep.subr.mxu0 0.0
    %1107 = vmatpush1.msra.mxu0 0.0
    %1108 = vmatprep.subr.mxu0 0.0
    %1109 = vmatpush1.msra.mxu0 0.0
    %1110 = vmatprep.subr.mxu0 0.0
    %1111 = vmatpush1.msra.mxu0 0.0
    %1112 = vmatprep.mubr.f32.mxu0 0.0
    %1113 = vmatmul.mubr.f32.gmra.mrb[0].mxu0 %v1046
    %v1114 = vpop.f32.mrb[0].mxu0
    %v1115 = vadd.f32 0.0, %v1114
    %v1116 = vpop.f32.mrb[0].mxu0
    %1117 = vdwg.mxu0
    %v1118 = vld [vmem:[#allocation2 + $0x38] sm:$0xff]
    %v1119 = vadd.f32 %v1118, %v1115
    %v1120 = vxor.u32 %v1119, 2147483648
    %v1121 = vmul.f32 %v1120, 1.442695
    %v1122 = vpow.pop %v1121
    %v1123 = vadd.f32 %v1122, 1.0
    %v1124 = vrcp.pop %v1123
    %v1125 = vmul.f32 1.0, %v1124
    %1126 = vrot.lane.b32.xlu0 %v1125, 32
    %v1127 = vpop.permute.xlu0 %1126
    %v1128 = vadd.f32 %v1115, %v489
    %v1129 = vmul.f32 %v1127, %v1128
    %v1130 = vadd.f32 %v1118, %v1129
    %v1131 = vtanh.pop %v1130
    %1132 = vrot.lane.b32.xlu0 %v1131, 64
    %v1133 = vpop.permute.xlu0 %1132
    %v1134 = vsub.f32 1.0, %v1125
    %v1135 = vmul.f32 %v1134, %v1133
    %v1136 = vmul.f32 %v1125, %v1046
    %v1137 = vadd.f32 %v1135, %v1136
    %1138 = vst [vmem:[#allocation3 + $0x38] sm:$0xff] %v1137
    %v1139 = vld [vmem:[#allocation17] sm:$0xf]
    %v1140 = vld [vmem:[#allocation17 + $0x4] sm:$0xf]
    %v1141 = vld [vmem:[#allocation17 + $0x8] sm:$0xf]
    %v1142 = vld [vmem:[#allocation17 + $0xc] sm:$0xf]
    %v1143 = vld [vmem:[#allocation17 + $0x10] sm:$0xf]
    %v1144 = vld [vmem:[#allocation17 + $0x14] sm:$0xf]
    %v1145 = vld [vmem:[#allocation17 + $0x18] sm:$0xf]
    %v1146 = vld [vmem:[#allocation17 + $0x1c] sm:$0xf]
    %v1147 = vld [vmem:[#allocation17 + $0x20] sm:$0xf]
    %v1148 = vld [vmem:[#allocation17 + $0x24] sm:$0xf]
    %v1149 = vld [vmem:[#allocation17 + $0x28] sm:$0xf]
    %v1150 = vld [vmem:[#allocation17 + $0x2c] sm:$0xf]
    %v1151 = vld [vmem:[#allocation17 + $0x30] sm:$0xf]
    %v1152 = vld [vmem:[#allocation17 + $0x34] sm:$0xf]
    %v1153 = vld [vmem:[#allocation17 + $0x38] sm:$0xf]
    %v1154 = vld [vmem:[#allocation17 + $0x3c] sm:$0xf]
    %v1155 = vunpack.c.l.bf16 %v1139
    %v1156 = vunpack.c.l.bf16 %v1140
    %v1157 = vunpack.c.l.bf16 %v1141
    %v1158 = vunpack.c.l.bf16 %v1142
    %v1159 = vunpack.c.l.bf16 %v1143
    %v1160 = vunpack.c.l.bf16 %v1144
    %v1161 = vunpack.c.l.bf16 %v1145
    %v1162 = vunpack.c.l.bf16 %v1146
    %v1163 = vunpack.c.l.bf16 %v1147
    %v1164 = vunpack.c.l.bf16 %v1148
    %v1165 = vunpack.c.l.bf16 %v1149
    %v1166 = vunpack.c.l.bf16 %v1150
    %v1167 = vunpack.c.l.bf16 %v1151
    %v1168 = vunpack.c.l.bf16 %v1152
    %v1169 = vunpack.c.l.bf16 %v1153
    %v1170 = vunpack.c.l.bf16 %v1154
    %v1171 = vld [vmem:[%s8] sm:$0x1]
    %v1172 = vld [vmem:[#allocation3] sm:$0xff]
    %v1173 = vld [vmem:[#allocation3 + $0x8] sm:$0xff]
    %v1174 = vld [vmem:[#allocation3 + $0x10] sm:$0xff]
    %v1175 = vld [vmem:[#allocation3 + $0x18] sm:$0xff]
    %v1176 = vld [vmem:[#allocation3 + $0x20] sm:$0xff]
    %v1177 = vld [vmem:[#allocation3 + $0x28] sm:$0xff]
    %v1178 = vld [vmem:[#allocation3 + $0x30] sm:$0xff]
    %v1179 = vld [vmem:[#allocation3 + $0x38] sm:$0xff]
    %v1180 = vld [vmem:[#allocation15] sm:$0xf]
    %v1181 = vld [vmem:[#allocation15 + $0x4] sm:$0xf]
    %v1182 = vld [vmem:[#allocation15 + $0x8] sm:$0xf]
    %v1183 = vld [vmem:[#allocation15 + $0xc] sm:$0xf]
    %v1184 = vld [vmem:[#allocation15 + $0x10] sm:$0xf]
    %v1185 = vld [vmem:[#allocation15 + $0x14] sm:$0xf]
    %v1186 = vld [vmem:[#allocation15 + $0x18] sm:$0xf]
    %v1187 = vld [vmem:[#allocation15 + $0x1c] sm:$0xf]
    %v1188 = vld [vmem:[#allocation15 + $0x20] sm:$0xf]
    %v1189 = vld [vmem:[#allocation15 + $0x24] sm:$0xf]
    %v1190 = vld [vmem:[#allocation15 + $0x28] sm:$0xf]
    %v1191 = vld [vmem:[#allocation15 + $0x2c] sm:$0xf]
    %v1192 = vld [vmem:[#allocation15 + $0x30] sm:$0xf]
    %v1193 = vld [vmem:[#allocation15 + $0x34] sm:$0xf]
    %v1194 = vld [vmem:[#allocation15 + $0x38] sm:$0xf]
    %v1195 = vld [vmem:[#allocation15 + $0x3c] sm:$0xf]
    %v1196 = vunpack.c.l.bf16 %v1180
    %v1197 = vunpack.c.l.bf16 %v1181
    %v1198 = vunpack.c.l.bf16 %v1182
    %v1199 = vunpack.c.l.bf16 %v1183
    %v1200 = vunpack.c.l.bf16 %v1184
    %v1201 = vunpack.c.l.bf16 %v1185
    %v1202 = vunpack.c.l.bf16 %v1186
    %v1203 = vunpack.c.l.bf16 %v1187
    %v1204 = vunpack.c.l.bf16 %v1188
    %v1205 = vunpack.c.l.bf16 %v1189
    %v1206 = vunpack.c.l.bf16 %v1190
    %v1207 = vunpack.c.l.bf16 %v1191
    %v1208 = vunpack.c.l.bf16 %v1192
    %v1209 = vunpack.c.l.bf16 %v1193
    %v1210 = vunpack.c.l.bf16 %v1194
    %v1211 = vunpack.c.l.bf16 %v1195
    %v1212 = vld [vmem:[%s7] sm:$0x1]
    %v1214 = vlaneseq
    %v1215 = vshrl.u32 %v1214, 7
    %v1216 = vsub.s32 0, %v1215
    %v1217 = vrot.slane %v1212, %v1216
    %1219 = vmatprep.subr.mxu0 0.0
    %1220 = vmatpush1.msra.mxu0 %v1196
    %1221 = vmatprep.subr.mxu0 0.0
    %1222 = vmatpush1.msra.mxu0 %v1197
    %1223 = vmatprep.subr.mxu0 0.0
    %1224 = vmatpush1.msra.mxu0 %v1198
    %1225 = vmatprep.subr.mxu0 0.0
    %1226 = vmatpush1.msra.mxu0 %v1199
    %1227 = vmatprep.subr.mxu0 0.0
    %1228 = vmatpush1.msra.mxu0 %v1200
    %1229 = vmatprep.subr.mxu0 0.0
    %1230 = vmatpush1.msra.mxu0 %v1201
    %1231 = vmatprep.subr.mxu0 0.0
    %1232 = vmatpush1.msra.mxu0 %v1202
    %1233 = vmatprep.subr.mxu0 0.0
    %1234 = vmatpush1.msra.mxu0 %v1203
    %1235 = vmatprep.subr.mxu0 0.0
    %1236 = vmatpush1.msra.mxu0 %v1204
    %1237 = vmatprep.subr.mxu0 0.0
    %1238 = vmatpush1.msra.mxu0 %v1205
    %1239 = vmatprep.subr.mxu0 0.0
    %1240 = vmatpush1.msra.mxu0 %v1206
    %1241 = vmatprep.subr.mxu0 0.0
    %1242 = vmatpush1.msra.mxu0 %v1207
    %1243 = vmatprep.subr.mxu0 0.0
    %1244 = vmatpush1.msra.mxu0 %v1208
    %1245 = vmatprep.subr.mxu0 0.0
    %1246 = vmatpush1.msra.mxu0 %v1209
    %1247 = vmatprep.subr.mxu0 0.0
    %1248 = vmatpush1.msra.mxu0 %v1210
    %1249 = vmatprep.subr.mxu0 0.0
    %1250 = vmatpush1.msra.mxu0 %v1211
    %1251 = vmatprep.subr.mxu0 0.0
    %1252 = vmatpush1.msra.mxu0 0.0
    %1253 = vmatprep.subr.mxu0 0.0
    %1254 = vmatpush1.msra.mxu0 0.0
    %1255 = vmatprep.subr.mxu0 0.0
    %1256 = vmatpush1.msra.mxu0 0.0
    %1257 = vmatprep.subr.mxu0 0.0
    %1258 = vmatpush1.msra.mxu0 0.0
    %1259 = vmatprep.subr.mxu0 0.0
    %1260 = vmatpush1.msra.mxu0 0.0
    %1261 = vmatprep.subr.mxu0 0.0
    %1262 = vmatpush1.msra.mxu0 0.0
    %1263 = vmatprep.subr.mxu0 0.0
    %1264 = vmatpush1.msra.mxu0 0.0
    %1265 = vmatprep.subr.mxu0 0.0
    %1266 = vmatpush1.msra.mxu0 0.0
    %1267 = vmatprep.subr.mxu0 0.0
    %1268 = vmatpush1.msra.mxu0 0.0
    %1269 = vmatprep.subr.mxu0 0.0
    %1270 = vmatpush1.msra.mxu0 0.0
    %1271 = vmatprep.subr.mxu0 0.0
    %1272 = vmatpush1.msra.mxu0 0.0
    %1273 = vmatprep.subr.mxu0 0.0
    %1274 = vmatpush1.msra.mxu0 0.0
    %1275 = vmatprep.subr.mxu0 0.0
    %1276 = vmatpush1.msra.mxu0 0.0
    %1277 = vmatprep.subr.mxu0 0.0
    %1278 = vmatpush1.msra.mxu0 0.0
    %1279 = vmatprep.subr.mxu0 0.0
    %1280 = vmatpush1.msra.mxu0 0.0
    %1281 = vmatprep.subr.mxu0 0.0
    %1282 = vmatpush1.msra.mxu0 0.0
    %1283 = vmatprep.mubr.f32.mxu0 0.0
    %1284 = vmatmul.mubr.f32.gmra.mrb[0].mxu0 %v1172
    %v1285 = vpop.f32.mrb[0].mxu0
    %v1286 = vadd.f32 %v1217, %v1285
    %v1287 = vpop.f32.mrb[0].mxu0
    %1288 = vmatprep.mubr.f32.mxu0 0.0
    %1289 = vmatmul.mubr.f32.gmra.mrb[0].mxu0 %v1173
    %v1290 = vpop.f32.mrb[0].mxu0
    %v1291 = vadd.f32 %v1217, %v1290
    %v1292 = vpop.f32.mrb[0].mxu0
    %1293 = vmatprep.mubr.f32.mxu0 0.0
    %1294 = vmatmul.mubr.f32.gmra.mrb[0].mxu0 %v1174
    %v1295 = vpop.f32.mrb[0].mxu0
    %v1296 = vadd.f32 %v1217, %v1295
    %v1297 = vpop.f32.mrb[0].mxu0
    %1298 = vmatprep.mubr.f32.mxu0 0.0
    %1299 = vmatmul.mubr.f32.gmra.mrb[0].mxu0 %v1175
    %v1300 = vpop.f32.mrb[0].mxu0
    %v1301 = vadd.f32 %v1217, %v1300
    %v1302 = vpop.f32.mrb[0].mxu0
    %1303 = vmatprep.mubr.f32.mxu0 0.0
    %1304 = vmatmul.mubr.f32.gmra.mrb[0].mxu0 %v1176
    %v1305 = vpop.f32.mrb[0].mxu0
    %v1306 = vadd.f32 %v1217, %v1305
    %v1307 = vpop.f32.mrb[0].mxu0
    %1308 = vmatprep.mubr.f32.mxu0 0.0
    %1309 = vmatmul.mubr.f32.gmra.mrb[0].mxu0 %v1177
    %v1310 = vpop.f32.mrb[0].mxu0
    %v1311 = vadd.f32 %v1217, %v1310
    %v1312 = vpop.f32.mrb[0].mxu0
    %1313 = vmatprep.mubr.f32.mxu0 0.0
    %1314 = vmatmul.mubr.f32.gmra.mrb[0].mxu0 %v1178
    %v1315 = vpop.f32.mrb[0].mxu0
    %v1316 = vadd.f32 %v1217, %v1315
    %v1317 = vpop.f32.mrb[0].mxu0
    %1318 = vmatprep.mubr.f32.mxu0 0.0
    %1319 = vmatmul.mubr.f32.gmra.mrb[0].mxu0 %v1179
    %v1320 = vpop.f32.mrb[0].mxu0
    %v1321 = vadd.f32 %v1217, %v1320
    %v1322 = vpop.f32.mrb[0].mxu0
    %1323 = vdwg.mxu0
    %1324 = vst [vmem:[#allocation2] sm:$0xff] %v1286
    %1325 = vst [vmem:[#allocation2 + $0x8] sm:$0xff] %v1291
    %1326 = vst [vmem:[#allocation2 + $0x10] sm:$0xff] %v1296
    %1327 = vst [vmem:[#allocation2 + $0x18] sm:$0xff] %v1301
    %1328 = vst [vmem:[#allocation2 + $0x20] sm:$0xff] %v1306
    %1329 = vst [vmem:[#allocation2 + $0x28] sm:$0xff] %v1311
    %1330 = vst [vmem:[#allocation2 + $0x30] sm:$0xff] %v1316
    %1331 = vst [vmem:[#allocation2 + $0x38] sm:$0xff] %v1321
    %1332 = vmatprep.subr.mxu0 0.0
    %1333 = vmatpush1.msra.mxu0 %v1155
    %1334 = vmatprep.subr.mxu0 0.0
    %1335 = vmatpush1.msra.mxu0 %v1156
    %1336 = vmatprep.subr.mxu0 0.0
    %1337 = vmatpush1.msra.mxu0 %v1157
    %1338 = vmatprep.subr.mxu0 0.0
    %1339 = vmatpush1.msra.mxu0 %v1158
    %1340 = vmatprep.subr.mxu0 0.0
    %1341 = vmatpush1.msra.mxu0 %v1159
    %1342 = vmatprep.subr.mxu0 0.0
    %1343 = vmatpush1.msra.mxu0 %v1160
    %1344 = vmatprep.subr.mxu0 0.0
    %1345 = vmatpush1.msra.mxu0 %v1161
    %1346 = vmatprep.subr.mxu0 0.0
    %1347 = vmatpush1.msra.mxu0 %v1162
    %1348 = vmatprep.subr.mxu0 0.0
    %1349 = vmatpush1.msra.mxu0 %v1163
    %1350 = vmatprep.subr.mxu0 0.0
    %1351 = vmatpush1.msra.mxu0 %v1164
    %1352 = vmatprep.subr.mxu0 0.0
    %1353 = vmatpush1.msra.mxu0 %v1165
    %1354 = vmatprep.subr.mxu0 0.0
    %1355 = vmatpush1.msra.mxu0 %v1166
    %1356 = vmatprep.subr.mxu0 0.0
    %1357 = vmatpush1.msra.mxu0 %v1167
    %1358 = vmatprep.subr.mxu0 0.0
    %1359 = vmatpush1.msra.mxu0 %v1168
    %1360 = vmatprep.subr.mxu0 0.0
    %1361 = vmatpush1.msra.mxu0 %v1169
    %1362 = vmatprep.subr.mxu0 0.0
    %1363 = vmatpush1.msra.mxu0 %v1170
    %1364 = vmatprep.subr.mxu0 0.0
    %1365 = vmatpush1.msra.mxu0 0.0
    %1366 = vmatprep.subr.mxu0 0.0
    %1367 = vmatpush1.msra.mxu0 0.0
    %1368 = vmatprep.subr.mxu0 0.0
    %1369 = vmatpush1.msra.mxu0 0.0
    %1370 = vmatprep.subr.mxu0 0.0
    %1371 = vmatpush1.msra.mxu0 0.0
    %1372 = vmatprep.subr.mxu0 0.0
    %1373 = vmatpush1.msra.mxu0 0.0
    %1374 = vmatprep.subr.mxu0 0.0
    %1375 = vmatpush1.msra.mxu0 0.0
    %1376 = vmatprep.subr.mxu0 0.0
    %1377 = vmatpush1.msra.mxu0 0.0
    %1378 = vmatprep.subr.mxu0 0.0
    %1379 = vmatpush1.msra.mxu0 0.0
    %1380 = vmatprep.subr.mxu0 0.0
    %1381 = vmatpush1.msra.mxu0 0.0
    %1382 = vmatprep.subr.mxu0 0.0
    %1383 = vmatpush1.msra.mxu0 0.0
    %1384 = vmatprep.subr.mxu0 0.0
    %1385 = vmatpush1.msra.mxu0 0.0
    %1386 = vmatprep.subr.mxu0 0.0
    %1387 = vmatpush1.msra.mxu0 0.0
    %1388 = vmatprep.subr.mxu0 0.0
    %1389 = vmatpush1.msra.mxu0 0.0
    %1390 = vmatprep.subr.mxu0 0.0
    %1391 = vmatpush1.msra.mxu0 0.0
    %1392 = vmatprep.subr.mxu0 0.0
    %1393 = vmatpush1.msra.mxu0 0.0
    %1394 = vmatprep.subr.mxu0 0.0
    %1395 = vmatpush1.msra.mxu0 0.0
    %1396 = vmatprep.mubr.f32.mxu0 0.0
    %1397 = vmatmul.mubr.f32.gmra.mrb[0].mxu0 0.0
    %v1398 = vpop.f32.mrb[0].mxu0
    %v1399 = vadd.f32 0.0, %v1398
    %v1400 = vpop.f32.mrb[0].mxu0
    %1401 = vdwg.mxu0
    %v1402 = vld [vmem:[#allocation2] sm:$0xff]
    %v1403 = vadd.f32 %v1402, %v1399
    %v1404 = vxor.u32 %v1403, 2147483648
    %v1405 = vmul.f32 %v1404, 1.442695
    %v1406 = vpow.pop %v1405
    %v1407 = vadd.f32 %v1406, 1.0
    %v1408 = vrcp.pop %v1407
    %v1409 = vmul.f32 1.0, %v1408
    %1410 = vrot.lane.b32.xlu0 %v1409, 32
    %v1411 = vpop.permute.xlu0 %1410
    %v1413 = vlaneseq
    %v1414 = vshrl.u32 %v1413, 7
    %v1415 = vsub.s32 0, %v1414
    %v1416 = vrot.slane %v1171, %v1415
    %v1418 = vadd.f32 %v1399, %v1416
    %v1419 = vmul.f32 %v1411, %v1418
    %v1420 = vadd.f32 %v1402, %v1419
    %v1421 = vtanh.pop %v1420
    %1422 = vrot.lane.b32.xlu0 %v1421, 64
    %v1423 = vpop.permute.xlu0 %1422
    %v1424 = vsub.f32 1.0, %v1409
    %v1425 = vmul.f32 %v1424, %v1423
    %v1426 = vmul.f32 %v1409, 0.0
    %v1427 = vadd.f32 %v1425, %v1426
    %1428 = vmatprep.subr.mxu0 0.0
    %1429 = vmatpush1.msra.mxu0 %v1155
    %1430 = vmatprep.subr.mxu0 0.0
    %1431 = vmatpush1.msra.mxu0 %v1156
    %1432 = vmatprep.subr.mxu0 0.0
    %1433 = vmatpush1.msra.mxu0 %v1157
    %1434 = vmatprep.subr.mxu0 0.0
    %1435 = vmatpush1.msra.mxu0 %v1158
    %1436 = vmatprep.subr.mxu0 0.0
    %1437 = vmatpush1.msra.mxu0 %v1159
    %1438 = vmatprep.subr.mxu0 0.0
    %1439 = vmatpush1.msra.mxu0 %v1160
    %1440 = vmatprep.subr.mxu0 0.0
    %1441 = vmatpush1.msra.mxu0 %v1161
    %1442 = vmatprep.subr.mxu0 0.0
    %1443 = vmatpush1.msra.mxu0 %v1162
    %1444 = vmatprep.subr.mxu0 0.0
    %1445 = vmatpush1.msra.mxu0 %v1163
    %1446 = vmatprep.subr.mxu0 0.0
    %1447 = vmatpush1.msra.mxu0 %v1164
    %1448 = vmatprep.subr.mxu0 0.0
    %1449 = vmatpush1.msra.mxu0 %v1165
    %1450 = vmatprep.subr.mxu0 0.0
    %1451 = vmatpush1.msra.mxu0 %v1166
    %1452 = vmatprep.subr.mxu0 0.0
    %1453 = vmatpush1.msra.mxu0 %v1167
    %1454 = vmatprep.subr.mxu0 0.0
    %1455 = vmatpush1.msra.mxu0 %v1168
    %1456 = vmatprep.subr.mxu0 0.0
    %1457 = vmatpush1.msra.mxu0 %v1169
    %1458 = vmatprep.subr.mxu0 0.0
    %1459 = vmatpush1.msra.mxu0 %v1170
    %1460 = vmatprep.subr.mxu0 0.0
    %1461 = vmatpush1.msra.mxu0 0.0
    %1462 = vmatprep.subr.mxu0 0.0
    %1463 = vmatpush1.msra.mxu0 0.0
    %1464 = vmatprep.subr.mxu0 0.0
    %1465 = vmatpush1.msra.mxu0 0.0
    %1466 = vmatprep.subr.mxu0 0.0
    %1467 = vmatpush1.msra.mxu0 0.0
    %1468 = vmatprep.subr.mxu0 0.0
    %1469 = vmatpush1.msra.mxu0 0.0
    %1470 = vmatprep.subr.mxu0 0.0
    %1471 = vmatpush1.msra.mxu0 0.0
    %1472 = vmatprep.subr.mxu0 0.0
    %1473 = vmatpush1.msra.mxu0 0.0
    %1474 = vmatprep.subr.mxu0 0.0
    %1475 = vmatpush1.msra.mxu0 0.0
    %1476 = vmatprep.subr.mxu0 0.0
    %1477 = vmatpush1.msra.mxu0 0.0
    %1478 = vmatprep.subr.mxu0 0.0
    %1479 = vmatpush1.msra.mxu0 0.0
    %1480 = vmatprep.subr.mxu0 0.0
    %1481 = vmatpush1.msra.mxu0 0.0
    %1482 = vmatprep.subr.mxu0 0.0
    %1483 = vmatpush1.msra.mxu0 0.0
    %1484 = vmatprep.subr.mxu0 0.0
    %1485 = vmatpush1.msra.mxu0 0.0
    %1486 = vmatprep.subr.mxu0 0.0
    %1487 = vmatpush1.msra.mxu0 0.0
    %1488 = vmatprep.subr.mxu0 0.0
    %1489 = vmatpush1.msra.mxu0 0.0
    %1490 = vmatprep.subr.mxu0 0.0
    %1491 = vmatpush1.msra.mxu0 0.0
    %1492 = vmatprep.mubr.f32.mxu0 0.0
    %1493 = vmatmul.mubr.f32.gmra.mrb[0].mxu0 %v1427
    %v1494 = vpop.f32.mrb[0].mxu0
    %v1495 = vadd.f32 0.0, %v1494
    %v1496 = vpop.f32.mrb[0].mxu0
    %1497 = vdwg.mxu0
    %v1498 = vld [vmem:[#allocation2 + $0x8] sm:$0xff]
    %v1499 = vadd.f32 %v1498, %v1495
    %v1500 = vxor.u32 %v1499, 2147483648
    %v1501 = vmul.f32 %v1500, 1.442695
    %v1502 = vpow.pop %v1501
    %v1503 = vadd.f32 %v1502, 1.0
    %v1504 = vrcp.pop %v1503
    %v1505 = vmul.f32 1.0, %v1504
    %1506 = vrot.lane.b32.xlu0 %v1505, 32
    %v1507 = vpop.permute.xlu0 %1506
    %v1508 = vadd.f32 %v1495, %v1416
    %v1509 = vmul.f32 %v1507, %v1508
    %v1510 = vadd.f32 %v1498, %v1509
    %v1511 = vtanh.pop %v1510
    %1512 = vrot.lane.b32.xlu0 %v1511, 64
    %v1513 = vpop.permute.xlu0 %1512
    %v1514 = vsub.f32 1.0, %v1505
    %v1515 = vmul.f32 %v1514, %v1513
    %v1516 = vmul.f32 %v1505, %v1427
    %v1517 = vadd.f32 %v1515, %v1516
    %1518 = vmatprep.subr.mxu0 0.0
    %1519 = vmatpush1.msra.mxu0 %v1155
    %1520 = vmatprep.subr.mxu0 0.0
    %1521 = vmatpush1.msra.mxu0 %v1156
    %1522 = vmatprep.subr.mxu0 0.0
    %1523 = vmatpush1.msra.mxu0 %v1157
    %1524 = vmatprep.subr.mxu0 0.0
    %1525 = vmatpush1.msra.mxu0 %v1158
    %1526 = vmatprep.subr.mxu0 0.0
    %1527 = vmatpush1.msra.mxu0 %v1159
    %1528 = vmatprep.subr.mxu0 0.0
    %1529 = vmatpush1.msra.mxu0 %v1160
    %1530 = vmatprep.subr.mxu0 0.0
    %1531 = vmatpush1.msra.mxu0 %v1161
    %1532 = vmatprep.subr.mxu0 0.0
    %1533 = vmatpush1.msra.mxu0 %v1162
    %1534 = vmatprep.subr.mxu0 0.0
    %1535 = vmatpush1.msra.mxu0 %v1163
    %1536 = vmatprep.subr.mxu0 0.0
    %1537 = vmatpush1.msra.mxu0 %v1164
    %1538 = vmatprep.subr.mxu0 0.0
    %1539 = vmatpush1.msra.mxu0 %v1165
    %1540 = vmatprep.subr.mxu0 0.0
    %1541 = vmatpush1.msra.mxu0 %v1166
    %1542 = vmatprep.subr.mxu0 0.0
    %1543 = vmatpush1.msra.mxu0 %v1167
    %1544 = vmatprep.subr.mxu0 0.0
    %1545 = vmatpush1.msra.mxu0 %v1168
    %1546 = vmatprep.subr.mxu0 0.0
    %1547 = vmatpush1.msra.mxu0 %v1169
    %1548 = vmatprep.subr.mxu0 0.0
    %1549 = vmatpush1.msra.mxu0 %v1170
    %1550 = vmatprep.subr.mxu0 0.0
    %1551 = vmatpush1.msra.mxu0 0.0
    %1552 = vmatprep.subr.mxu0 0.0
    %1553 = vmatpush1.msra.mxu0 0.0
    %1554 = vmatprep.subr.mxu0 0.0
    %1555 = vmatpush1.msra.mxu0 0.0
    %1556 = vmatprep.subr.mxu0 0.0
    %1557 = vmatpush1.msra.mxu0 0.0
    %1558 = vmatprep.subr.mxu0 0.0
    %1559 = vmatpush1.msra.mxu0 0.0
    %1560 = vmatprep.subr.mxu0 0.0
    %1561 = vmatpush1.msra.mxu0 0.0
    %1562 = vmatprep.subr.mxu0 0.0
    %1563 = vmatpush1.msra.mxu0 0.0
    %1564 = vmatprep.subr.mxu0 0.0
    %1565 = vmatpush1.msra.mxu0 0.0
    %1566 = vmatprep.subr.mxu0 0.0
    %1567 = vmatpush1.msra.mxu0 0.0
    %1568 = vmatprep.subr.mxu0 0.0
    %1569 = vmatpush1.msra.mxu0 0.0
    %1570 = vmatprep.subr.mxu0 0.0
    %1571 = vmatpush1.msra.mxu0 0.0
    %1572 = vmatprep.subr.mxu0 0.0
    %1573 = vmatpush1.msra.mxu0 0.0
    %1574 = vmatprep.subr.mxu0 0.0
    %1575 = vmatpush1.msra.mxu0 0.0
    %1576 = vmatprep.subr.mxu0 0.0
    %1577 = vmatpush1.msra.mxu0 0.0
    %1578 = vmatprep.subr.mxu0 0.0
    %1579 = vmatpush1.msra.mxu0 0.0
    %1580 = vmatprep.subr.mxu0 0.0
    %1581 = vmatpush1.msra.mxu0 0.0
    %1582 = vmatprep.mubr.f32.mxu0 0.0
    %1583 = vmatmul.mubr.f32.gmra.mrb[0].mxu0 %v1517
    %v1584 = vpop.f32.mrb[0].mxu0
    %v1585 = vadd.f32 0.0, %v1584
    %v1586 = vpop.f32.mrb[0].mxu0
    %1587 = vdwg.mxu0
    %v1588 = vld [vmem:[#allocation2 + $0x10] sm:$0xff]
    %v1589 = vadd.f32 %v1588, %v1585
    %v1590 = vxor.u32 %v1589, 2147483648
    %v1591 = vmul.f32 %v1590, 1.442695
    %v1592 = vpow.pop %v1591
    %v1593 = vadd.f32 %v1592, 1.0
    %v1594 = vrcp.pop %v1593
    %v1595 = vmul.f32 1.0, %v1594
    %1596 = vrot.lane.b32.xlu0 %v1595, 32
    %v1597 = vpop.permute.xlu0 %1596
    %v1598 = vadd.f32 %v1585, %v1416
    %v1599 = vmul.f32 %v1597, %v1598
    %v1600 = vadd.f32 %v1588, %v1599
    %v1601 = vtanh.pop %v1600
    %1602 = vrot.lane.b32.xlu0 %v1601, 64
    %v1603 = vpop.permute.xlu0 %1602
    %v1604 = vsub.f32 1.0, %v1595
    %v1605 = vmul.f32 %v1604, %v1603
    %v1606 = vmul.f32 %v1595, %v1517
    %v1607 = vadd.f32 %v1605, %v1606
    %1608 = vmatprep.subr.mxu0 0.0
    %1609 = vmatpush1.msra.mxu0 %v1155
    %1610 = vmatprep.subr.mxu0 0.0
    %1611 = vmatpush1.msra.mxu0 %v1156
    %1612 = vmatprep.subr.mxu0 0.0
    %1613 = vmatpush1.msra.mxu0 %v1157
    %1614 = vmatprep.subr.mxu0 0.0
    %1615 = vmatpush1.msra.mxu0 %v1158
    %1616 = vmatprep.subr.mxu0 0.0
    %1617 = vmatpush1.msra.mxu0 %v1159
    %1618 = vmatprep.subr.mxu0 0.0
    %1619 = vmatpush1.msra.mxu0 %v1160
    %1620 = vmatprep.subr.mxu0 0.0
    %1621 = vmatpush1.msra.mxu0 %v1161
    %1622 = vmatprep.subr.mxu0 0.0
    %1623 = vmatpush1.msra.mxu0 %v1162
    %1624 = vmatprep.subr.mxu0 0.0
    %1625 = vmatpush1.msra.mxu0 %v1163
    %1626 = vmatprep.subr.mxu0 0.0
    %1627 = vmatpush1.msra.mxu0 %v1164
    %1628 = vmatprep.subr.mxu0 0.0
    %1629 = vmatpush1.msra.mxu0 %v1165
    %1630 = vmatprep.subr.mxu0 0.0
    %1631 = vmatpush1.msra.mxu0 %v1166
    %1632 = vmatprep.subr.mxu0 0.0
    %1633 = vmatpush1.msra.mxu0 %v1167
    %1634 = vmatprep.subr.mxu0 0.0
    %1635 = vmatpush1.msra.mxu0 %v1168
    %1636 = vmatprep.subr.mxu0 0.0
    %1637 = vmatpush1.msra.mxu0 %v1169
    %1638 = vmatprep.subr.mxu0 0.0
    %1639 = vmatpush1.msra.mxu0 %v1170
    %1640 = vmatprep.subr.mxu0 0.0
    %1641 = vmatpush1.msra.mxu0 0.0
    %1642 = vmatprep.subr.mxu0 0.0
    %1643 = vmatpush1.msra.mxu0 0.0
    %1644 = vmatprep.subr.mxu0 0.0
    %1645 = vmatpush1.msra.mxu0 0.0
    %1646 = vmatprep.subr.mxu0 0.0
    %1647 = vmatpush1.msra.mxu0 0.0
    %1648 = vmatprep.subr.mxu0 0.0
    %1649 = vmatpush1.msra.mxu0 0.0
    %1650 = vmatprep.subr.mxu0 0.0
    %1651 = vmatpush1.msra.mxu0 0.0
    %1652 = vmatprep.subr.mxu0 0.0
    %1653 = vmatpush1.msra.mxu0 0.0
    %1654 = vmatprep.subr.mxu0 0.0
    %1655 = vmatpush1.msra.mxu0 0.0
    %1656 = vmatprep.subr.mxu0 0.0
    %1657 = vmatpush1.msra.mxu0 0.0
    %1658 = vmatprep.subr.mxu0 0.0
    %1659 = vmatpush1.msra.mxu0 0.0
    %1660 = vmatprep.subr.mxu0 0.0
    %1661 = vmatpush1.msra.mxu0 0.0
    %1662 = vmatprep.subr.mxu0 0.0
    %1663 = vmatpush1.msra.mxu0 0.0
    %1664 = vmatprep.subr.mxu0 0.0
    %1665 = vmatpush1.msra.mxu0 0.0
    %1666 = vmatprep.subr.mxu0 0.0
    %1667 = vmatpush1.msra.mxu0 0.0
    %1668 = vmatprep.subr.mxu0 0.0
    %1669 = vmatpush1.msra.mxu0 0.0
    %1670 = vmatprep.subr.mxu0 0.0
    %1671 = vmatpush1.msra.mxu0 0.0
    %1672 = vmatprep.mubr.f32.mxu0 0.0
    %1673 = vmatmul.mubr.f32.gmra.mrb[0].mxu0 %v1607
    %v1674 = vpop.f32.mrb[0].mxu0
    %v1675 = vadd.f32 0.0, %v1674
    %v1676 = vpop.f32.mrb[0].mxu0
    %1677 = vdwg.mxu0
    %v1678 = vld [vmem:[#allocation2 + $0x18] sm:$0xff]
    %v1679 = vadd.f32 %v1678, %v1675
    %v1680 = vxor.u32 %v1679, 2147483648
    %v1681 = vmul.f32 %v1680, 1.442695
    %v1682 = vpow.pop %v1681
    %v1683 = vadd.f32 %v1682, 1.0
    %v1684 = vrcp.pop %v1683
    %v1685 = vmul.f32 1.0, %v1684
    %1686 = vrot.lane.b32.xlu0 %v1685, 32
    %v1687 = vpop.permute.xlu0 %1686
    %v1688 = vadd.f32 %v1675, %v1416
    %v1689 = vmul.f32 %v1687, %v1688
    %v1690 = vadd.f32 %v1678, %v1689
    %v1691 = vtanh.pop %v1690
    %1692 = vrot.lane.b32.xlu0 %v1691, 64
    %v1693 = vpop.permute.xlu0 %1692
    %v1694 = vsub.f32 1.0, %v1685
    %v1695 = vmul.f32 %v1694, %v1693
    %v1696 = vmul.f32 %v1685, %v1607
    %v1697 = vadd.f32 %v1695, %v1696
    %1698 = vmatprep.subr.mxu0 0.0
    %1699 = vmatpush1.msra.mxu0 %v1155
    %1700 = vmatprep.subr.mxu0 0.0
    %1701 = vmatpush1.msra.mxu0 %v1156
    %1702 = vmatprep.subr.mxu0 0.0
    %1703 = vmatpush1.msra.mxu0 %v1157
    %1704 = vmatprep.subr.mxu0 0.0
    %1705 = vmatpush1.msra.mxu0 %v1158
    %1706 = vmatprep.subr.mxu0 0.0
    %1707 = vmatpush1.msra.mxu0 %v1159
    %1708 = vmatprep.subr.mxu0 0.0
    %1709 = vmatpush1.msra.mxu0 %v1160
    %1710 = vmatprep.subr.mxu0 0.0
    %1711 = vmatpush1.msra.mxu0 %v1161
    %1712 = vmatprep.subr.mxu0 0.0
    %1713 = vmatpush1.msra.mxu0 %v1162
    %1714 = vmatprep.subr.mxu0 0.0
    %1715 = vmatpush1.msra.mxu0 %v1163
    %1716 = vmatprep.subr.mxu0 0.0
    %1717 = vmatpush1.msra.mxu0 %v1164
    %1718 = vmatprep.subr.mxu0 0.0
    %1719 = vmatpush1.msra.mxu0 %v1165
    %1720 = vmatprep.subr.mxu0 0.0
    %1721 = vmatpush1.msra.mxu0 %v1166
    %1722 = vmatprep.subr.mxu0 0.0
    %1723 = vmatpush1.msra.mxu0 %v1167
    %1724 = vmatprep.subr.mxu0 0.0
    %1725 = vmatpush1.msra.mxu0 %v1168
    %1726 = vmatprep.subr.mxu0 0.0
    %1727 = vmatpush1.msra.mxu0 %v1169
    %1728 = vmatprep.subr.mxu0 0.0
    %1729 = vmatpush1.msra.mxu0 %v1170
    %1730 = vmatprep.subr.mxu0 0.0
    %1731 = vmatpush1.msra.mxu0 0.0
    %1732 = vmatprep.subr.mxu0 0.0
    %1733 = vmatpush1.msra.mxu0 0.0
    %1734 = vmatprep.subr.mxu0 0.0
    %1735 = vmatpush1.msra.mxu0 0.0
    %1736 = vmatprep.subr.mxu0 0.0
    %1737 = vmatpush1.msra.mxu0 0.0
    %1738 = vmatprep.subr.mxu0 0.0
    %1739 = vmatpush1.msra.mxu0 0.0
    %1740 = vmatprep.subr.mxu0 0.0
    %1741 = vmatpush1.msra.mxu0 0.0
    %1742 = vmatprep.subr.mxu0 0.0
    %1743 = vmatpush1.msra.mxu0 0.0
    %1744 = vmatprep.subr.mxu0 0.0
    %1745 = vmatpush1.msra.mxu0 0.0
    %1746 = vmatprep.subr.mxu0 0.0
    %1747 = vmatpush1.msra.mxu0 0.0
    %1748 = vmatprep.subr.mxu0 0.0
    %1749 = vmatpush1.msra.mxu0 0.0
    %1750 = vmatprep.subr.mxu0 0.0
    %1751 = vmatpush1.msra.mxu0 0.0
    %1752 = vmatprep.subr.mxu0 0.0
    %1753 = vmatpush1.msra.mxu0 0.0
    %1754 = vmatprep.subr.mxu0 0.0
    %1755 = vmatpush1.msra.mxu0 0.0
    %1756 = vmatprep.subr.mxu0 0.0
    %1757 = vmatpush1.msra.mxu0 0.0
    %1758 = vmatprep.subr.mxu0 0.0
    %1759 = vmatpush1.msra.mxu0 0.0
    %1760 = vmatprep.subr.mxu0 0.0
    %1761 = vmatpush1.msra.mxu0 0.0
    %1762 = vmatprep.mubr.f32.mxu0 0.0
    %1763 = vmatmul.mubr.f32.gmra.mrb[0].mxu0 %v1697
    %v1764 = vpop.f32.mrb[0].mxu0
    %v1765 = vadd.f32 0.0, %v1764
    %v1766 = vpop.f32.mrb[0].mxu0
    %1767 = vdwg.mxu0
    %v1768 = vld [vmem:[#allocation2 + $0x20] sm:$0xff]
    %v1769 = vadd.f32 %v1768, %v1765
    %v1770 = vxor.u32 %v1769, 2147483648
    %v1771 = vmul.f32 %v1770, 1.442695
    %v1772 = vpow.pop %v1771
    %v1773 = vadd.f32 %v1772, 1.0
    %v1774 = vrcp.pop %v1773
    %v1775 = vmul.f32 1.0, %v1774
    %1776 = vrot.lane.b32.xlu0 %v1775, 32
    %v1777 = vpop.permute.xlu0 %1776
    %v1778 = vadd.f32 %v1765, %v1416
    %v1779 = vmul.f32 %v1777, %v1778
    %v1780 = vadd.f32 %v1768, %v1779
    %v1781 = vtanh.pop %v1780
    %1782 = vrot.lane.b32.xlu0 %v1781, 64
    %v1783 = vpop.permute.xlu0 %1782
    %v1784 = vsub.f32 1.0, %v1775
    %v1785 = vmul.f32 %v1784, %v1783
    %v1786 = vmul.f32 %v1775, %v1697
    %v1787 = vadd.f32 %v1785, %v1786
    %1788 = vmatprep.subr.mxu0 0.0
    %1789 = vmatpush1.msra.mxu0 %v1155
    %1790 = vmatprep.subr.mxu0 0.0
    %1791 = vmatpush1.msra.mxu0 %v1156
    %1792 = vmatprep.subr.mxu0 0.0
    %1793 = vmatpush1.msra.mxu0 %v1157
    %1794 = vmatprep.subr.mxu0 0.0
    %1795 = vmatpush1.msra.mxu0 %v1158
    %1796 = vmatprep.subr.mxu0 0.0
    %1797 = vmatpush1.msra.mxu0 %v1159
    %1798 = vmatprep.subr.mxu0 0.0
    %1799 = vmatpush1.msra.mxu0 %v1160
    %1800 = vmatprep.subr.mxu0 0.0
    %1801 = vmatpush1.msra.mxu0 %v1161
    %1802 = vmatprep.subr.mxu0 0.0
    %1803 = vmatpush1.msra.mxu0 %v1162
    %1804 = vmatprep.subr.mxu0 0.0
    %1805 = vmatpush1.msra.mxu0 %v1163
    %1806 = vmatprep.subr.mxu0 0.0
    %1807 = vmatpush1.msra.mxu0 %v1164
    %1808 = vmatprep.subr.mxu0 0.0
    %1809 = vmatpush1.msra.mxu0 %v1165
    %1810 = vmatprep.subr.mxu0 0.0
    %1811 = vmatpush1.msra.mxu0 %v1166
    %1812 = vmatprep.subr.mxu0 0.0
    %1813 = vmatpush1.msra.mxu0 %v1167
    %1814 = vmatprep.subr.mxu0 0.0
    %1815 = vmatpush1.msra.mxu0 %v1168
    %1816 = vmatprep.subr.mxu0 0.0
    %1817 = vmatpush1.msra.mxu0 %v1169
    %1818 = vmatprep.subr.mxu0 0.0
    %1819 = vmatpush1.msra.mxu0 %v1170
    %1820 = vmatprep.subr.mxu0 0.0
    %1821 = vmatpush1.msra.mxu0 0.0
    %1822 = vmatprep.subr.mxu0 0.0
    %1823 = vmatpush1.msra.mxu0 0.0
    %1824 = vmatprep.subr.mxu0 0.0
    %1825 = vmatpush1.msra.mxu0 0.0
    %1826 = vmatprep.subr.mxu0 0.0
    %1827 = vmatpush1.msra.mxu0 0.0
    %1828 = vmatprep.subr.mxu0 0.0
    %1829 = vmatpush1.msra.mxu0 0.0
    %1830 = vmatprep.subr.mxu0 0.0
    %1831 = vmatpush1.msra.mxu0 0.0
    %1832 = vmatprep.subr.mxu0 0.0
    %1833 = vmatpush1.msra.mxu0 0.0
    %1834 = vmatprep.subr.mxu0 0.0
    %1835 = vmatpush1.msra.mxu0 0.0
    %1836 = vmatprep.subr.mxu0 0.0
    %1837 = vmatpush1.msra.mxu0 0.0
    %1838 = vmatprep.subr.mxu0 0.0
    %1839 = vmatpush1.msra.mxu0 0.0
    %1840 = vmatprep.subr.mxu0 0.0
    %1841 = vmatpush1.msra.mxu0 0.0
    %1842 = vmatprep.subr.mxu0 0.0
    %1843 = vmatpush1.msra.mxu0 0.0
    %1844 = vmatprep.subr.mxu0 0.0
    %1845 = vmatpush1.msra.mxu0 0.0
    %1846 = vmatprep.subr.mxu0 0.0
    %1847 = vmatpush1.msra.mxu0 0.0
    %1848 = vmatprep.subr.mxu0 0.0
    %1849 = vmatpush1.msra.mxu0 0.0
    %1850 = vmatprep.subr.mxu0 0.0
    %1851 = vmatpush1.msra.mxu0 0.0
    %1852 = vmatprep.mubr.f32.mxu0 0.0
    %1853 = vmatmul.mubr.f32.gmra.mrb[0].mxu0 %v1787
    %v1854 = vpop.f32.mrb[0].mxu0
    %v1855 = vadd.f32 0.0, %v1854
    %v1856 = vpop.f32.mrb[0].mxu0
    %1857 = vdwg.mxu0
    %v1858 = vld [vmem:[#allocation2 + $0x28] sm:$0xff]
    %v1859 = vadd.f32 %v1858, %v1855
    %v1860 = vxor.u32 %v1859, 2147483648
    %v1861 = vmul.f32 %v1860, 1.442695
    %v1862 = vpow.pop %v1861
    %v1863 = vadd.f32 %v1862, 1.0
    %v1864 = vrcp.pop %v1863
    %v1865 = vmul.f32 1.0, %v1864
    %1866 = vrot.lane.b32.xlu0 %v1865, 32
    %v1867 = vpop.permute.xlu0 %1866
    %v1868 = vadd.f32 %v1855, %v1416
    %v1869 = vmul.f32 %v1867, %v1868
    %v1870 = vadd.f32 %v1858, %v1869
    %v1871 = vtanh.pop %v1870
    %1872 = vrot.lane.b32.xlu0 %v1871, 64
    %v1873 = vpop.permute.xlu0 %1872
    %v1874 = vsub.f32 1.0, %v1865
    %v1875 = vmul.f32 %v1874, %v1873
    %v1876 = vmul.f32 %v1865, %v1787
    %v1877 = vadd.f32 %v1875, %v1876
    %1878 = vmatprep.subr.mxu0 0.0
    %1879 = vmatpush1.msra.mxu0 %v1155
    %1880 = vmatprep.subr.mxu0 0.0
    %1881 = vmatpush1.msra.mxu0 %v1156
    %1882 = vmatprep.subr.mxu0 0.0
    %1883 = vmatpush1.msra.mxu0 %v1157
    %1884 = vmatprep.subr.mxu0 0.0
    %1885 = vmatpush1.msra.mxu0 %v1158
    %1886 = vmatprep.subr.mxu0 0.0
    %1887 = vmatpush1.msra.mxu0 %v1159
    %1888 = vmatprep.subr.mxu0 0.0
    %1889 = vmatpush1.msra.mxu0 %v1160
    %1890 = vmatprep.subr.mxu0 0.0
    %1891 = vmatpush1.msra.mxu0 %v1161
    %1892 = vmatprep.subr.mxu0 0.0
    %1893 = vmatpush1.msra.mxu0 %v1162
    %1894 = vmatprep.subr.mxu0 0.0
    %1895 = vmatpush1.msra.mxu0 %v1163
    %1896 = vmatprep.subr.mxu0 0.0
    %1897 = vmatpush1.msra.mxu0 %v1164
    %1898 = vmatprep.subr.mxu0 0.0
    %1899 = vmatpush1.msra.mxu0 %v1165
    %1900 = vmatprep.subr.mxu0 0.0
    %1901 = vmatpush1.msra.mxu0 %v1166
    %1902 = vmatprep.subr.mxu0 0.0
    %1903 = vmatpush1.msra.mxu0 %v1167
    %1904 = vmatprep.subr.mxu0 0.0
    %1905 = vmatpush1.msra.mxu0 %v1168
    %1906 = vmatprep.subr.mxu0 0.0
    %1907 = vmatpush1.msra.mxu0 %v1169
    %1908 = vmatprep.subr.mxu0 0.0
    %1909 = vmatpush1.msra.mxu0 %v1170
    %1910 = vmatprep.subr.mxu0 0.0
    %1911 = vmatpush1.msra.mxu0 0.0
    %1912 = vmatprep.subr.mxu0 0.0
    %1913 = vmatpush1.msra.mxu0 0.0
    %1914 = vmatprep.subr.mxu0 0.0
    %1915 = vmatpush1.msra.mxu0 0.0
    %1916 = vmatprep.subr.mxu0 0.0
    %1917 = vmatpush1.msra.mxu0 0.0
    %1918 = vmatprep.subr.mxu0 0.0
    %1919 = vmatpush1.msra.mxu0 0.0
    %1920 = vmatprep.subr.mxu0 0.0
    %1921 = vmatpush1.msra.mxu0 0.0
    %1922 = vmatprep.subr.mxu0 0.0
    %1923 = vmatpush1.msra.mxu0 0.0
    %1924 = vmatprep.subr.mxu0 0.0
    %1925 = vmatpush1.msra.mxu0 0.0
    %1926 = vmatprep.subr.mxu0 0.0
    %1927 = vmatpush1.msra.mxu0 0.0
    %1928 = vmatprep.subr.mxu0 0.0
    %1929 = vmatpush1.msra.mxu0 0.0
    %1930 = vmatprep.subr.mxu0 0.0
    %1931 = vmatpush1.msra.mxu0 0.0
    %1932 = vmatprep.subr.mxu0 0.0
    %1933 = vmatpush1.msra.mxu0 0.0
    %1934 = vmatprep.subr.mxu0 0.0
    %1935 = vmatpush1.msra.mxu0 0.0
    %1936 = vmatprep.subr.mxu0 0.0
    %1937 = vmatpush1.msra.mxu0 0.0
    %1938 = vmatprep.subr.mxu0 0.0
    %1939 = vmatpush1.msra.mxu0 0.0
    %1940 = vmatprep.subr.mxu0 0.0
    %1941 = vmatpush1.msra.mxu0 0.0
    %1942 = vmatprep.mubr.f32.mxu0 0.0
    %1943 = vmatmul.mubr.f32.gmra.mrb[0].mxu0 %v1877
    %v1944 = vpop.f32.mrb[0].mxu0
    %v1945 = vadd.f32 0.0, %v1944
    %v1946 = vpop.f32.mrb[0].mxu0
    %1947 = vdwg.mxu0
    %v1948 = vld [vmem:[#allocation2 + $0x30] sm:$0xff]
    %v1949 = vadd.f32 %v1948, %v1945
    %v1950 = vxor.u32 %v1949, 2147483648
    %v1951 = vmul.f32 %v1950, 1.442695
    %v1952 = vpow.pop %v1951
    %v1953 = vadd.f32 %v1952, 1.0
    %v1954 = vrcp.pop %v1953
    %v1955 = vmul.f32 1.0, %v1954
    %1956 = vrot.lane.b32.xlu0 %v1955, 32
    %v1957 = vpop.permute.xlu0 %1956
    %v1958 = vadd.f32 %v1945, %v1416
    %v1959 = vmul.f32 %v1957, %v1958
    %v1960 = vadd.f32 %v1948, %v1959
    %v1961 = vtanh.pop %v1960
    %1962 = vrot.lane.b32.xlu0 %v1961, 64
    %v1963 = vpop.permute.xlu0 %1962
    %v1964 = vsub.f32 1.0, %v1955
    %v1965 = vmul.f32 %v1964, %v1963
    %v1966 = vmul.f32 %v1955, %v1877
    %v1967 = vadd.f32 %v1965, %v1966
    %1968 = vmatprep.subr.mxu0 0.0
    %1969 = vmatpush1.msra.mxu0 %v1155
    %1970 = vmatprep.subr.mxu0 0.0
    %1971 = vmatpush1.msra.mxu0 %v1156
    %1972 = vmatprep.subr.mxu0 0.0
    %1973 = vmatpush1.msra.mxu0 %v1157
    %1974 = vmatprep.subr.mxu0 0.0
    %1975 = vmatpush1.msra.mxu0 %v1158
    %1976 = vmatprep.subr.mxu0 0.0
    %1977 = vmatpush1.msra.mxu0 %v1159
    %1978 = vmatprep.subr.mxu0 0.0
    %1979 = vmatpush1.msra.mxu0 %v1160
    %1980 = vmatprep.subr.mxu0 0.0
    %1981 = vmatpush1.msra.mxu0 %v1161
    %1982 = vmatprep.subr.mxu0 0.0
    %1983 = vmatpush1.msra.mxu0 %v1162
    %1984 = vmatprep.subr.mxu0 0.0
    %1985 = vmatpush1.msra.mxu0 %v1163
    %1986 = vmatprep.subr.mxu0 0.0
    %1987 = vmatpush1.msra.mxu0 %v1164
    %1988 = vmatprep.subr.mxu0 0.0
    %1989 = vmatpush1.msra.mxu0 %v1165
    %1990 = vmatprep.subr.mxu0 0.0
    %1991 = vmatpush1.msra.mxu0 %v1166
    %1992 = vmatprep.subr.mxu0 0.0
    %1993 = vmatpush1.msra.mxu0 %v1167
    %1994 = vmatprep.subr.mxu0 0.0
    %1995 = vmatpush1.msra.mxu0 %v1168
    %1996 = vmatprep.subr.mxu0 0.0
    %1997 = vmatpush1.msra.mxu0 %v1169
    %1998 = vmatprep.subr.mxu0 0.0
    %1999 = vmatpush1.msra.mxu0 %v1170
    %2000 = vmatprep.subr.mxu0 0.0
    %2001 = vmatpush1.msra.mxu0 0.0
    %2002 = vmatprep.subr.mxu0 0.0
    %2003 = vmatpush1.msra.mxu0 0.0
    %2004 = vmatprep.subr.mxu0 0.0
    %2005 = vmatpush1.msra.mxu0 0.0
    %2006 = vmatprep.subr.mxu0 0.0
    %2007 = vmatpush1.msra.mxu0 0.0
    %2008 = vmatprep.subr.mxu0 0.0
    %2009 = vmatpush1.msra.mxu0 0.0
    %2010 = vmatprep.subr.mxu0 0.0
    %2011 = vmatpush1.msra.mxu0 0.0
    %2012 = vmatprep.subr.mxu0 0.0
    %2013 = vmatpush1.msra.mxu0 0.0
    %2014 = vmatprep.subr.mxu0 0.0
    %2015 = vmatpush1.msra.mxu0 0.0
    %2016 = vmatprep.subr.mxu0 0.0
    %2017 = vmatpush1.msra.mxu0 0.0
    %2018 = vmatprep.subr.mxu0 0.0
    %2019 = vmatpush1.msra.mxu0 0.0
    %2020 = vmatprep.subr.mxu0 0.0
    %2021 = vmatpush1.msra.mxu0 0.0
    %2022 = vmatprep.subr.mxu0 0.0
    %2023 = vmatpush1.msra.mxu0 0.0
    %2024 = vmatprep.subr.mxu0 0.0
    %2025 = vmatpush1.msra.mxu0 0.0
    %2026 = vmatprep.subr.mxu0 0.0
    %2027 = vmatpush1.msra.mxu0 0.0
    %2028 = vmatprep.subr.mxu0 0.0
    %2029 = vmatpush1.msra.mxu0 0.0
    %2030 = vmatprep.subr.mxu0 0.0
    %2031 = vmatpush1.msra.mxu0 0.0
    %2032 = vmatprep.mubr.f32.mxu0 0.0
    %2033 = vmatmul.mubr.f32.gmra.mrb[0].mxu0 %v1967
    %v2034 = vpop.f32.mrb[0].mxu0
    %v2035 = vadd.f32 0.0, %v2034
    %v2036 = vpop.f32.mrb[0].mxu0
    %2037 = vdwg.mxu0
    %v2038 = vld [vmem:[#allocation2 + $0x38] sm:$0xff]
    %v2039 = vadd.f32 %v2038, %v2035
    %v2040 = vxor.u32 %v2039, 2147483648
    %v2041 = vmul.f32 %v2040, 1.442695
    %v2042 = vpow.pop %v2041
    %v2043 = vadd.f32 %v2042, 1.0
    %v2044 = vrcp.pop %v2043
    %v2045 = vmul.f32 1.0, %v2044
    %2046 = vrot.lane.b32.xlu0 %v2045, 32
    %v2047 = vpop.permute.xlu0 %2046
    %v2048 = vadd.f32 %v2035, %v1416
    %v2049 = vmul.f32 %v2047, %v2048
    %v2050 = vadd.f32 %v2038, %v2049
    %v2051 = vtanh.pop %v2050
    %2052 = vrot.lane.b32.xlu0 %v2051, 64
    %v2053 = vpop.permute.xlu0 %2052
    %v2054 = vsub.f32 1.0, %v2045
    %v2055 = vmul.f32 %v2054, %v2053
    %v2056 = vmul.f32 %v2045, %v1967
    %v2057 = vadd.f32 %v2055, %v2056
    %s2058 = smul.u32 4, 16
    %s2059 = smul.u32 %s2058, 4
    %s2060 = sshll.u32 %s2059, 4
    %2061 = dma.done [#allocation8], %s2060
    %v2062 = vpack.c.bf16 %v2057, %v2057
    %v2063 = vld [vmem:[#allocation4] sm:$0xff]
    %v2064 = vld [vmem:[#allocation4 + $0x8] sm:$0xff]
    %v2065 = vld [vmem:[#allocation4 + $0x10] sm:$0xff]
    %v2066 = vld [vmem:[#allocation4 + $0x18] sm:$0xff]
    %v2067 = vld [vmem:[#allocation4 + $0x20] sm:$0xff]
    %v2068 = vld [vmem:[#allocation4 + $0x28] sm:$0xff]
    %v2069 = vld [vmem:[#allocation4 + $0x30] sm:$0xff]
    %v2070 = vld [vmem:[#allocation4 + $0x38] sm:$0xff]
    %v2071 = vld [vmem:[#allocation4 + $0x40] sm:$0xff]
    %v2072 = vld [vmem:[#allocation4 + $0x48] sm:$0xff]
    %v2073 = vld [vmem:[#allocation4 + $0x50] sm:$0xff]
    %v2074 = vld [vmem:[#allocation4 + $0x58] sm:$0xff]
    %v2075 = vld [vmem:[#allocation4 + $0x60] sm:$0xff]
    %v2076 = vld [vmem:[#allocation4 + $0x68] sm:$0xff]
    %v2077 = vld [vmem:[#allocation4 + $0x70] sm:$0xff]
    %v2078 = vld [vmem:[#allocation4 + $0x78] sm:$0xff]
    %v2079 = vld [vmem:[#allocation4 + $0x80] sm:$0xff]
    %v2080 = vld [vmem:[#allocation4 + $0x88] sm:$0xff]
    %v2081 = vld [vmem:[#allocation4 + $0x90] sm:$0xff]
    %v2082 = vld [vmem:[#allocation4 + $0x98] sm:$0xff]
    %v2083 = vld [vmem:[#allocation4 + $0xa0] sm:$0xff]
    %v2084 = vld [vmem:[#allocation4 + $0xa8] sm:$0xff]
    %v2085 = vld [vmem:[#allocation4 + $0xb0] sm:$0xff]
    %v2086 = vld [vmem:[#allocation4 + $0xb8] sm:$0xff]
    %v2087 = vld [vmem:[#allocation4 + $0xc0] sm:$0xff]
    %v2088 = vld [vmem:[#allocation4 + $0xc8] sm:$0xff]
    %v2089 = vld [vmem:[#allocation4 + $0xd0] sm:$0xff]
    %v2090 = vld [vmem:[#allocation4 + $0xd8] sm:$0xff]
    %v2091 = vld [vmem:[#allocation4 + $0xe0] sm:$0xff]
    %v2092 = vld [vmem:[#allocation4 + $0xe8] sm:$0xff]
    %v2093 = vld [vmem:[#allocation4 + $0xf0] sm:$0xff]
    %v2094 = vld [vmem:[#allocation4 + $0xf8] sm:$0xff]
    %v2095 = vld [vmem:[%s10] sm:$0xf]
    %v2097 = vlaneseq
    %v2098 = vshrl.u32 %v2097, 7
    %v2099 = vsub.s32 0, %v2098
    %v2100 = vrot.slane %v2095, %v2099
    %v2101 = vlaneseq
    %v2102 = vshrl.u32 %v2101, 7
    %v2103 = vsub.s32 1, %v2102
    %v2104 = vrot.slane %v2095, %v2103
    %v2105 = vlaneseq
    %v2106 = vshrl.u32 %v2105, 7
    %v2107 = vsub.s32 2, %v2106
    %v2108 = vrot.slane %v2095, %v2107
    %v2109 = vlaneseq
    %v2110 = vshrl.u32 %v2109, 7
    %v2111 = vsub.s32 3, %v2110
    %v2112 = vrot.slane %v2095, %v2111
    %2117 = vmatprep.subr.bf16.mxu0 %v2064
    %2118 = vmatpush1.bf16.msra.mxu0 %v2063
    %2119 = vmatprep.subr.bf16.mxu0 %v2068
    %2120 = vmatpush1.bf16.msra.mxu0 %v2067
    %2121 = vmatprep.subr.bf16.mxu0 %v2072
    %2122 = vmatpush1.bf16.msra.mxu0 %v2071
    %2123 = vmatprep.subr.bf16.mxu0 %v2076
    %2124 = vmatpush1.bf16.msra.mxu0 %v2075
    %2125 = vmatprep.subr.bf16.mxu0 %v2080
    %2126 = vmatpush1.bf16.msra.mxu0 %v2079
    %2127 = vmatprep.subr.bf16.mxu0 %v2084
    %2128 = vmatpush1.bf16.msra.mxu0 %v2083
    %2129 = vmatprep.subr.bf16.mxu0 %v2088
    %2130 = vmatpush1.bf16.msra.mxu0 %v2087
    %2131 = vmatprep.subr.bf16.mxu0 %v2092
    %2132 = vmatpush1.bf16.msra.mxu0 %v2091
    %2133 = vmatprep.subr.bf16.mxu0 0
    %2134 = vmatpush1.bf16.msra.mxu0 0
    %2135 = vmatprep.subr.bf16.mxu0 0
    %2136 = vmatpush1.bf16.msra.mxu0 0
    %2137 = vmatprep.subr.bf16.mxu0 0
    %2138 = vmatpush1.bf16.msra.mxu0 0
    %2139 = vmatprep.subr.bf16.mxu0 0
    %2140 = vmatpush1.bf16.msra.mxu0 0
    %2141 = vmatprep.subr.bf16.mxu0 0
    %2142 = vmatpush1.bf16.msra.mxu0 0
    %2143 = vmatprep.subr.bf16.mxu0 0
    %2144 = vmatpush1.bf16.msra.mxu0 0
    %2145 = vmatprep.subr.bf16.mxu0 0
    %2146 = vmatpush1.bf16.msra.mxu0 0
    %2147 = vmatprep.subr.bf16.mxu0 0
    %2148 = vmatpush1.bf16.msra.mxu0 0
    %2149 = vmatprep.mubr.bf16.mxu0 0
    %2150 = vmatmul.mubr.bf16.gmra.mrb[0].mxu0 %v2062
    %v2151 = vpop.f32.mrb[0].mxu0
    %v2152 = vadd.f32 %v2100, %v2151
    %v2153 = vpop.f32.mrb[0].mxu0
    %v2154 = vadd.f32 %v2104, %v2153
    %v2155 = vpop.f32.mrb[0].mxu0
    %v2156 = vpop.f32.mrb[0].mxu0
    %2157 = vdwg.mxu0
    %2158 = vmatprep.subr.bf16.mxu0 %v2066
    %2159 = vmatpush1.bf16.msra.mxu0 %v2065
    %2160 = vmatprep.subr.bf16.mxu0 %v2070
    %2161 = vmatpush1.bf16.msra.mxu0 %v2069
    %2162 = vmatprep.subr.bf16.mxu0 %v2074
    %2163 = vmatpush1.bf16.msra.mxu0 %v2073
    %2164 = vmatprep.subr.bf16.mxu0 %v2078
    %2165 = vmatpush1.bf16.msra.mxu0 %v2077
    %2166 = vmatprep.subr.bf16.mxu0 %v2082
    %2167 = vmatpush1.bf16.msra.mxu0 %v2081
    %2168 = vmatprep.subr.bf16.mxu0 %v2086
    %2169 = vmatpush1.bf16.msra.mxu0 %v2085
    %2170 = vmatprep.subr.bf16.mxu0 %v2090
    %2171 = vmatpush1.bf16.msra.mxu0 %v2089
    %2172 = vmatprep.subr.bf16.mxu0 %v2094
    %2173 = vmatpush1.bf16.msra.mxu0 %v2093
    %2174 = vmatprep.subr.bf16.mxu0 0
    %2175 = vmatpush1.bf16.msra.mxu0 0
    %2176 = vmatprep.subr.bf16.mxu0 0
    %2177 = vmatpush1.bf16.msra.mxu0 0
    %2178 = vmatprep.subr.bf16.mxu0 0
    %2179 = vmatpush1.bf16.msra.mxu0 0
    %2180 = vmatprep.subr.bf16.mxu0 0
    %2181 = vmatpush1.bf16.msra.mxu0 0
    %2182 = vmatprep.subr.bf16.mxu0 0
    %2183 = vmatpush1.bf16.msra.mxu0 0
    %2184 = vmatprep.subr.bf16.mxu0 0
    %2185 = vmatpush1.bf16.msra.mxu0 0
    %2186 = vmatprep.subr.bf16.mxu0 0
    %2187 = vmatpush1.bf16.msra.mxu0 0
    %2188 = vmatprep.subr.bf16.mxu0 0
    %2189 = vmatpush1.bf16.msra.mxu0 0
    %2190 = vmatprep.mubr.bf16.mxu0 0
    %2191 = vmatmul.mubr.bf16.gmra.mrb[0].mxu0 %v2062
    %v2192 = vpop.f32.mrb[0].mxu0
    %v2193 = vadd.f32 %v2108, %v2192
    %v2194 = vpop.f32.mrb[0].mxu0
    %v2195 = vadd.f32 %v2112, %v2194
    %v2196 = vpop.f32.mrb[0].mxu0
    %v2197 = vpop.f32.mrb[0].mxu0
    %2198 = vdwg.mxu0
    %v2199 = vmax.f32 %v2152, 0.0
    %v2200 = vmax.f32 %v2154, 0.0
    %v2201 = vmax.f32 %v2193, 0.0
    %v2202 = vmax.f32 %v2195, 0.0
    %s2203 = smul.u32 4, 64
    %s2204 = smul.u32 %s2203, 2
    %s2205 = sshll.u32 %s2204, 4
    %2206 = dma.done %s153, %s2205
    %v2207 = vpack.c.bf16 %v2199, %v2199
    %v2208 = vpack.c.bf16 %v2200, %v2200
    %v2209 = vpack.c.bf16 %v2201, %v2201
    %v2210 = vpack.c.bf16 %v2202, %v2202
    %v2211 = vld [vmem:[#allocation5] sm:$0xff]
    %v2212 = vld [vmem:[#allocation5 + $0x8] sm:$0xff]
    %v2213 = vld [vmem:[#allocation5 + $0x10] sm:$0xff]
    %v2214 = vld [vmem:[#allocation5 + $0x18] sm:$0xff]
    %v2215 = vld [vmem:[#allocation5 + $0x20] sm:$0xff]
    %v2216 = vld [vmem:[#allocation5 + $0x28] sm:$0xff]
    %v2217 = vld [vmem:[#allocation5 + $0x30] sm:$0xff]
    %v2218 = vld [vmem:[#allocation5 + $0x38] sm:$0xff]
    %v2219 = vld [vmem:[#allocation5 + $0x40] sm:$0xff]
    %v2220 = vld [vmem:[#allocation5 + $0x48] sm:$0xff]
    %v2221 = vld [vmem:[#allocation5 + $0x50] sm:$0xff]
    %v2222 = vld [vmem:[#allocation5 + $0x58] sm:$0xff]
    %v2223 = vld [vmem:[#allocation5 + $0x60] sm:$0xff]
    %v2224 = vld [vmem:[#allocation5 + $0x68] sm:$0xff]
    %v2225 = vld [vmem:[#allocation5 + $0x70] sm:$0xff]
    %v2226 = vld [vmem:[#allocation5 + $0x78] sm:$0xff]
    %v2227 = vld [vmem:[#allocation5 + $0x80] sm:$0xff]
    %v2228 = vld [vmem:[#allocation5 + $0x88] sm:$0xff]
    %v2229 = vld [vmem:[#allocation5 + $0x90] sm:$0xff]
    %v2230 = vld [vmem:[#allocation5 + $0x98] sm:$0xff]
    %v2231 = vld [vmem:[#allocation5 + $0xa0] sm:$0xff]
    %v2232 = vld [vmem:[#allocation5 + $0xa8] sm:$0xff]
    %v2233 = vld [vmem:[#allocation5 + $0xb0] sm:$0xff]
    %v2234 = vld [vmem:[#allocation5 + $0xb8] sm:$0xff]
    %v2235 = vld [vmem:[#allocation5 + $0xc0] sm:$0xff]
    %v2236 = vld [vmem:[#allocation5 + $0xc8] sm:$0xff]
    %v2237 = vld [vmem:[#allocation5 + $0xd0] sm:$0xff]
    %v2238 = vld [vmem:[#allocation5 + $0xd8] sm:$0xff]
    %v2239 = vld [vmem:[#allocation5 + $0xe0] sm:$0xff]
    %v2240 = vld [vmem:[#allocation5 + $0xe8] sm:$0xff]
    %v2241 = vld [vmem:[#allocation5 + $0xf0] sm:$0xff]
    %v2242 = vld [vmem:[#allocation5 + $0xf8] sm:$0xff]
    %v2243 = vld [vmem:[#allocation5 + $0x100] sm:$0xff]
    %v2244 = vld [vmem:[#allocation5 + $0x108] sm:$0xff]
    %v2245 = vld [vmem:[#allocation5 + $0x110] sm:$0xff]
    %v2246 = vld [vmem:[#allocation5 + $0x118] sm:$0xff]
    %v2247 = vld [vmem:[#allocation5 + $0x120] sm:$0xff]
    %v2248 = vld [vmem:[#allocation5 + $0x128] sm:$0xff]
    %v2249 = vld [vmem:[#allocation5 + $0x130] sm:$0xff]
    %v2250 = vld [vmem:[#allocation5 + $0x138] sm:$0xff]
    %v2251 = vld [vmem:[#allocation5 + $0x140] sm:$0xff]
    %v2252 = vld [vmem:[#allocation5 + $0x148] sm:$0xff]
    %v2253 = vld [vmem:[#allocation5 + $0x150] sm:$0xff]
    %v2254 = vld [vmem:[#allocation5 + $0x158] sm:$0xff]
    %v2255 = vld [vmem:[#allocation5 + $0x160] sm:$0xff]
    %v2256 = vld [vmem:[#allocation5 + $0x168] sm:$0xff]
    %v2257 = vld [vmem:[#allocation5 + $0x170] sm:$0xff]
    %v2258 = vld [vmem:[#allocation5 + $0x178] sm:$0xff]
    %v2259 = vld [vmem:[#allocation5 + $0x180] sm:$0xff]
    %v2260 = vld [vmem:[#allocation5 + $0x188] sm:$0xff]
    %v2261 = vld [vmem:[#allocation5 + $0x190] sm:$0xff]
    %v2262 = vld [vmem:[#allocation5 + $0x198] sm:$0xff]
    %v2263 = vld [vmem:[#allocation5 + $0x1a0] sm:$0xff]
    %v2264 = vld [vmem:[#allocation5 + $0x1a8] sm:$0xff]
    %v2265 = vld [vmem:[#allocation5 + $0x1b0] sm:$0xff]
    %v2266 = vld [vmem:[#allocation5 + $0x1b8] sm:$0xff]
    %v2267 = vld [vmem:[#allocation5 + $0x1c0] sm:$0xff]
    %v2268 = vld [vmem:[#allocation5 + $0x1c8] sm:$0xff]
    %v2269 = vld [vmem:[#allocation5 + $0x1d0] sm:$0xff]
    %v2270 = vld [vmem:[#allocation5 + $0x1d8] sm:$0xff]
    %v2271 = vld [vmem:[#allocation5 + $0x1e0] sm:$0xff]
    %v2272 = vld [vmem:[#allocation5 + $0x1e8] sm:$0xff]
    %v2273 = vld [vmem:[#allocation5 + $0x1f0] sm:$0xff]
    %v2274 = vld [vmem:[#allocation5 + $0x1f8] sm:$0xff]
    %v2275 = vld [vmem:[%s12] sm:$0x3]
    %v2277 = vlaneseq
    %v2278 = vshrl.u32 %v2277, 7
    %v2279 = vsub.s32 0, %v2278
    %v2280 = vrot.slane %v2275, %v2279
    %v2281 = vlaneseq
    %v2282 = vshrl.u32 %v2281, 7
    %v2283 = vsub.s32 1, %v2282
    %v2284 = vrot.slane %v2275, %v2283
    %2287 = vmatprep.subr.bf16.mxu0 %v2212
    %2288 = vmatpush1.bf16.msra.mxu0 %v2211
    %2289 = vmatprep.subr.bf16.mxu0 %v2214
    %2290 = vmatpush1.bf16.msra.mxu0 %v2213
    %2291 = vmatprep.subr.bf16.mxu0 %v2216
    %2292 = vmatpush1.bf16.msra.mxu0 %v2215
    %2293 = vmatprep.subr.bf16.mxu0 %v2218
    %2294 = vmatpush1.bf16.msra.mxu0 %v2217
    %2295 = vmatprep.subr.bf16.mxu0 %v2220
    %2296 = vmatpush1.bf16.msra.mxu0 %v2219
    %2297 = vmatprep.subr.bf16.mxu0 %v2222
    %2298 = vmatpush1.bf16.msra.mxu0 %v2221
    %2299 = vmatprep.subr.bf16.mxu0 %v2224
    %2300 = vmatpush1.bf16.msra.mxu0 %v2223
    %2301 = vmatprep.subr.bf16.mxu0 %v2226
    %2302 = vmatpush1.bf16.msra.mxu0 %v2225
    %2303 = vmatprep.subr.bf16.mxu0 %v2228
    %2304 = vmatpush1.bf16.msra.mxu0 %v2227
    %2305 = vmatprep.subr.bf16.mxu0 %v2230
    %2306 = vmatpush1.bf16.msra.mxu0 %v2229
    %2307 = vmatprep.subr.bf16.mxu0 %v2232
    %2308 = vmatpush1.bf16.msra.mxu0 %v2231
    %2309 = vmatprep.subr.bf16.mxu0 %v2234
    %2310 = vmatpush1.bf16.msra.mxu0 %v2233
    %2311 = vmatprep.subr.bf16.mxu0 %v2236
    %2312 = vmatpush1.bf16.msra.mxu0 %v2235
    %2313 = vmatprep.subr.bf16.mxu0 %v2238
    %2314 = vmatpush1.bf16.msra.mxu0 %v2237
    %2315 = vmatprep.subr.bf16.mxu0 %v2240
    %2316 = vmatpush1.bf16.msra.mxu0 %v2239
    %2317 = vmatprep.subr.bf16.mxu0 %v2242
    %2318 = vmatpush1.bf16.msra.mxu0 %v2241
    %2319 = vmatprep.mubr.bf16.mxu0 %v2208
    %2320 = vmatmul.mubr.bf16.gmra.mrb[0].mxu0 %v2207
    %v2321 = vpop.f32.mrb[0].mxu0
    %v2322 = vadd.f32 %v2280, %v2321
    %v2323 = vpop.f32.mrb[0].mxu0
    %v2324 = vadd.f32 %v2284, %v2323
    %v2325 = vpop.f32.mrb[0].mxu0
    %v2326 = vpop.f32.mrb[0].mxu0
    %2327 = vdwg.mxu0
    %2328 = vmatprep.subr.bf16.mxu0 %v2244
    %2329 = vmatpush1.bf16.msra.mxu0 %v2243
    %2330 = vmatprep.subr.bf16.mxu0 %v2246
    %2331 = vmatpush1.bf16.msra.mxu0 %v2245
    %2332 = vmatprep.subr.bf16.mxu0 %v2248
    %2333 = vmatpush1.bf16.msra.mxu0 %v2247
    %2334 = vmatprep.subr.bf16.mxu0 %v2250
    %2335 = vmatpush1.bf16.msra.mxu0 %v2249
    %2336 = vmatprep.subr.bf16.mxu0 %v2252
    %2337 = vmatpush1.bf16.msra.mxu0 %v2251
    %2338 = vmatprep.subr.bf16.mxu0 %v2254
    %2339 = vmatpush1.bf16.msra.mxu0 %v2253
    %2340 = vmatprep.subr.bf16.mxu0 %v2256
    %2341 = vmatpush1.bf16.msra.mxu0 %v2255
    %2342 = vmatprep.subr.bf16.mxu0 %v2258
    %2343 = vmatpush1.bf16.msra.mxu0 %v2257
    %2344 = vmatprep.subr.bf16.mxu0 %v2260
    %2345 = vmatpush1.bf16.msra.mxu0 %v2259
    %2346 = vmatprep.subr.bf16.mxu0 %v2262
    %2347 = vmatpush1.bf16.msra.mxu0 %v2261
    %2348 = vmatprep.subr.bf16.mxu0 %v2264
    %2349 = vmatpush1.bf16.msra.mxu0 %v2263
    %2350 = vmatprep.subr.bf16.mxu0 %v2266
    %2351 = vmatpush1.bf16.msra.mxu0 %v2265
    %2352 = vmatprep.subr.bf16.mxu0 %v2268
    %2353 = vmatpush1.bf16.msra.mxu0 %v2267
    %2354 = vmatprep.subr.bf16.mxu0 %v2270
    %2355 = vmatpush1.bf16.msra.mxu0 %v2269
    %2356 = vmatprep.subr.bf16.mxu0 %v2272
    %2357 = vmatpush1.bf16.msra.mxu0 %v2271
    %2358 = vmatprep.subr.bf16.mxu0 %v2274
    %2359 = vmatpush1.bf16.msra.mxu0 %v2273
    %2360 = vmatprep.mubr.bf16.mxu0 %v2210
    %2361 = vmatmul.mubr.bf16.gmra.mrb[0].mxu0 %v2209
    %v2362 = vpop.f32.mrb[0].mxu0
    %v2363 = vadd.f32 %v2322, %v2362
    %v2364 = vpop.f32.mrb[0].mxu0
    %v2365 = vadd.f32 %v2324, %v2364
    %v2366 = vpop.f32.mrb[0].mxu0
    %v2367 = vpop.f32.mrb[0].mxu0
    %2368 = vdwg.mxu0
    %v2369 = vmax.f32 %v2363, 0.0
    %v2370 = vmax.f32 %v2365, 0.0
    %s2371 = smul.u32 4, 32
    %s2372 = smul.u32 %s2371, 1
    %s2373 = sshll.u32 %s2372, 4
    %2374 = dma.done %s188, %s2373
    %v2375 = vpack.c.bf16 %v2369, %v2369
    %v2376 = vpack.c.bf16 %v2370, %v2370
    %v2377 = vld [vmem:[#allocation6] sm:$0xff]
    %v2378 = vld [vmem:[#allocation6 + $0x8] sm:$0xff]
    %v2379 = vld [vmem:[#allocation6 + $0x10] sm:$0xff]
    %v2380 = vld [vmem:[#allocation6 + $0x18] sm:$0xff]
    %v2381 = vld [vmem:[#allocation6 + $0x20] sm:$0xff]
    %v2382 = vld [vmem:[#allocation6 + $0x28] sm:$0xff]
    %v2383 = vld [vmem:[#allocation6 + $0x30] sm:$0xff]
    %v2384 = vld [vmem:[#allocation6 + $0x38] sm:$0xff]
    %v2385 = vld [vmem:[#allocation6 + $0x40] sm:$0xff]
    %v2386 = vld [vmem:[#allocation6 + $0x48] sm:$0xff]
    %v2387 = vld [vmem:[#allocation6 + $0x50] sm:$0xff]
    %v2388 = vld [vmem:[#allocation6 + $0x58] sm:$0xff]
    %v2389 = vld [vmem:[#allocation6 + $0x60] sm:$0xff]
    %v2390 = vld [vmem:[#allocation6 + $0x68] sm:$0xff]
    %v2391 = vld [vmem:[#allocation6 + $0x70] sm:$0xff]
    %v2392 = vld [vmem:[#allocation6 + $0x78] sm:$0xff]
    %v2393 = vld [vmem:[%s14] sm:$0x1]
    %v2395 = vlaneseq
    %v2396 = vshrl.u32 %v2395, 7
    %v2397 = vsub.s32 0, %v2396
    %v2398 = vrot.slane %v2393, %v2397
    %2400 = vmatprep.subr.bf16.mxu0 0
    %2401 = vmatpush1.bf16.msra.mxu0 %v2377
    %2402 = vmatprep.subr.bf16.mxu0 0
    %2403 = vmatpush1.bf16.msra.mxu0 %v2378
    %2404 = vmatprep.subr.bf16.mxu0 0
    %2405 = vmatpush1.bf16.msra.mxu0 %v2379
    %2406 = vmatprep.subr.bf16.mxu0 0
    %2407 = vmatpush1.bf16.msra.mxu0 %v2380
    %2408 = vmatprep.subr.bf16.mxu0 0
    %2409 = vmatpush1.bf16.msra.mxu0 %v2381
    %2410 = vmatprep.subr.bf16.mxu0 0
    %2411 = vmatpush1.bf16.msra.mxu0 %v2382
    %2412 = vmatprep.subr.bf16.mxu0 0
    %2413 = vmatpush1.bf16.msra.mxu0 %v2383
    %2414 = vmatprep.subr.bf16.mxu0 0
    %2415 = vmatpush1.bf16.msra.mxu0 %v2384
    %2416 = vmatprep.subr.bf16.mxu0 0
    %2417 = vmatpush1.bf16.msra.mxu0 %v2385
    %2418 = vmatprep.subr.bf16.mxu0 0
    %2419 = vmatpush1.bf16.msra.mxu0 %v2386
    %2420 = vmatprep.subr.bf16.mxu0 0
    %2421 = vmatpush1.bf16.msra.mxu0 %v2387
    %2422 = vmatprep.subr.bf16.mxu0 0
    %2423 = vmatpush1.bf16.msra.mxu0 %v2388
    %2424 = vmatprep.subr.bf16.mxu0 0
    %2425 = vmatpush1.bf16.msra.mxu0 %v2389
    %2426 = vmatprep.subr.bf16.mxu0 0
    %2427 = vmatpush1.bf16.msra.mxu0 %v2390
    %2428 = vmatprep.subr.bf16.mxu0 0
    %2429 = vmatpush1.bf16.msra.mxu0 %v2391
    %2430 = vmatprep.subr.bf16.mxu0 0
    %2431 = vmatpush1.bf16.msra.mxu0 %v2392
    %2432 = vmatprep.mubr.bf16.mxu0 %v2376
    %2433 = vmatmul.mubr.bf16.gmra.mrb[0].mxu0 %v2375
    %v2434 = vpop.f32.mrb[0].mxu0
    %v2435 = vadd.f32 %v2398, %v2434
    %v2436 = vpop.f32.mrb[0].mxu0
    %v2437 = vpop.f32.mrb[0].mxu0
    %v2438 = vpop.f32.mrb[0].mxu0
    %2439 = vdwg.mxu0
    %v2440 = vmax.f32 %v2435, 0.0
    %s2441 = smul.u32 %s2058, 1
    %s2442 = sshll.u32 %s2441, 4
    %2443 = dma.done %s200, %s2442
    %v2444 = vpack.c.bf16 %v2440, %v2440
    %v2445 = vld [vmem:[#allocation7] sm:$0xff]
    %v2446 = vld [vmem:[#allocation7 + $0x8] sm:$0xff]
    %v2447 = vld [vmem:[#allocation7 + $0x10] sm:$0xff]
    %v2448 = vld [vmem:[#allocation7 + $0x18] sm:$0xff]
    %v2449 = vld [vmem:[#allocation7 + $0x20] sm:$0xff]
    %v2450 = vld [vmem:[#allocation7 + $0x28] sm:$0xff]
    %v2451 = vld [vmem:[#allocation7 + $0x30] sm:$0xff]
    %v2452 = vld [vmem:[#allocation7 + $0x38] sm:$0xff]
    %v2453 = vld [vmem:[%s16] sm:$0x1]
    %v2455 = vlaneseq
    %v2456 = vshrl.u32 %v2455, 7
    %v2457 = vsub.s32 0, %v2456
    %v2458 = vrot.slane %v2453, %v2457
    %2460 = vmatprep.subr.bf16.mxu0 0
    %2461 = vmatpush1.bf16.msra.mxu0 %v2445
    %2462 = vmatprep.subr.bf16.mxu0 0
    %2463 = vmatpush1.bf16.msra.mxu0 %v2446
    %2464 = vmatprep.subr.bf16.mxu0 0
    %2465 = vmatpush1.bf16.msra.mxu0 %v2447
    %2466 = vmatprep.subr.bf16.mxu0 0
    %2467 = vmatpush1.bf16.msra.mxu0 %v2448
    %2468 = vmatprep.subr.bf16.mxu0 0
    %2469 = vmatpush1.bf16.msra.mxu0 %v2449
    %2470 = vmatprep.subr.bf16.mxu0 0
    %2471 = vmatpush1.bf16.msra.mxu0 %v2450
    %2472 = vmatprep.subr.bf16.mxu0 0
    %2473 = vmatpush1.bf16.msra.mxu0 %v2451
    %2474 = vmatprep.subr.bf16.mxu0 0
    %2475 = vmatpush1.bf16.msra.mxu0 %v2452
    %2476 = vmatprep.subr.bf16.mxu0 0
    %2477 = vmatpush1.bf16.msra.mxu0 0
    %2478 = vmatprep.subr.bf16.mxu0 0
    %2479 = vmatpush1.bf16.msra.mxu0 0
    %2480 = vmatprep.subr.bf16.mxu0 0
    %2481 = vmatpush1.bf16.msra.mxu0 0
    %2482 = vmatprep.subr.bf16.mxu0 0
    %2483 = vmatpush1.bf16.msra.mxu0 0
    %2484 = vmatprep.subr.bf16.mxu0 0
    %2485 = vmatpush1.bf16.msra.mxu0 0
    %2486 = vmatprep.subr.bf16.mxu0 0
    %2487 = vmatpush1.bf16.msra.mxu0 0
    %2488 = vmatprep.subr.bf16.mxu0 0
    %2489 = vmatpush1.bf16.msra.mxu0 0
    %2490 = vmatprep.subr.bf16.mxu0 0
    %2491 = vmatpush1.bf16.msra.mxu0 0
    %2492 = vmatprep.mubr.bf16.mxu0 0
    %2493 = vmatmul.mubr.bf16.gmra.mrb[0].mxu0 %v2444
    %v2494 = vpop.f32.mrb[0].mxu0
    %v2495 = vadd.f32 %v2458, %v2494
    %v2496 = vpop.f32.mrb[0].mxu0
    %v2497 = vpop.f32.mrb[0].mxu0
    %v2498 = vpop.f32.mrb[0].mxu0
    %2499 = vdwg.mxu0
    %2500 = vst [vmem:[#allocation18] sm:$0xff] %v2495
    // Predicated region
    $region82: #{tpu_custom_call.1} parent=1 // pred_check
      _
    $region83: #{tpu_custom_call.1} parent=1 // pred_check_branch
      %2502 = sbr.rel (0) target = $region85
    $region84: #{tpu_custom_call.1} parent=1 // pred_region
      %s2504 = ssub.s32 128, 128
      %2505 = vsyncadd [#allocation11], %s2504
      %s2507 = sshll.u32 [#allocation18], 4
      %s2508 = int_to_ptr.vmem [resolvable:$true] %s2507
      %2510 = dma.vmem_to_hbm [thread:$0]  %s2508, 128, %s17, [#allocation11]
    $region85: #{tpu_custom_call.1} parent=1 // pred_fallthru
      _
    // Predicated region
    $region86: #{tpu_custom_call.1} parent=1 // pred_check
      _
    $region87: #{tpu_custom_call.1} parent=1 // pred_check_branch
      %2512 = sbr.rel (0) target = $region89
    $region88: #{tpu_custom_call.1} parent=1 // pred_region
      %2513 = dma.done [#allocation11], 128
    $region89: #{tpu_custom_call.1} parent=1 // pred_fallthru
      _
    %2514 = vsyncpa [#allocation10], 1
    %2515 = vsyncpa [#allocation13], 1
    %2516 = vsyncpa [#allocation16], 1
    %2517 = vsyncpa [#allocation11], 1
  %2518 = vsyncmov [#allocation8]
  %s2519 = vpop.sfrf %2518
  %p2520 = scmp.eq.s32.totalorder %s2519, 0
  %p2521 = pneg %p2520
  %2523 = shalt.err (%p2521)
  %s2524 = scalar_lea.sflag [#allocation8], 1
  %2525 = vsyncmov %s2524
  %s2526 = vpop.sfrf %2525
  %p2527 = scmp.eq.s32.totalorder %s2526, 0
  %p2528 = pneg %p2527
  %2530 = shalt.err (%p2528)
  %s2531 = scalar_lea.sflag [#allocation8], 2
  %2532 = vsyncmov %s2531
  %s2533 = vpop.sfrf %2532
  %p2534 = scmp.eq.s32.totalorder %s2533, 0
  %p2535 = pneg %p2534
  %2537 = shalt.err (%p2535)
  %s2538 = scalar_lea.sflag [#allocation8], 3
  %2539 = vsyncmov %s2538
  %s2540 = vpop.sfrf %2539
  %p2541 = scmp.eq.s32.totalorder %s2540, 0
  %p2542 = pneg %p2541
  %2544 = shalt.err (%p2542)

</llo_original>
